<compile_context>
chip_gen: v6e
topology: v6e:2x2x1
jax: 0.10.0
libtpu: 0.0.40
codegen_flags: <defaults>
</compile_context>

<pallas_src>
import functools
import math

import jax
import jax.numpy as jnp
from jax import lax
from jax.experimental import pallas as pl
from jax.experimental.pallas import tpu as pltpu

_LN_EPS = 1e-5                  # PyTorch nn.LayerNorm default
_ROW_TILE = 512                 # row tile: double-buffered tiles stay well under the
                                # 32 MiB scoped-VMEM default on v7x, ~85% HBM roofline
                                # on v5e/v6e at this size.
_VMEM_LIMIT = 32 * 1024 * 1024


def _gelu(x):
    # TODO(synk): PyTorch F.gelu defaults to the exact erf form; the tanh approximation
    # is used for robust Mosaic lowering (max abs diff ~1e-3).
    return 0.5 * x * (1.0 + jnp.tanh(0.7978845608028654 * (x + 0.044715 * x * x * x)))


def _layernorm(y, g, b):
    mu = jnp.mean(y, axis=-1, keepdims=True)
    var = jnp.mean(jnp.square(y - mu), axis=-1, keepdims=True)
    return (y - mu) * lax.rsqrt(var + _LN_EPS) * g + b


# ----------------------------- fused linear / layernorm / FFN kernels -----------------------------

def _linear_kernel(x_ref, w_ref, b_ref, o_ref, *, act):
    y = jnp.dot(x_ref[...], w_ref[...], preferred_element_type=jnp.float32) + b_ref[...]
    if act == "gelu":
        y = _gelu(y)
    elif act == "sigmoid":
        y = 1.0 / (1.0 + jnp.exp(-y))
    o_ref[...] = y.astype(o_ref.dtype)


def linear(x, w, b, act="none", *, tm=_ROW_TILE):
    """x: (M, K) @ w: (K, N) + b, optional activation.  Row-tiled, weight-resident."""
    M, K = x.shape
    N = w.shape[1]
    tm = min(tm, M)
    return pl.pallas_call(
        functools.partial(_linear_kernel, act=act),
        out_shape=jax.ShapeDtypeStruct((M, N), jnp.float32),
        grid=(pl.cdiv(M, tm),),
        in_specs=[
            pl.BlockSpec((tm, K), lambda i: (i, 0)),      # streamed row tiles
            pl.BlockSpec((K, N), lambda i: (0, 0)),       # resident weight
            pl.BlockSpec((1, N), lambda i: (0, 0)),       # resident bias
        ],
        out_specs=pl.BlockSpec((tm, N), lambda i: (i, 0)),
        compiler_params=pltpu.CompilerParams(
            dimension_semantics=("parallel",),
            vmem_limit_bytes=_VMEM_LIMIT),
        cost_estimate=pl.CostEstimate(
            flops=int(2 * M * K * N),
            transcendentals=int(M * N if act != "none" else 0),
            bytes_accessed=int(4 * (M * K + K * N + M * N + N))),
    )(x, w, b.reshape(1, N))


def _linear_ln_kernel(x_ref, w_ref, b_ref, g_ref, bt_ref, o_ref, *, act):
    y = jnp.dot(x_ref[...], w_ref[...], preferred_element_type=jnp.float32) + b_ref[...]
    y = _layernorm(y, g_ref[...], bt_ref[...])
    if act == "gelu":
        y = _gelu(y)
    o_ref[...] = y.astype(o_ref.dtype)


def linear_ln(x, w, b, gamma, beta, act="none", *, tm=_ROW_TILE):
    """LayerNorm(x @ w + b), optionally followed by GELU.  Row-tiled, weight-resident."""
    M, K = x.shape
    N = w.shape[1]
    tm = min(tm, M)
    return pl.pallas_call(
        functools.partial(_linear_ln_kernel, act=act),
        out_shape=jax.ShapeDtypeStruct((M, N), jnp.float32),
        grid=(pl.cdiv(M, tm),),
        in_specs=[
            pl.BlockSpec((tm, K), lambda i: (i, 0)),
            pl.BlockSpec((K, N), lambda i: (0, 0)),
            pl.BlockSpec((1, N), lambda i: (0, 0)),
            pl.BlockSpec((1, N), lambda i: (0, 0)),
            pl.BlockSpec((1, N), lambda i: (0, 0)),
        ],
        out_specs=pl.BlockSpec((tm, N), lambda i: (i, 0)),
        compiler_params=pltpu.CompilerParams(
            dimension_semantics=("parallel",),
            vmem_limit_bytes=_VMEM_LIMIT),
        cost_estimate=pl.CostEstimate(
            flops=int(2 * M * K * N + 8 * M * N),
            transcendentals=int(M * N if act != "none" else M),
            bytes_accessed=int(4 * (M * K + K * N + M * N + 3 * N))),
    )(x, w, b.reshape(1, N), gamma.reshape(1, N), beta.reshape(1, N))


def _post_attn_kernel(x_ref, a_ref, g1_ref, bt1_ref, w1_ref, b1_ref,
                      w2_ref, b2_ref, g2_ref, bt2_ref, o_ref):
    # Fused Net_a epilogue: LN1(x + att) -> GELU FFN -> residual -> LN2, one row tile.
    s = _layernorm(x_ref[...] + a_ref[...], g1_ref[...], bt1_ref[...])
    h = _gelu(jnp.dot(s, w1_ref[...], preferred_element_type=jnp.float32) + b1_ref[...])
    y = jnp.dot(h, w2_ref[...], preferred_element_type=jnp.float32) + b2_ref[...]
    o_ref[...] = _layernorm(s + y, g2_ref[...], bt2_ref[...]).astype(o_ref.dtype)


def post_attn(x, att, g1, b1, w1, bb1, w2, bb2, g2, b2, *, tm=_ROW_TILE):
    M, C = x.shape
    F = w1.shape[1]
    tm = min(tm, M)
    row = lambda i: (i, 0)
    const = lambda i: (0, 0)
    return pl.pallas_call(
        _post_attn_kernel,
        out_shape=jax.ShapeDtypeStruct((M, C), jnp.float32),
        grid=(pl.cdiv(M, tm),),
        in_specs=[
            pl.BlockSpec((tm, C), row),     # x (residual stream)
            pl.BlockSpec((tm, C), row),     # attention output
            pl.BlockSpec((1, C), const),    # LN1 gamma
            pl.BlockSpec((1, C), const),    # LN1 beta
            pl.BlockSpec((C, F), const),    # FFN W1
            pl.BlockSpec((1, F), const),    # FFN b1
            pl.BlockSpec((F, C), const),    # FFN W2
            pl.BlockSpec((1, C), const),    # FFN b2
            pl.BlockSpec((1, C), const),    # LN2 gamma
            pl.BlockSpec((1, C), const),    # LN2 beta
        ],
        out_specs=pl.BlockSpec((tm, C), row),
        compiler_params=pltpu.CompilerParams(
            dimension_semantics=("parallel",),
            vmem_limit_bytes=_VMEM_LIMIT),
        cost_estimate=pl.CostEstimate(
            flops=int(4 * M * C * F + 20 * M * C),
            transcendentals=int(M * F),
            bytes_accessed=int(4 * (3 * M * C + 2 * C * F + 6 * C + F))),
    )(x, att, g1.reshape(1, C), b1.reshape(1, C), w1, bb1.reshape(1, F),
      w2, bb2.reshape(1, C), g2.reshape(1, C), b2.reshape(1, C))


# ----------------------------- fused qkv-projection + sliding-window attention -----------------------------

def _attn_kernel(x_ref, w_ref, ped_ref, o_ref, qkv_sc, *, nhead, wsize, pad, scale):
    """One batch element per grid step, all heads processed inside.

    x_ref:   (1, l, c)        hidden activations for this batch element
    w_ref:   (c, 3*c)         fused bias-free q/k/v projection weight (VMEM-resident)
    ped_ref: (h, l, dh, lp)   ped[h, t, i, s] = pe[h, i, s - t] inside the band, else 0
    o_ref:   (1, l, c)        attention output (head-major feature layout)
    qkv_sc:  (l, 3*c)         VMEM scratch holding the in-kernel qkv projection

    Matches the PyTorch reference exactly: keys/values are zero-padded by `pad`, the
    relative positional embedding is added to the (possibly zero) key window, and the
    softmax runs over all `wsize` window slots (out-of-sequence slots contribute
    exp(q.pe * scale) to the denominator and nothing to the value sum).
    """
    l = x_ref.shape[1]
    c = x_ref.shape[2]
    dh = c // nhead
    lp = l + 2 * pad

    # fused q/k/v projection on the MXU (bias-free in the reference)
    qkv_sc[...] = jnp.dot(x_ref[0], w_ref[...], preferred_element_type=jnp.float32)

    # static banded mask over the extended (zero-padded) key axis
    col = lax.broadcasted_iota(jnp.int32, (l, lp), 1)
    row = lax.broadcasted_iota(jnp.int32, (l, lp), 0)
    off = col - row
    in_band = jnp.logical_and(off >= 0, off < wsize)      # (l, lp)

    zpad = jnp.zeros((pad, dh), jnp.float32)
    outs = []
    for hh in range(nhead):                               # all heads in one grid step
        q_h = qkv_sc[:, hh * dh:(hh + 1) * dh]            # (l, dh)
        k_h = qkv_sc[:, c + hh * dh:c + (hh + 1) * dh]
        v_h = qkv_sc[:, 2 * c + hh * dh:2 * c + (hh + 1) * dh]
        kp = jnp.concatenate([zpad, k_h, zpad], axis=0)   # (lp, dh), zero-padded window
        vp = jnp.concatenate([zpad, v_h, zpad], axis=0)

        # dense score tile on the MXU: s[t, s'] = q[t] . k_pad[s']
        s = lax.dot_general(q_h, kp, (((1,), (1,)), ((), ())),
                            preferred_element_type=jnp.float32)       # (l, lp)
        # relative positional energies: epe[t, s'] = q[t] . pe[:, s' - t]
        epe = jnp.sum(q_h[:, :, None] * ped_ref[hh], axis=1)          # (l, lp)

        e = jnp.where(in_band, (s + epe) * scale, -1e30)
        m = jnp.max(e, axis=-1, keepdims=True)
        p = jnp.exp(e - m)
        p = p / jnp.sum(p, axis=-1, keepdims=True)

        # weighted value sum back on the MXU
        outs.append(jnp.dot(p, vp, preferred_element_type=jnp.float32))

    # single lane-dense store of the full (l, c) output block
    o_ref[0] = jnp.concatenate(outs, axis=-1).astype(o_ref.dtype)


def local_attention(x_blc, wqkv, ped, *, nhead, wsize, pad, scale):
    """x: (B, L, C), wqkv: (C, 3C), ped: (H, L, dh, L+2*pad) -> (B, L, C)."""
    B, L, C = x_blc.shape
    H = nhead
    dh = C // H
    lp = L + 2 * pad
    kern = functools.partial(_attn_kernel, nhead=nhead, wsize=wsize, pad=pad, scale=scale)
    return pl.pallas_call(
        kern,
        out_shape=jax.ShapeDtypeStruct((B, L, C), jnp.float32),
        grid=(B,),
        in_specs=[
            pl.BlockSpec((1, L, C), lambda b: (b, 0, 0)),             # activations
            pl.BlockSpec((C, 3 * C), lambda b: (0, 0)),               # resident qkv weight
            pl.BlockSpec((H, L, dh, lp), lambda b: (0, 0, 0, 0)),     # resident pe table
        ],
        out_specs=pl.BlockSpec((1, L, C), lambda b: (b, 0, 0)),
        scratch_shapes=[pltpu.VMEM((L, 3 * C), jnp.float32)],
        compiler_params=pltpu.CompilerParams(
            dimension_semantics=("parallel",),
            vmem_limit_bytes=_VMEM_LIMIT),
        cost_estimate=pl.CostEstimate(
            flops=int(2 * B * L * C * 3 * C + B * H * L * lp * (4 * dh + 6)),
            transcendentals=int(B * H * L * lp),
            bytes_accessed=int(4 * (2 * B * L * C + 3 * C * C + ped.size))),
    )(x_blc, wqkv, ped)


def make_pe_dense(pe, l, pad):
    """Toeplitz expansion of the relative positional embedding (plain XLA, once per fwd).

    pe: (H, dh, w) -> (H, l, dh, l+2*pad) with ped[h, t, i, s] = pe[h, i, s - t]
    inside the window band and 0 outside.  Shared by all layers and batch elements.
    TODO(synk): for very long sequences this table (and the dense score tile) should be
    length-tiled with a (w-1)/2 halo instead of materialized at full length.
    """
    h, dh, w = pe.shape
    lp = l + 2 * pad
    off = jnp.arange(lp)[None, :] - jnp.arange(l)[:, None]           # (l, lp)
    in_band = jnp.logical_and(off >= 0, off < w)
    idx = jnp.clip(off, 0, w - 1)
    g = jnp.take(pe, idx, axis=2)                                    # (h, dh, l, lp)
    g = jnp.where(in_band[None, None, :, :], g, 0.0)
    return jnp.transpose(g, (0, 2, 1, 3))                            # (h, l, dh, lp)


# ----------------------------- module forward passes (glue in plain JAX) -----------------------------

def encoder_layer(x2, ped, p, *, B, L, C, nhead, wsize, pad, scale):
    """One Net_a block on a (B*L, C) activation slab (rows ordered (b, l))."""
    att = local_attention(x2.reshape(B, L, C), p["wqkv"], ped,
                          nhead=nhead, wsize=wsize, pad=pad, scale=scale)
    att = att.reshape(B * L, C)                       # free (metadata-only) reshape
    return post_attn(x2, att, p["ln1_g"], p["ln1_b"], p["w1"], p["b1"],
                     p["w2"], p["b2"], p["ln2_g"], p["ln2_b"])


def net_forward(x_bcl, p, *, nhead=8, wsize=21, padding=10, num_layers=6):
    """Top-level Net forward.  x: (batch, in_channels, length) -> (batch, out_channels, length)."""
    B, Cin, L = x_bcl.shape
    # single HBM transpose at the input; everything downstream stays (B*L, features)
    x = jnp.transpose(x_bcl, (0, 2, 1)).reshape(B * L, Cin)
    h = linear_ln(x, p["lin1_w"], p["lin1_b"], p["n1_g"], p["n1_b"], act="gelu")
    h = linear_ln(h, p["lin2_w"], p["lin2_b"], p["n2_g"], p["n2_b"], act="gelu")

    dl = p["dl"]
    h = linear_ln(h, dl["lin1_w"], dl["lin1_b"], dl["n1_g"], dl["n1_b"])
    enc = dl["enc"]
    hidden = h.shape[-1]
    ped = make_pe_dense(enc["pe"], L, padding)        # shared across layers & batch
    scale = 1.0 / math.sqrt(hidden)
    for _ in range(num_layers):                       # encoder0 applied num_layers times (shared weights)
        h = encoder_layer(h, ped, enc, B=B, L=L, C=hidden, nhead=nhead,
                          wsize=wsize, pad=padding, scale=scale)

    y = linear(h, p["fc3_w"], p["fc3_b"], act="sigmoid")
    Cout = y.shape[-1]
    # single HBM transpose at the output
    return jnp.transpose(y.reshape(B, L, Cout), (0, 2, 1))


# ----------------------------- deterministic parameter init -----------------------------

def init_params(key, in_channels, out_channels, hidden, ff=64, nhead=8, wsize=21):
    assert hidden % nhead == 0
    keys = jax.random.split(key, 10)
    dh = hidden // nhead

    def lin(k, fin, fout):
        # torch nn.Linear-style init, stored pre-transposed as (fan_in, fan_out)
        kw, kb = jax.random.split(k)
        bound = 1.0 / math.sqrt(fin)
        w = jax.random.uniform(kw, (fin, fout), jnp.float32, -bound, bound)
        bias = jax.random.uniform(kb, (fout,), jnp.float32, -bound, bound)
        return w, bias

    lin1_w, lin1_b = lin(keys[0], in_channels, hidden)
    lin2_w, lin2_b = lin(keys[1], hidden, hidden)
    dl_lin1_w, dl_lin1_b = lin(keys[2], hidden, hidden)
    wq, _ = lin(keys[3], hidden, hidden)
    wk, _ = lin(keys[4], hidden, hidden)
    wv, _ = lin(keys[5], hidden, hidden)
    wqkv = jnp.concatenate([wq, wk, wv], axis=1)          # fused (hidden, 3*hidden), bias-free
    pe_bound = 1.0 / math.sqrt(dh * wsize)
    pe = jax.random.uniform(keys[6], (nhead, dh, wsize), jnp.float32, -pe_bound, pe_bound)
    enc_lin1_w, enc_lin1_b = lin(keys[7], hidden, ff)
    enc_lin2_w, enc_lin2_b = lin(keys[8], ff, hidden)
    fc3_w, fc3_b = lin(keys[9], hidden, out_channels)

    ones = jnp.ones((hidden,), jnp.float32)
    zeros = jnp.zeros((hidden,), jnp.float32)

    return {
        "lin1_w": lin1_w, "lin1_b": lin1_b, "n1_g": ones, "n1_b": zeros,
        "lin2_w": lin2_w, "lin2_b": lin2_b, "n2_g": ones, "n2_b": zeros,
        "dl": {
            "lin1_w": dl_lin1_w, "lin1_b": dl_lin1_b, "n1_g": ones, "n1_b": zeros,
            "enc": {
                "wqkv": wqkv,
                "pe": pe,
                "ln1_g": ones, "ln1_b": zeros,
                "w1": enc_lin1_w, "b1": enc_lin1_b,
                "w2": enc_lin2_w, "b2": enc_lin2_b,
                "ln2_g": ones, "ln2_b": zeros,
            },
        },
        "fc3_w": fc3_w, "fc3_b": fc3_b,
    }


if __name__ == "__main__":
    B, C_IN, L = 2, 4, 16       # x is (batch, in_channels, length)
    HIDDEN, C_OUT = 32, 3       # hidden must be divisible by nhead=8
    key = jax.random.PRNGKey(0)
    kx, kparam = jax.random.split(key)
    x = jax.random.normal(kx, (B, C_IN, L), dtype=jnp.float32)
    params = init_params(kparam, C_IN, C_OUT, HIDDEN)

    y = jax.jit(net_forward)(x, params)
    jax.block_until_ready(y)
    assert y.shape == (B, C_OUT, L), y.shape
    assert bool(jnp.all(jnp.isfinite(y))), "non-finite output"
    print("KERNEL_OK")
</pallas_src>

<mosaic_0001>
module attributes {stable_mosaic.version = 11 : i64} {
  func.func @_linear_ln_kernel(%arg0: i32, %arg1: memref<32x4xf32, #tpu.memory_space<vmem>>, %arg2: memref<4x32xf32, #tpu.memory_space<vmem>>, %arg3: memref<1x32xf32, #tpu.memory_space<vmem>>, %arg4: memref<1x32xf32, #tpu.memory_space<vmem>>, %arg5: memref<1x32xf32, #tpu.memory_space<vmem>>, %arg6: memref<32x32xf32, #tpu.memory_space<vmem>>) attributes {dimension_semantics = [#tpu.dimension_semantics<parallel>], iteration_bounds = array<i64: 1>, scalar_prefetch = 0 : i64, scratch_operands = 0 : i64, tpu.core_type = #tpu.core_type<tc>, window_params = [{transform_indices = @transform_0, window_bounds = array<i64: 32, 4>}, {pipeline_mode = #tpu.pipeline_mode<synchronous>, transform_indices = @transform_1, window_bounds = array<i64: 4, 32>}, {pipeline_mode = #tpu.pipeline_mode<synchronous>, transform_indices = @transform_2, window_bounds = array<i64: 1, 32>}, {pipeline_mode = #tpu.pipeline_mode<synchronous>, transform_indices = @transform_3, window_bounds = array<i64: 1, 32>}, {pipeline_mode = #tpu.pipeline_mode<synchronous>, transform_indices = @transform_4, window_bounds = array<i64: 1, 32>}, {transform_indices = @transform_5, window_bounds = array<i64: 32, 32>}]} {
    %c0 = arith.constant 0 : index
    %c0_0 = arith.constant 0 : index
    %0 = vector.load %arg1[%c0, %c0_0] : memref<32x4xf32, #tpu.memory_space<vmem>>, vector<32x4xf32>
    %c0_1 = arith.constant 0 : index
    %c0_2 = arith.constant 0 : index
    %1 = vector.load %arg2[%c0_1, %c0_2] : memref<4x32xf32, #tpu.memory_space<vmem>>, vector<4x32xf32>
    %cst = arith.constant dense<0.000000e+00> : vector<32x32xf32>
    %2 = tpu.matmul %0, %1, %cst {dimension_numbers = #tpu.dot_dimension_numbers<[1], [0], [0], [1], [0, 0, 1, 1], [], []>} : vector<32x4xf32>, vector<4x32xf32>, vector<32x32xf32> -> vector<32x32xf32>
    %c0_3 = arith.constant 0 : index
    %c0_4 = arith.constant 0 : index
    %3 = vector.load %arg3[%c0_3, %c0_4] : memref<1x32xf32, #tpu.memory_space<vmem>>, vector<1x32xf32>
    %4 = vector.broadcast %3 : vector<1x32xf32> to vector<32x32xf32>
    %5 = arith.addf %2, %4 : vector<32x32xf32>
    %c0_5 = arith.constant 0 : index
    %c0_6 = arith.constant 0 : index
    %6 = vector.load %arg4[%c0_5, %c0_6] : memref<1x32xf32, #tpu.memory_space<vmem>>, vector<1x32xf32>
    %c0_7 = arith.constant 0 : index
    %c0_8 = arith.constant 0 : index
    %7 = vector.load %arg5[%c0_7, %c0_8] : memref<1x32xf32, #tpu.memory_space<vmem>>, vector<1x32xf32>
    %cst_9 = arith.constant dense<0.000000e+00> : vector<32xf32>
    %8 = vector.multi_reduction <add>, %5, %cst_9 [1] : vector<32x32xf32> to vector<32xf32>
    %9 = vector.shape_cast %8 : vector<32xf32> to vector<32x1xf32>
    %cst_10 = arith.constant 3.200000e+01 : f32
    %10 = vector.broadcast %cst_10 : f32 to vector<32x1xf32>
    %11 = arith.divf %9, %10 : vector<32x1xf32>
    %12 = vector.broadcast %11 : vector<32x1xf32> to vector<32x32xf32>
    %13 = arith.subf %5, %12 : vector<32x32xf32>
    %14 = arith.mulf %13, %13 : vector<32x32xf32>
    %cst_11 = arith.constant dense<0.000000e+00> : vector<32xf32>
    %15 = vector.multi_reduction <add>, %14, %cst_11 [1] : vector<32x32xf32> to vector<32xf32>
    %16 = vector.shape_cast %15 : vector<32xf32> to vector<32x1xf32>
    %cst_12 = arith.constant 3.200000e+01 : f32
    %17 = vector.broadcast %cst_12 : f32 to vector<32x1xf32>
    %18 = arith.divf %16, %17 : vector<32x1xf32>
    %19 = vector.broadcast %11 : vector<32x1xf32> to vector<32x32xf32>
    %20 = arith.subf %5, %19 : vector<32x32xf32>
    %cst_13 = arith.constant 9.99999974E-6 : f32
    %21 = vector.broadcast %cst_13 : f32 to vector<32x1xf32>
    %22 = arith.addf %18, %21 : vector<32x1xf32>
    %23 = math.rsqrt %22 : vector<32x1xf32>
    %24 = vector.broadcast %23 : vector<32x1xf32> to vector<32x32xf32>
    %25 = arith.mulf %20, %24 : vector<32x32xf32>
    %26 = vector.broadcast %6 : vector<1x32xf32> to vector<32x32xf32>
    %27 = arith.mulf %25, %26 : vector<32x32xf32>
    %28 = vector.broadcast %7 : vector<1x32xf32> to vector<32x32xf32>
    %29 = arith.addf %27, %28 : vector<32x32xf32>
    %cst_14 = arith.constant 5.000000e-01 : f32
    %30 = vector.broadcast %cst_14 : f32 to vector<32x32xf32>
    %31 = arith.mulf %30, %29 : vector<32x32xf32>
    %cst_15 = arith.constant 4.471500e-02 : f32
    %32 = vector.broadcast %cst_15 : f32 to vector<32x32xf32>
    %33 = arith.mulf %32, %29 : vector<32x32xf32>
    %34 = arith.mulf %33, %29 : vector<32x32xf32>
    %35 = arith.mulf %34, %29 : vector<32x32xf32>
    %36 = arith.addf %29, %35 : vector<32x32xf32>
    %cst_16 = arith.constant 0.797884583 : f32
    %37 = vector.broadcast %cst_16 : f32 to vector<32x32xf32>
    %38 = arith.mulf %37, %36 : vector<32x32xf32>
    %39 = math.tanh %38 : vector<32x32xf32>
    %cst_17 = arith.constant 1.000000e+00 : f32
    %40 = vector.broadcast %cst_17 : f32 to vector<32x32xf32>
    %41 = arith.addf %40, %39 : vector<32x32xf32>
    %42 = arith.mulf %31, %41 : vector<32x32xf32>
    %c0_18 = arith.constant 0 : index
    %c0_19 = arith.constant 0 : index
    %43 = vector.load %arg6[%c0_18, %c0_19] : memref<32x32xf32, #tpu.memory_space<vmem>>, vector<32x32xf32>
    tpu.vector_store %arg6[%c0_18, %c0_19], %42 {strides = array<i32>} : memref<32x32xf32, #tpu.memory_space<vmem>>, vector<32x32xf32>,
    return
  }
  func.func @transform_0(%arg0: i32) -> (i32, i32) {
    %c0_i32 = arith.constant 0 : i32
    %c0_i32_0 = arith.constant 0 : i32
    return %arg0, %c0_i32 : i32, i32
  }
  func.func @transform_1(%arg0: i32) -> (i32, i32) {
    %c0_i32 = arith.constant 0 : i32
    %c0_i32_0 = arith.constant 0 : i32
    %c0_i32_1 = arith.constant 0 : i32
    return %c0_i32, %c0_i32_0 : i32, i32
  }
  func.func @transform_2(%arg0: i32) -> (i32, i32) {
    %c0_i32 = arith.constant 0 : i32
    %c0_i32_0 = arith.constant 0 : i32
    %c0_i32_1 = arith.constant 0 : i32
    return %c0_i32, %c0_i32_0 : i32, i32
  }
  func.func @transform_3(%arg0: i32) -> (i32, i32) {
    %c0_i32 = arith.constant 0 : i32
    %c0_i32_0 = arith.constant 0 : i32
    %c0_i32_1 = arith.constant 0 : i32
    return %c0_i32, %c0_i32_0 : i32, i32
  }
  func.func @transform_4(%arg0: i32) -> (i32, i32) {
    %c0_i32 = arith.constant 0 : i32
    %c0_i32_0 = arith.constant 0 : i32
    %c0_i32_1 = arith.constant 0 : i32
    return %c0_i32, %c0_i32_0 : i32, i32
  }
  func.func @transform_5(%arg0: i32) -> (i32, i32) {
    %c0_i32 = arith.constant 0 : i32
    %c0_i32_0 = arith.constant 0 : i32
    return %arg0, %c0_i32 : i32, i32
  }
}

module attributes {stable_mosaic.version = 11 : i64} {
  func.func @_linear_ln_kernel(%arg0: i32, %arg1: memref<32x32xf32, #tpu.memory_space<vmem>>, %arg2: memref<32x32xf32, #tpu.memory_space<vmem>>, %arg3: memref<1x32xf32, #tpu.memory_space<vmem>>, %arg4: memref<1x32xf32, #tpu.memory_space<vmem>>, %arg5: memref<1x32xf32, #tpu.memory_space<vmem>>, %arg6: memref<32x32xf32, #tpu.memory_space<vmem>>) attributes {dimension_semantics = [#tpu.dimension_semantics<parallel>], iteration_bounds = array<i64: 1>, scalar_prefetch = 0 : i64, scratch_operands = 0 : i64, tpu.core_type = #tpu.core_type<tc>, window_params = [{transform_indices = @transform_0, window_bounds = array<i64: 32, 32>}, {pipeline_mode = #tpu.pipeline_mode<synchronous>, transform_indices = @transform_1, window_bounds = array<i64: 32, 32>}, {pipeline_mode = #tpu.pipeline_mode<synchronous>, transform_indices = @transform_2, window_bounds = array<i64: 1, 32>}, {pipeline_mode = #tpu.pipeline_mode<synchronous>, transform_indices = @transform_3, window_bounds = array<i64: 1, 32>}, {pipeline_mode = #tpu.pipeline_mode<synchronous>, transform_indices = @transform_4, window_bounds = array<i64: 1, 32>}, {transform_indices = @transform_5, window_bounds = array<i64: 32, 32>}]} {
    %c0 = arith.constant 0 : index
    %c0_0 = arith.constant 0 : index
    %0 = vector.load %arg1[%c0, %c0_0] : memref<32x32xf32, #tpu.memory_space<vmem>>, vector<32x32xf32>
    %c0_1 = arith.constant 0 : index
    %c0_2 = arith.constant 0 : index
    %1 = vector.load %arg2[%c0_1, %c0_2] : memref<32x32xf32, #tpu.memory_space<vmem>>, vector<32x32xf32>
    %cst = arith.constant dense<0.000000e+00> : vector<32x32xf32>
    %2 = tpu.matmul %0, %1, %cst {dimension_numbers = #tpu.dot_dimension_numbers<[1], [0], [0], [1], [0, 0, 1, 1], [], []>} : vector<32x32xf32>, vector<32x32xf32>, vector<32x32xf32> -> vector<32x32xf32>
    %c0_3 = arith.constant 0 : index
    %c0_4 = arith.constant 0 : index
    %3 = vector.load %arg3[%c0_3, %c0_4] : memref<1x32xf32, #tpu.memory_space<vmem>>, vector<1x32xf32>
    %4 = vector.broadcast %3 : vector<1x32xf32> to vector<32x32xf32>
    %5 = arith.addf %2, %4 : vector<32x32xf32>
    %c0_5 = arith.constant 0 : index
    %c0_6 = arith.constant 0 : index
    %6 = vector.load %arg4[%c0_5, %c0_6] : memref<1x32xf32, #tpu.memory_space<vmem>>, vector<1x32xf32>
    %c0_7 = arith.constant 0 : index
    %c0_8 = arith.constant 0 : index
    %7 = vector.load %arg5[%c0_7, %c0_8] : memref<1x32xf32, #tpu.memory_space<vmem>>, vector<1x32xf32>
    %cst_9 = arith.constant dense<0.000000e+00> : vector<32xf32>
    %8 = vector.multi_reduction <add>, %5, %cst_9 [1] : vector<32x32xf32> to vector<32xf32>
    %9 = vector.shape_cast %8 : vector<32xf32> to vector<32x1xf32>
    %cst_10 = arith.constant 3.200000e+01 : f32
    %10 = vector.broadcast %cst_10 : f32 to vector<32x1xf32>
    %11 = arith.divf %9, %10 : vector<32x1xf32>
    %12 = vector.broadcast %11 : vector<32x1xf32> to vector<32x32xf32>
    %13 = arith.subf %5, %12 : vector<32x32xf32>
    %14 = arith.mulf %13, %13 : vector<32x32xf32>
    %cst_11 = arith.constant dense<0.000000e+00> : vector<32xf32>
    %15 = vector.multi_reduction <add>, %14, %cst_11 [1] : vector<32x32xf32> to vector<32xf32>
    %16 = vector.shape_cast %15 : vector<32xf32> to vector<32x1xf32>
    %cst_12 = arith.constant 3.200000e+01 : f32
    %17 = vector.broadcast %cst_12 : f32 to vector<32x1xf32>
    %18 = arith.divf %16, %17 : vector<32x1xf32>
    %19 = vector.broadcast %11 : vector<32x1xf32> to vector<32x32xf32>
    %20 = arith.subf %5, %19 : vector<32x32xf32>
    %cst_13 = arith.constant 9.99999974E-6 : f32
    %21 = vector.broadcast %cst_13 : f32 to vector<32x1xf32>
    %22 = arith.addf %18, %21 : vector<32x1xf32>
    %23 = math.rsqrt %22 : vector<32x1xf32>
    %24 = vector.broadcast %23 : vector<32x1xf32> to vector<32x32xf32>
    %25 = arith.mulf %20, %24 : vector<32x32xf32>
    %26 = vector.broadcast %6 : vector<1x32xf32> to vector<32x32xf32>
    %27 = arith.mulf %25, %26 : vector<32x32xf32>
    %28 = vector.broadcast %7 : vector<1x32xf32> to vector<32x32xf32>
    %29 = arith.addf %27, %28 : vector<32x32xf32>
    %cst_14 = arith.constant 5.000000e-01 : f32
    %30 = vector.broadcast %cst_14 : f32 to vector<32x32xf32>
    %31 = arith.mulf %30, %29 : vector<32x32xf32>
    %cst_15 = arith.constant 4.471500e-02 : f32
    %32 = vector.broadcast %cst_15 : f32 to vector<32x32xf32>
    %33 = arith.mulf %32, %29 : vector<32x32xf32>
    %34 = arith.mulf %33, %29 : vector<32x32xf32>
    %35 = arith.mulf %34, %29 : vector<32x32xf32>
    %36 = arith.addf %29, %35 : vector<32x32xf32>
    %cst_16 = arith.constant 0.797884583 : f32
    %37 = vector.broadcast %cst_16 : f32 to vector<32x32xf32>
    %38 = arith.mulf %37, %36 : vector<32x32xf32>
    %39 = math.tanh %38 : vector<32x32xf32>
    %cst_17 = arith.constant 1.000000e+00 : f32
    %40 = vector.broadcast %cst_17 : f32 to vector<32x32xf32>
    %41 = arith.addf %40, %39 : vector<32x32xf32>
    %42 = arith.mulf %31, %41 : vector<32x32xf32>
    %c0_18 = arith.constant 0 : index
    %c0_19 = arith.constant 0 : index
    %43 = vector.load %arg6[%c0_18, %c0_19] : memref<32x32xf32, #tpu.memory_space<vmem>>, vector<32x32xf32>
    tpu.vector_store %arg6[%c0_18, %c0_19], %42 {strides = array<i32>} : memref<32x32xf32, #tpu.memory_space<vmem>>, vector<32x32xf32>,
    return
  }
  func.func @transform_0(%arg0: i32) -> (i32, i32) {
    %c0_i32 = arith.constant 0 : i32
    %c0_i32_0 = arith.constant 0 : i32
    return %arg0, %c0_i32 : i32, i32
  }
  func.func @transform_1(%arg0: i32) -> (i32, i32) {
    %c0_i32 = arith.constant 0 : i32
    %c0_i32_0 = arith.constant 0 : i32
    %c0_i32_1 = arith.constant 0 : i32
    return %c0_i32, %c0_i32_0 : i32, i32
  }
  func.func @transform_2(%arg0: i32) -> (i32, i32) {
    %c0_i32 = arith.constant 0 : i32
    %c0_i32_0 = arith.constant 0 : i32
    %c0_i32_1 = arith.constant 0 : i32
    return %c0_i32, %c0_i32_0 : i32, i32
  }
  func.func @transform_3(%arg0: i32) -> (i32, i32) {
    %c0_i32 = arith.constant 0 : i32
    %c0_i32_0 = arith.constant 0 : i32
    %c0_i32_1 = arith.constant 0 : i32
    return %c0_i32, %c0_i32_0 : i32, i32
  }
  func.func @transform_4(%arg0: i32) -> (i32, i32) {
    %c0_i32 = arith.constant 0 : i32
    %c0_i32_0 = arith.constant 0 : i32
    %c0_i32_1 = arith.constant 0 : i32
    return %c0_i32, %c0_i32_0 : i32, i32
  }
  func.func @transform_5(%arg0: i32) -> (i32, i32) {
    %c0_i32 = arith.constant 0 : i32
    %c0_i32_0 = arith.constant 0 : i32
    return %arg0, %c0_i32 : i32, i32
  }
}

module attributes {stable_mosaic.version = 11 : i64} {
  func.func @_linear_ln_kernel(%arg0: i32, %arg1: memref<32x32xf32, #tpu.memory_space<vmem>>, %arg2: memref<32x32xf32, #tpu.memory_space<vmem>>, %arg3: memref<1x32xf32, #tpu.memory_space<vmem>>, %arg4: memref<1x32xf32, #tpu.memory_space<vmem>>, %arg5: memref<1x32xf32, #tpu.memory_space<vmem>>, %arg6: memref<32x32xf32, #tpu.memory_space<vmem>>) attributes {dimension_semantics = [#tpu.dimension_semantics<parallel>], iteration_bounds = array<i64: 1>, scalar_prefetch = 0 : i64, scratch_operands = 0 : i64, tpu.core_type = #tpu.core_type<tc>, window_params = [{transform_indices = @transform_0, window_bounds = array<i64: 32, 32>}, {pipeline_mode = #tpu.pipeline_mode<synchronous>, transform_indices = @transform_1, window_bounds = array<i64: 32, 32>}, {pipeline_mode = #tpu.pipeline_mode<synchronous>, transform_indices = @transform_2, window_bounds = array<i64: 1, 32>}, {pipeline_mode = #tpu.pipeline_mode<synchronous>, transform_indices = @transform_3, window_bounds = array<i64: 1, 32>}, {pipeline_mode = #tpu.pipeline_mode<synchronous>, transform_indices = @transform_4, window_bounds = array<i64: 1, 32>}, {transform_indices = @transform_5, window_bounds = array<i64: 32, 32>}]} {
    %c0 = arith.constant 0 : index
    %c0_0 = arith.constant 0 : index
    %0 = vector.load %arg1[%c0, %c0_0] : memref<32x32xf32, #tpu.memory_space<vmem>>, vector<32x32xf32>
    %c0_1 = arith.constant 0 : index
    %c0_2 = arith.constant 0 : index
    %1 = vector.load %arg2[%c0_1, %c0_2] : memref<32x32xf32, #tpu.memory_space<vmem>>, vector<32x32xf32>
    %cst = arith.constant dense<0.000000e+00> : vector<32x32xf32>
    %2 = tpu.matmul %0, %1, %cst {dimension_numbers = #tpu.dot_dimension_numbers<[1], [0], [0], [1], [0, 0, 1, 1], [], []>} : vector<32x32xf32>, vector<32x32xf32>, vector<32x32xf32> -> vector<32x32xf32>
    %c0_3 = arith.constant 0 : index
    %c0_4 = arith.constant 0 : index
    %3 = vector.load %arg3[%c0_3, %c0_4] : memref<1x32xf32, #tpu.memory_space<vmem>>, vector<1x32xf32>
    %4 = vector.broadcast %3 : vector<1x32xf32> to vector<32x32xf32>
    %5 = arith.addf %2, %4 : vector<32x32xf32>
    %c0_5 = arith.constant 0 : index
    %c0_6 = arith.constant 0 : index
    %6 = vector.load %arg4[%c0_5, %c0_6] : memref<1x32xf32, #tpu.memory_space<vmem>>, vector<1x32xf32>
    %c0_7 = arith.constant 0 : index
    %c0_8 = arith.constant 0 : index
    %7 = vector.load %arg5[%c0_7, %c0_8] : memref<1x32xf32, #tpu.memory_space<vmem>>, vector<1x32xf32>
    %cst_9 = arith.constant dense<0.000000e+00> : vector<32xf32>
    %8 = vector.multi_reduction <add>, %5, %cst_9 [1] : vector<32x32xf32> to vector<32xf32>
    %9 = vector.shape_cast %8 : vector<32xf32> to vector<32x1xf32>
    %cst_10 = arith.constant 3.200000e+01 : f32
    %10 = vector.broadcast %cst_10 : f32 to vector<32x1xf32>
    %11 = arith.divf %9, %10 : vector<32x1xf32>
    %12 = vector.broadcast %11 : vector<32x1xf32> to vector<32x32xf32>
    %13 = arith.subf %5, %12 : vector<32x32xf32>
    %14 = arith.mulf %13, %13 : vector<32x32xf32>
    %cst_11 = arith.constant dense<0.000000e+00> : vector<32xf32>
    %15 = vector.multi_reduction <add>, %14, %cst_11 [1] : vector<32x32xf32> to vector<32xf32>
    %16 = vector.shape_cast %15 : vector<32xf32> to vector<32x1xf32>
    %cst_12 = arith.constant 3.200000e+01 : f32
    %17 = vector.broadcast %cst_12 : f32 to vector<32x1xf32>
    %18 = arith.divf %16, %17 : vector<32x1xf32>
    %19 = vector.broadcast %11 : vector<32x1xf32> to vector<32x32xf32>
    %20 = arith.subf %5, %19 : vector<32x32xf32>
    %cst_13 = arith.constant 9.99999974E-6 : f32
    %21 = vector.broadcast %cst_13 : f32 to vector<32x1xf32>
    %22 = arith.addf %18, %21 : vector<32x1xf32>
    %23 = math.rsqrt %22 : vector<32x1xf32>
    %24 = vector.broadcast %23 : vector<32x1xf32> to vector<32x32xf32>
    %25 = arith.mulf %20, %24 : vector<32x32xf32>
    %26 = vector.broadcast %6 : vector<1x32xf32> to vector<32x32xf32>
    %27 = arith.mulf %25, %26 : vector<32x32xf32>
    %28 = vector.broadcast %7 : vector<1x32xf32> to vector<32x32xf32>
    %29 = arith.addf %27, %28 : vector<32x32xf32>
    %c0_14 = arith.constant 0 : index
    %c0_15 = arith.constant 0 : index
    %30 = vector.load %arg6[%c0_14, %c0_15] : memref<32x32xf32, #tpu.memory_space<vmem>>, vector<32x32xf32>
    tpu.vector_store %arg6[%c0_14, %c0_15], %29 {strides = array<i32>} : memref<32x32xf32, #tpu.memory_space<vmem>>, vector<32x32xf32>,
    return
  }
  func.func @transform_0(%arg0: i32) -> (i32, i32) {
    %c0_i32 = arith.constant 0 : i32
    %c0_i32_0 = arith.constant 0 : i32
    return %arg0, %c0_i32 : i32, i32
  }
  func.func @transform_1(%arg0: i32) -> (i32, i32) {
    %c0_i32 = arith.constant 0 : i32
    %c0_i32_0 = arith.constant 0 : i32
    %c0_i32_1 = arith.constant 0 : i32
    return %c0_i32, %c0_i32_0 : i32, i32
  }
  func.func @transform_2(%arg0: i32) -> (i32, i32) {
    %c0_i32 = arith.constant 0 : i32
    %c0_i32_0 = arith.constant 0 : i32
    %c0_i32_1 = arith.constant 0 : i32
    return %c0_i32, %c0_i32_0 : i32, i32
  }
  func.func @transform_3(%arg0: i32) -> (i32, i32) {
    %c0_i32 = arith.constant 0 : i32
    %c0_i32_0 = arith.constant 0 : i32
    %c0_i32_1 = arith.constant 0 : i32
    return %c0_i32, %c0_i32_0 : i32, i32
  }
  func.func @transform_4(%arg0: i32) -> (i32, i32) {
    %c0_i32 = arith.constant 0 : i32
    %c0_i32_0 = arith.constant 0 : i32
    %c0_i32_1 = arith.constant 0 : i32
    return %c0_i32, %c0_i32_0 : i32, i32
  }
  func.func @transform_5(%arg0: i32) -> (i32, i32) {
    %c0_i32 = arith.constant 0 : i32
    %c0_i32_0 = arith.constant 0 : i32
    return %arg0, %c0_i32 : i32, i32
  }
}

module attributes {stable_mosaic.version = 11 : i64} {
  func.func @_attn_kernel(%arg0: i32, %arg1: memref<1x16x32xf32, #tpu.memory_space<vmem>>, %arg2: memref<32x96xf32, #tpu.memory_space<vmem>>, %arg3: memref<8x16x4x36xf32, #tpu.memory_space<vmem>>, %arg4: memref<1x16x32xf32, #tpu.memory_space<vmem>>, %arg5: memref<16x96xf32, #tpu.memory_space<vmem>>) attributes {dimension_semantics = [#tpu.dimension_semantics<parallel>], iteration_bounds = array<i64: 2>, scalar_prefetch = 0 : i64, scratch_operands = 1 : i64, tpu.core_type = #tpu.core_type<tc>, window_params = [{transform_indices = @transform_0, window_bounds = array<i64: 1, 16, 32>}, {pipeline_mode = #tpu.pipeline_mode<synchronous>, transform_indices = @transform_1, window_bounds = array<i64: 32, 96>}, {pipeline_mode = #tpu.pipeline_mode<synchronous>, transform_indices = @transform_2, window_bounds = array<i64: 8, 16, 4, 36>}, {transform_indices = @transform_3, window_bounds = array<i64: 1, 16, 32>}]} {
    %c0 = arith.constant 0 : index
    %c0_0 = arith.constant 0 : index
    %c0_1 = arith.constant 0 : index
    %0 = vector.load %arg1[%c0, %c0_0, %c0_1] : memref<1x16x32xf32, #tpu.memory_space<vmem>>, vector<1x16x32xf32>
    %1 = vector.shape_cast %0 : vector<1x16x32xf32> to vector<16x32xf32>
    %c0_2 = arith.constant 0 : index
    %c0_3 = arith.constant 0 : index
    %2 = vector.load %arg2[%c0_2, %c0_3] : memref<32x96xf32, #tpu.memory_space<vmem>>, vector<32x96xf32>
    %cst = arith.constant dense<0.000000e+00> : vector<16x96xf32>
    %3 = tpu.matmul %1, %2, %cst {dimension_numbers = #tpu.dot_dimension_numbers<[1], [0], [0], [1], [0, 0, 1, 1], [], []>} : vector<16x32xf32>, vector<32x96xf32>, vector<16x96xf32> -> vector<16x96xf32>
    %c0_4 = arith.constant 0 : index
    %c0_5 = arith.constant 0 : index
    %4 = vector.load %arg5[%c0_4, %c0_5] : memref<16x96xf32, #tpu.memory_space<vmem>>, vector<16x96xf32>
    tpu.vector_store %arg5[%c0_4, %c0_5], %3 {strides = array<i32>} : memref<16x96xf32, #tpu.memory_space<vmem>>, vector<16x96xf32>,
    %5 = tpu.iota {dimensions = array<i32: 1>} : vector<16x36xi32>
    %6 = tpu.iota {dimensions = array<i32: 0>} : vector<16x36xi32>
    %7 = arith.subi %5, %6 : vector<16x36xi32>
    %c0_i32 = arith.constant 0 : i32
    %8 = vector.broadcast %c0_i32 : i32 to vector<16x36xi32>
    %9 = arith.cmpi sge, %7, %8 : vector<16x36xi32>
    %c21_i32 = arith.constant 21 : i32
    %10 = vector.broadcast %c21_i32 : i32 to vector<16x36xi32>
    %11 = arith.cmpi slt, %7, %10 : vector<16x36xi32>
    %12 = arith.andi %9, %11 : vector<16x36xi1>
    %cst_6 = arith.constant 0.000000e+00 : f32
    %13 = vector.broadcast %cst_6 : f32 to vector<10x4xf32>
    %c0_7 = arith.constant 0 : index
    %c0_8 = arith.constant 0 : index
    %14 = vector.load %arg5[%c0_7, %c0_8] : memref<16x96xf32, #tpu.memory_space<vmem>>, vector<16x4xf32>
    %c0_9 = arith.constant 0 : index
    %c32 = arith.constant 32 : index
    %15 = vector.load %arg5[%c0_9, %c32] : memref<16x96xf32, #tpu.memory_space<vmem>>, vector<16x4xf32>
    %c0_10 = arith.constant 0 : index
    %c64 = arith.constant 64 : index
    %16 = vector.load %arg5[%c0_10, %c64] : memref<16x96xf32, #tpu.memory_space<vmem>>, vector<16x4xf32>
    %17 = tpu.concatenate %13, %15, %13 in 0 : vector<10x4xf32>, vector<16x4xf32>, vector<10x4xf32> -> vector<36x4xf32>
    %18 = tpu.concatenate %13, %16, %13 in 0 : vector<10x4xf32>, vector<16x4xf32>, vector<10x4xf32> -> vector<36x4xf32>
    %cst_11 = arith.constant dense<0.000000e+00> : vector<16x36xf32>
    %19 = tpu.matmul %14, %17, %cst_11 {dimension_numbers = #tpu.dot_dimension_numbers<[1], [1], [0], [0], [0, 0, 1, 0], [], []>} : vector<16x4xf32>, vector<36x4xf32>, vector<16x36xf32> -> vector<16x36xf32>
    %20 = vector.shape_cast %14 : vector<16x4xf32> to vector<16x4x1xf32>
    %c0_12 = arith.constant 0 : index
    %c0_13 = arith.constant 0 : index
    %c0_14 = arith.constant 0 : index
    %c0_15 = arith.constant 0 : index
    %21 = vector.load %arg3[%c0_12, %c0_13, %c0_14, %c0_15] : memref<8x16x4x36xf32, #tpu.memory_space<vmem>>, vector<1x16x4x36xf32>
    %22 = vector.shape_cast %21 : vector<1x16x4x36xf32> to vector<16x4x36xf32>
    %23 = vector.broadcast %20 : vector<16x4x1xf32> to vector<16x4x36xf32>
    %24 = arith.mulf %23, %22 : vector<16x4x36xf32>
    %cst_16 = arith.constant dense<0.000000e+00> : vector<16x36xf32>
    %25 = vector.multi_reduction <add>, %24, %cst_16 [1] : vector<16x4x36xf32> to vector<16x36xf32>
    %26 = arith.addf %19, %25 : vector<16x36xf32>
    %cst_17 = arith.constant 0.176776692 : f32
    %27 = vector.broadcast %cst_17 : f32 to vector<16x36xf32>
    %28 = arith.mulf %26, %27 : vector<16x36xf32>
    %cst_18 = arith.constant -1.000000e+30 : f32
    %29 = vector.broadcast %cst_18 : f32 to vector<16x36xf32>
    %30 = arith.select %12, %28, %29 : vector<16x36xi1>, vector<16x36xf32>
    %cst_19 = arith.constant dense<0xFF800000> : vector<16xf32>
    %31 = vector.multi_reduction <maximumf>, %30, %cst_19 [1] : vector<16x36xf32> to vector<16xf32>
    %32 = vector.shape_cast %31 : vector<16xf32> to vector<16x1xf32>
    %33 = vector.broadcast %32 : vector<16x1xf32> to vector<16x36xf32>
    %34 = arith.subf %30, %33 : vector<16x36xf32>
    %35 = math.exp %34 : vector<16x36xf32>
    %cst_20 = arith.constant dense<0.000000e+00> : vector<16xf32>
    %36 = vector.multi_reduction <add>, %35, %cst_20 [1] : vector<16x36xf32> to vector<16xf32>
    %37 = vector.shape_cast %36 : vector<16xf32> to vector<16x1xf32>
    %38 = vector.broadcast %37 : vector<16x1xf32> to vector<16x36xf32>
    %39 = arith.divf %35, %38 : vector<16x36xf32>
    %cst_21 = arith.constant dense<0.000000e+00> : vector<16x4xf32>
    %40 = tpu.matmul %39, %18, %cst_21 {dimension_numbers = #tpu.dot_dimension_numbers<[1], [0], [0], [1], [0, 0, 1, 1], [], []>} : vector<16x36xf32>, vector<36x4xf32>, vector<16x4xf32> -> vector<16x4xf32>
    %c0_22 = arith.constant 0 : index
    %c4 = arith.constant 4 : index
    %41 = vector.load %arg5[%c0_22, %c4] : memref<16x96xf32, #tpu.memory_space<vmem>>, vector<16x4xf32>
    %c0_23 = arith.constant 0 : index
    %c36 = arith.constant 36 : index
    %42 = vector.load %arg5[%c0_23, %c36] : memref<16x96xf32, #tpu.memory_space<vmem>>, vector<16x4xf32>
    %c0_24 = arith.constant 0 : index
    %c68 = arith.constant 68 : index
    %43 = vector.load %arg5[%c0_24, %c68] : memref<16x96xf32, #tpu.memory_space<vmem>>, vector<16x4xf32>
    %44 = tpu.concatenate %13, %42, %13 in 0 : vector<10x4xf32>, vector<16x4xf32>, vector<10x4xf32> -> vector<36x4xf32>
    %45 = tpu.concatenate %13, %43, %13 in 0 : vector<10x4xf32>, vector<16x4xf32>, vector<10x4xf32> -> vector<36x4xf32>
    %cst_25 = arith.constant dense<0.000000e+00> : vector<16x36xf32>
    %46 = tpu.matmul %41, %44, %cst_25 {dimension_numbers = #tpu.dot_dimension_numbers<[1], [1], [0], [0], [0, 0, 1, 0], [], []>} : vector<16x4xf32>, vector<36x4xf32>, vector<16x36xf32> -> vector<16x36xf32>
    %47 = vector.shape_cast %41 : vector<16x4xf32> to vector<16x4x1xf32>
    %c1 = arith.constant 1 : index
    %c0_26 = arith.constant 0 : index
    %c0_27 = arith.constant 0 : index
    %c0_28 = arith.constant 0 : index
    %48 = vector.load %arg3[%c1, %c0_26, %c0_27, %c0_28] : memref<8x16x4x36xf32, #tpu.memory_space<vmem>>, vector<1x16x4x36xf32>
    %49 = vector.shape_cast %48 : vector<1x16x4x36xf32> to vector<16x4x36xf32>
    %50 = vector.broadcast %47 : vector<16x4x1xf32> to vector<16x4x36xf32>
    %51 = arith.mulf %50, %49 : vector<16x4x36xf32>
    %cst_29 = arith.constant dense<0.000000e+00> : vector<16x36xf32>
    %52 = vector.multi_reduction <add>, %51, %cst_29 [1] : vector<16x4x36xf32> to vector<16x36xf32>
    %53 = arith.addf %46, %52 : vector<16x36xf32>
    %cst_30 = arith.constant 0.176776692 : f32
    %54 = vector.broadcast %cst_30 : f32 to vector<16x36xf32>
    %55 = arith.mulf %53, %54 : vector<16x36xf32>
    %cst_31 = arith.constant -1.000000e+30 : f32
    %56 = vector.broadcast %cst_31 : f32 to vector<16x36xf32>
    %57 = arith.select %12, %55, %56 : vector<16x36xi1>, vector<16x36xf32>
    %cst_32 = arith.constant dense<0xFF800000> : vector<16xf32>
    %58 = vector.multi_reduction <maximumf>, %57, %cst_32 [1] : vector<16x36xf32> to vector<16xf32>
    %59 = vector.shape_cast %58 : vector<16xf32> to vector<16x1xf32>
    %60 = vector.broadcast %59 : vector<16x1xf32> to vector<16x36xf32>
    %61 = arith.subf %57, %60 : vector<16x36xf32>
    %62 = math.exp %61 : vector<16x36xf32>
    %cst_33 = arith.constant dense<0.000000e+00> : vector<16xf32>
    %63 = vector.multi_reduction <add>, %62, %cst_33 [1] : vector<16x36xf32> to vector<16xf32>
    %64 = vector.shape_cast %63 : vector<16xf32> to vector<16x1xf32>
    %65 = vector.broadcast %64 : vector<16x1xf32> to vector<16x36xf32>
    %66 = arith.divf %62, %65 : vector<16x36xf32>
    %cst_34 = arith.constant dense<0.000000e+00> : vector<16x4xf32>
    %67 = tpu.matmul %66, %45, %cst_34 {dimension_numbers = #tpu.dot_dimension_numbers<[1], [0], [0], [1], [0, 0, 1, 1], [], []>} : vector<16x36xf32>, vector<36x4xf32>, vector<16x4xf32> -> vector<16x4xf32>
    %c0_35 = arith.constant 0 : index
    %c8 = arith.constant 8 : index
    %68 = vector.load %arg5[%c0_35, %c8] : memref<16x96xf32, #tpu.memory_space<vmem>>, vector<16x4xf32>
    %c0_36 = arith.constant 0 : index
    %c40 = arith.constant 40 : index
    %69 = vector.load %arg5[%c0_36, %c40] : memref<16x96xf32, #tpu.memory_space<vmem>>, vector<16x4xf32>
    %c0_37 = arith.constant 0 : index
    %c72 = arith.constant 72 : index
    %70 = vector.load %arg5[%c0_37, %c72] : memref<16x96xf32, #tpu.memory_space<vmem>>, vector<16x4xf32>
    %71 = tpu.concatenate %13, %69, %13 in 0 : vector<10x4xf32>, vector<16x4xf32>, vector<10x4xf32> -> vector<36x4xf32>
    %72 = tpu.concatenate %13, %70, %13 in 0 : vector<10x4xf32>, vector<16x4xf32>, vector<10x4xf32> -> vector<36x4xf32>
    %cst_38 = arith.constant dense<0.000000e+00> : vector<16x36xf32>
    %73 = tpu.matmul %68, %71, %cst_38 {dimension_numbers = #tpu.dot_dimension_numbers<[1], [1], [0], [0], [0, 0, 1, 0], [], []>} : vector<16x4xf32>, vector<36x4xf32>, vector<16x36xf32> -> vector<16x36xf32>
    %74 = vector.shape_cast %68 : vector<16x4xf32> to vector<16x4x1xf32>
    %c2 = arith.constant 2 : index
    %c0_39 = arith.constant 0 : index
    %c0_40 = arith.constant 0 : index
    %c0_41 = arith.constant 0 : index
    %75 = vector.load %arg3[%c2, %c0_39, %c0_40, %c0_41] : memref<8x16x4x36xf32, #tpu.memory_space<vmem>>, vector<1x16x4x36xf32>
    %76 = vector.shape_cast %75 : vector<1x16x4x36xf32> to vector<16x4x36xf32>
    %77 = vector.broadcast %74 : vector<16x4x1xf32> to vector<16x4x36xf32>
    %78 = arith.mulf %77, %76 : vector<16x4x36xf32>
    %cst_42 = arith.constant dense<0.000000e+00> : vector<16x36xf32>
    %79 = vector.multi_reduction <add>, %78, %cst_42 [1] : vector<16x4x36xf32> to vector<16x36xf32>
    %80 = arith.addf %73, %79 : vector<16x36xf32>
    %cst_43 = arith.constant 0.176776692 : f32
    %81 = vector.broadcast %cst_43 : f32 to vector<16x36xf32>
    %82 = arith.mulf %80, %81 : vector<16x36xf32>
    %cst_44 = arith.constant -1.000000e+30 : f32
    %83 = vector.broadcast %cst_44 : f32 to vector<16x36xf32>
    %84 = arith.select %12, %82, %83 : vector<16x36xi1>, vector<16x36xf32>
    %cst_45 = arith.constant dense<0xFF800000> : vector<16xf32>
    %85 = vector.multi_reduction <maximumf>, %84, %cst_45 [1] : vector<16x36xf32> to vector<16xf32>
    %86 = vector.shape_cast %85 : vector<16xf32> to vector<16x1xf32>
    %87 = vector.broadcast %86 : vector<16x1xf32> to vector<16x36xf32>
    %88 = arith.subf %84, %87 : vector<16x36xf32>
    %89 = math.exp %88 : vector<16x36xf32>
    %cst_46 = arith.constant dense<0.000000e+00> : vector<16xf32>
    %90 = vector.multi_reduction <add>, %89, %cst_46 [1] : vector<16x36xf32> to vector<16xf32>
    %91 = vector.shape_cast %90 : vector<16xf32> to vector<16x1xf32>
    %92 = vector.broadcast %91 : vector<16x1xf32> to vector<16x36xf32>
    %93 = arith.divf %89, %92 : vector<16x36xf32>
    %cst_47 = arith.constant dense<0.000000e+00> : vector<16x4xf32>
    %94 = tpu.matmul %93, %72, %cst_47 {dimension_numbers = #tpu.dot_dimension_numbers<[1], [0], [0], [1], [0, 0, 1, 1], [], []>} : vector<16x36xf32>, vector<36x4xf32>, vector<16x4xf32> -> vector<16x4xf32>
    %c0_48 = arith.constant 0 : index
    %c12 = arith.constant 12 : index
    %95 = vector.load %arg5[%c0_48, %c12] : memref<16x96xf32, #tpu.memory_space<vmem>>, vector<16x4xf32>
    %c0_49 = arith.constant 0 : index
    %c44 = arith.constant 44 : index
    %96 = vector.load %arg5[%c0_49, %c44] : memref<16x96xf32, #tpu.memory_space<vmem>>, vector<16x4xf32>
    %c0_50 = arith.constant 0 : index
    %c76 = arith.constant 76 : index
    %97 = vector.load %arg5[%c0_50, %c76] : memref<16x96xf32, #tpu.memory_space<vmem>>, vector<16x4xf32>
    %98 = tpu.concatenate %13, %96, %13 in 0 : vector<10x4xf32>, vector<16x4xf32>, vector<10x4xf32> -> vector<36x4xf32>
    %99 = tpu.concatenate %13, %97, %13 in 0 : vector<10x4xf32>, vector<16x4xf32>, vector<10x4xf32> -> vector<36x4xf32>
    %cst_51 = arith.constant dense<0.000000e+00> : vector<16x36xf32>
    %100 = tpu.matmul %95, %98, %cst_51 {dimension_numbers = #tpu.dot_dimension_numbers<[1], [1], [0], [0], [0, 0, 1, 0], [], []>} : vector<16x4xf32>, vector<36x4xf32>, vector<16x36xf32> -> vector<16x36xf32>
    %101 = vector.shape_cast %95 : vector<16x4xf32> to vector<16x4x1xf32>
    %c3 = arith.constant 3 : index
    %c0_52 = arith.constant 0 : index
    %c0_53 = arith.constant 0 : index
    %c0_54 = arith.constant 0 : index
    %102 = vector.load %arg3[%c3, %c0_52, %c0_53, %c0_54] : memref<8x16x4x36xf32, #tpu.memory_space<vmem>>, vector<1x16x4x36xf32>
    %103 = vector.shape_cast %102 : vector<1x16x4x36xf32> to vector<16x4x36xf32>
    %104 = vector.broadcast %101 : vector<16x4x1xf32> to vector<16x4x36xf32>
    %105 = arith.mulf %104, %103 : vector<16x4x36xf32>
    %cst_55 = arith.constant dense<0.000000e+00> : vector<16x36xf32>
    %106 = vector.multi_reduction <add>, %105, %cst_55 [1] : vector<16x4x36xf32> to vector<16x36xf32>
    %107 = arith.addf %100, %106 : vector<16x36xf32>
    %cst_56 = arith.constant 0.176776692 : f32
    %108 = vector.broadcast %cst_56 : f32 to vector<16x36xf32>
    %109 = arith.mulf %107, %108 : vector<16x36xf32>
    %cst_57 = arith.constant -1.000000e+30 : f32
    %110 = vector.broadcast %cst_57 : f32 to vector<16x36xf32>
    %111 = arith.select %12, %109, %110 : vector<16x36xi1>, vector<16x36xf32>
    %cst_58 = arith.constant dense<0xFF800000> : vector<16xf32>
    %112 = vector.multi_reduction <maximumf>, %111, %cst_58 [1] : vector<16x36xf32> to vector<16xf32>
    %113 = vector.shape_cast %112 : vector<16xf32> to vector<16x1xf32>
    %114 = vector.broadcast %113 : vector<16x1xf32> to vector<16x36xf32>
    %115 = arith.subf %111, %114 : vector<16x36xf32>
    %116 = math.exp %115 : vector<16x36xf32>
    %cst_59 = arith.constant dense<0.000000e+00> : vector<16xf32>
    %117 = vector.multi_reduction <add>, %116, %cst_59 [1] : vector<16x36xf32> to vector<16xf32>
    %118 = vector.shape_cast %117 : vector<16xf32> to vector<16x1xf32>
    %119 = vector.broadcast %118 : vector<16x1xf32> to vector<16x36xf32>
    %120 = arith.divf %116, %119 : vector<16x36xf32>
    %cst_60 = arith.constant dense<0.000000e+00> : vector<16x4xf32>
    %121 = tpu.matmul %120, %99, %cst_60 {dimension_numbers = #tpu.dot_dimension_numbers<[1], [0], [0], [1], [0, 0, 1, 1], [], []>} : vector<16x36xf32>, vector<36x4xf32>, vector<16x4xf32> -> vector<16x4xf32>
    %c0_61 = arith.constant 0 : index
    %c16 = arith.constant 16 : index
    %122 = vector.load %arg5[%c0_61, %c16] : memref<16x96xf32, #tpu.memory_space<vmem>>, vector<16x4xf32>
    %c0_62 = arith.constant 0 : index
    %c48 = arith.constant 48 : index
    %123 = vector.load %arg5[%c0_62, %c48] : memref<16x96xf32, #tpu.memory_space<vmem>>, vector<16x4xf32>
    %c0_63 = arith.constant 0 : index
    %c80 = arith.constant 80 : index
    %124 = vector.load %arg5[%c0_63, %c80] : memref<16x96xf32, #tpu.memory_space<vmem>>, vector<16x4xf32>
    %125 = tpu.concatenate %13, %123, %13 in 0 : vector<10x4xf32>, vector<16x4xf32>, vector<10x4xf32> -> vector<36x4xf32>
    %126 = tpu.concatenate %13, %124, %13 in 0 : vector<10x4xf32>, vector<16x4xf32>, vector<10x4xf32> -> vector<36x4xf32>
    %cst_64 = arith.constant dense<0.000000e+00> : vector<16x36xf32>
    %127 = tpu.matmul %122, %125, %cst_64 {dimension_numbers = #tpu.dot_dimension_numbers<[1], [1], [0], [0], [0, 0, 1, 0], [], []>} : vector<16x4xf32>, vector<36x4xf32>, vector<16x36xf32> -> vector<16x36xf32>
    %128 = vector.shape_cast %122 : vector<16x4xf32> to vector<16x4x1xf32>
    %c4_65 = arith.constant 4 : index
    %c0_66 = arith.constant 0 : index
    %c0_67 = arith.constant 0 : index
    %c0_68 = arith.constant 0 : index
    %129 = vector.load %arg3[%c4_65, %c0_66, %c0_67, %c0_68] : memref<8x16x4x36xf32, #tpu.memory_space<vmem>>, vector<1x16x4x36xf32>
    %130 = vector.shape_cast %129 : vector<1x16x4x36xf32> to vector<16x4x36xf32>
    %131 = vector.broadcast %128 : vector<16x4x1xf32> to vector<16x4x36xf32>
    %132 = arith.mulf %131, %130 : vector<16x4x36xf32>
    %cst_69 = arith.constant dense<0.000000e+00> : vector<16x36xf32>
    %133 = vector.multi_reduction <add>, %132, %cst_69 [1] : vector<16x4x36xf32> to vector<16x36xf32>
    %134 = arith.addf %127, %133 : vector<16x36xf32>
    %cst_70 = arith.constant 0.176776692 : f32
    %135 = vector.broadcast %cst_70 : f32 to vector<16x36xf32>
    %136 = arith.mulf %134, %135 : vector<16x36xf32>
    %cst_71 = arith.constant -1.000000e+30 : f32
    %137 = vector.broadcast %cst_71 : f32 to vector<16x36xf32>
    %138 = arith.select %12, %136, %137 : vector<16x36xi1>, vector<16x36xf32>
    %cst_72 = arith.constant dense<0xFF800000> : vector<16xf32>
    %139 = vector.multi_reduction <maximumf>, %138, %cst_72 [1] : vector<16x36xf32> to vector<16xf32>
    %140 = vector.shape_cast %139 : vector<16xf32> to vector<16x1xf32>
    %141 = vector.broadcast %140 : vector<16x1xf32> to vector<16x36xf32>
    %142 = arith.subf %138, %141 : vector<16x36xf32>
    %143 = math.exp %142 : vector<16x36xf32>
    %cst_73 = arith.constant dense<0.000000e+00> : vector<16xf32>
    %144 = vector.multi_reduction <add>, %143, %cst_73 [1] : vector<16x36xf32> to vector<16xf32>
    %145 = vector.shape_cast %144 : vector<16xf32> to vector<16x1xf32>
    %146 = vector.broadcast %145 : vector<16x1xf32> to vector<16x36xf32>
    %147 = arith.divf %143, %146 : vector<16x36xf32>
    %cst_74 = arith.constant dense<0.000000e+00> : vector<16x4xf32>
    %148 = tpu.matmul %147, %126, %cst_74 {dimension_numbers = #tpu.dot_dimension_numbers<[1], [0], [0], [1], [0, 0, 1, 1], [], []>} : vector<16x36xf32>, vector<36x4xf32>, vector<16x4xf32> -> vector<16x4xf32>
    %c0_75 = arith.constant 0 : index
    %c20 = arith.constant 20 : index
    %149 = vector.load %arg5[%c0_75, %c20] : memref<16x96xf32, #tpu.memory_space<vmem>>, vector<16x4xf32>
    %c0_76 = arith.constant 0 : index
    %c52 = arith.constant 52 : index
    %150 = vector.load %arg5[%c0_76, %c52] : memref<16x96xf32, #tpu.memory_space<vmem>>, vector<16x4xf32>
    %c0_77 = arith.constant 0 : index
    %c84 = arith.constant 84 : index
    %151 = vector.load %arg5[%c0_77, %c84] : memref<16x96xf32, #tpu.memory_space<vmem>>, vector<16x4xf32>
    %152 = tpu.concatenate %13, %150, %13 in 0 : vector<10x4xf32>, vector<16x4xf32>, vector<10x4xf32> -> vector<36x4xf32>
    %153 = tpu.concatenate %13, %151, %13 in 0 : vector<10x4xf32>, vector<16x4xf32>, vector<10x4xf32> -> vector<36x4xf32>
    %cst_78 = arith.constant dense<0.000000e+00> : vector<16x36xf32>
    %154 = tpu.matmul %149, %152, %cst_78 {dimension_numbers = #tpu.dot_dimension_numbers<[1], [1], [0], [0], [0, 0, 1, 0], [], []>} : vector<16x4xf32>, vector<36x4xf32>, vector<16x36xf32> -> vector<16x36xf32>
    %155 = vector.shape_cast %149 : vector<16x4xf32> to vector<16x4x1xf32>
    %c5 = arith.constant 5 : index
    %c0_79 = arith.constant 0 : index
    %c0_80 = arith.constant 0 : index
    %c0_81 = arith.constant 0 : index
    %156 = vector.load %arg3[%c5, %c0_79, %c0_80, %c0_81] : memref<8x16x4x36xf32, #tpu.memory_space<vmem>>, vector<1x16x4x36xf32>
    %157 = vector.shape_cast %156 : vector<1x16x4x36xf32> to vector<16x4x36xf32>
    %158 = vector.broadcast %155 : vector<16x4x1xf32> to vector<16x4x36xf32>
    %159 = arith.mulf %158, %157 : vector<16x4x36xf32>
    %cst_82 = arith.constant dense<0.000000e+00> : vector<16x36xf32>
    %160 = vector.multi_reduction <add>, %159, %cst_82 [1] : vector<16x4x36xf32> to vector<16x36xf32>
    %161 = arith.addf %154, %160 : vector<16x36xf32>
    %cst_83 = arith.constant 0.176776692 : f32
    %162 = vector.broadcast %cst_83 : f32 to vector<16x36xf32>
    %163 = arith.mulf %161, %162 : vector<16x36xf32>
    %cst_84 = arith.constant -1.000000e+30 : f32
    %164 = vector.broadcast %cst_84 : f32 to vector<16x36xf32>
    %165 = arith.select %12, %163, %164 : vector<16x36xi1>, vector<16x36xf32>
    %cst_85 = arith.constant dense<0xFF800000> : vector<16xf32>
    %166 = vector.multi_reduction <maximumf>, %165, %cst_85 [1] : vector<16x36xf32> to vector<16xf32>
    %167 = vector.shape_cast %166 : vector<16xf32> to vector<16x1xf32>
    %168 = vector.broadcast %167 : vector<16x1xf32> to vector<16x36xf32>
    %169 = arith.subf %165, %168 : vector<16x36xf32>
    %170 = math.exp %169 : vector<16x36xf32>
    %cst_86 = arith.constant dense<0.000000e+00> : vector<16xf32>
    %171 = vector.multi_reduction <add>, %170, %cst_86 [1] : vector<16x36xf32> to vector<16xf32>
    %172 = vector.shape_cast %171 : vector<16xf32> to vector<16x1xf32>
    %173 = vector.broadcast %172 : vector<16x1xf32> to vector<16x36xf32>
    %174 = arith.divf %170, %173 : vector<16x36xf32>
    %cst_87 = arith.constant dense<0.000000e+00> : vector<16x4xf32>
    %175 = tpu.matmul %174, %153, %cst_87 {dimension_numbers = #tpu.dot_dimension_numbers<[1], [0], [0], [1], [0, 0, 1, 1], [], []>} : vector<16x36xf32>, vector<36x4xf32>, vector<16x4xf32> -> vector<16x4xf32>
    %c0_88 = arith.constant 0 : index
    %c24 = arith.constant 24 : index
    %176 = vector.load %arg5[%c0_88, %c24] : memref<16x96xf32, #tpu.memory_space<vmem>>, vector<16x4xf32>
    %c0_89 = arith.constant 0 : index
    %c56 = arith.constant 56 : index
    %177 = vector.load %arg5[%c0_89, %c56] : memref<16x96xf32, #tpu.memory_space<vmem>>, vector<16x4xf32>
    %c0_90 = arith.constant 0 : index
    %c88 = arith.constant 88 : index
    %178 = vector.load %arg5[%c0_90, %c88] : memref<16x96xf32, #tpu.memory_space<vmem>>, vector<16x4xf32>
    %179 = tpu.concatenate %13, %177, %13 in 0 : vector<10x4xf32>, vector<16x4xf32>, vector<10x4xf32> -> vector<36x4xf32>
    %180 = tpu.concatenate %13, %178, %13 in 0 : vector<10x4xf32>, vector<16x4xf32>, vector<10x4xf32> -> vector<36x4xf32>
    %cst_91 = arith.constant dense<0.000000e+00> : vector<16x36xf32>
    %181 = tpu.matmul %176, %179, %cst_91 {dimension_numbers = #tpu.dot_dimension_numbers<[1], [1], [0], [0], [0, 0, 1, 0], [], []>} : vector<16x4xf32>, vector<36x4xf32>, vector<16x36xf32> -> vector<16x36xf32>
    %182 = vector.shape_cast %176 : vector<16x4xf32> to vector<16x4x1xf32>
    %c6 = arith.constant 6 : index
    %c0_92 = arith.constant 0 : index
    %c0_93 = arith.constant 0 : index
    %c0_94 = arith.constant 0 : index
    %183 = vector.load %arg3[%c6, %c0_92, %c0_93, %c0_94] : memref<8x16x4x36xf32, #tpu.memory_space<vmem>>, vector<1x16x4x36xf32>
    %184 = vector.shape_cast %183 : vector<1x16x4x36xf32> to vector<16x4x36xf32>
    %185 = vector.broadcast %182 : vector<16x4x1xf32> to vector<16x4x36xf32>
    %186 = arith.mulf %185, %184 : vector<16x4x36xf32>
    %cst_95 = arith.constant dense<0.000000e+00> : vector<16x36xf32>
    %187 = vector.multi_reduction <add>, %186, %cst_95 [1] : vector<16x4x36xf32> to vector<16x36xf32>
    %188 = arith.addf %181, %187 : vector<16x36xf32>
    %cst_96 = arith.constant 0.176776692 : f32
    %189 = vector.broadcast %cst_96 : f32 to vector<16x36xf32>
    %190 = arith.mulf %188, %189 : vector<16x36xf32>
    %cst_97 = arith.constant -1.000000e+30 : f32
    %191 = vector.broadcast %cst_97 : f32 to vector<16x36xf32>
    %192 = arith.select %12, %190, %191 : vector<16x36xi1>, vector<16x36xf32>
    %cst_98 = arith.constant dense<0xFF800000> : vector<16xf32>
    %193 = vector.multi_reduction <maximumf>, %192, %cst_98 [1] : vector<16x36xf32> to vector<16xf32>
    %194 = vector.shape_cast %193 : vector<16xf32> to vector<16x1xf32>
    %195 = vector.broadcast %194 : vector<16x1xf32> to vector<16x36xf32>
    %196 = arith.subf %192, %195 : vector<16x36xf32>
    %197 = math.exp %196 : vector<16x36xf32>
    %cst_99 = arith.constant dense<0.000000e+00> : vector<16xf32>
    %198 = vector.multi_reduction <add>, %197, %cst_99 [1] : vector<16x36xf32> to vector<16xf32>
    %199 = vector.shape_cast %198 : vector<16xf32> to vector<16x1xf32>
    %200 = vector.broadcast %199 : vector<16x1xf32> to vector<16x36xf32>
    %201 = arith.divf %197, %200 : vector<16x36xf32>
    %cst_100 = arith.constant dense<0.000000e+00> : vector<16x4xf32>
    %202 = tpu.matmul %201, %180, %cst_100 {dimension_numbers = #tpu.dot_dimension_numbers<[1], [0], [0], [1], [0, 0, 1, 1], [], []>} : vector<16x36xf32>, vector<36x4xf32>, vector<16x4xf32> -> vector<16x4xf32>
    %c0_101 = arith.constant 0 : index
    %c28 = arith.constant 28 : index
    %203 = vector.load %arg5[%c0_101, %c28] : memref<16x96xf32, #tpu.memory_space<vmem>>, vector<16x4xf32>
    %c0_102 = arith.constant 0 : index
    %c60 = arith.constant 60 : index
    %204 = vector.load %arg5[%c0_102, %c60] : memref<16x96xf32, #tpu.memory_space<vmem>>, vector<16x4xf32>
    %c0_103 = arith.constant 0 : index
    %c92 = arith.constant 92 : index
    %205 = vector.load %arg5[%c0_103, %c92] : memref<16x96xf32, #tpu.memory_space<vmem>>, vector<16x4xf32>
    %206 = tpu.concatenate %13, %204, %13 in 0 : vector<10x4xf32>, vector<16x4xf32>, vector<10x4xf32> -> vector<36x4xf32>
    %207 = tpu.concatenate %13, %205, %13 in 0 : vector<10x4xf32>, vector<16x4xf32>, vector<10x4xf32> -> vector<36x4xf32>
    %cst_104 = arith.constant dense<0.000000e+00> : vector<16x36xf32>
    %208 = tpu.matmul %203, %206, %cst_104 {dimension_numbers = #tpu.dot_dimension_numbers<[1], [1], [0], [0], [0, 0, 1, 0], [], []>} : vector<16x4xf32>, vector<36x4xf32>, vector<16x36xf32> -> vector<16x36xf32>
    %209 = vector.shape_cast %203 : vector<16x4xf32> to vector<16x4x1xf32>
    %c7 = arith.constant 7 : index
    %c0_105 = arith.constant 0 : index
    %c0_106 = arith.constant 0 : index
    %c0_107 = arith.constant 0 : index
    %210 = vector.load %arg3[%c7, %c0_105, %c0_106, %c0_107] : memref<8x16x4x36xf32, #tpu.memory_space<vmem>>, vector<1x16x4x36xf32>
    %211 = vector.shape_cast %210 : vector<1x16x4x36xf32> to vector<16x4x36xf32>
    %212 = vector.broadcast %209 : vector<16x4x1xf32> to vector<16x4x36xf32>
    %213 = arith.mulf %212, %211 : vector<16x4x36xf32>
    %cst_108 = arith.constant dense<0.000000e+00> : vector<16x36xf32>
    %214 = vector.multi_reduction <add>, %213, %cst_108 [1] : vector<16x4x36xf32> to vector<16x36xf32>
    %215 = arith.addf %208, %214 : vector<16x36xf32>
    %cst_109 = arith.constant 0.176776692 : f32
    %216 = vector.broadcast %cst_109 : f32 to vector<16x36xf32>
    %217 = arith.mulf %215, %216 : vector<16x36xf32>
    %cst_110 = arith.constant -1.000000e+30 : f32
    %218 = vector.broadcast %cst_110 : f32 to vector<16x36xf32>
    %219 = arith.select %12, %217, %218 : vector<16x36xi1>, vector<16x36xf32>
    %cst_111 = arith.constant dense<0xFF800000> : vector<16xf32>
    %220 = vector.multi_reduction <maximumf>, %219, %cst_111 [1] : vector<16x36xf32> to vector<16xf32>
    %221 = vector.shape_cast %220 : vector<16xf32> to vector<16x1xf32>
    %222 = vector.broadcast %221 : vector<16x1xf32> to vector<16x36xf32>
    %223 = arith.subf %219, %222 : vector<16x36xf32>
    %224 = math.exp %223 : vector<16x36xf32>
    %cst_112 = arith.constant dense<0.000000e+00> : vector<16xf32>
    %225 = vector.multi_reduction <add>, %224, %cst_112 [1] : vector<16x36xf32> to vector<16xf32>
    %226 = vector.shape_cast %225 : vector<16xf32> to vector<16x1xf32>
    %227 = vector.broadcast %226 : vector<16x1xf32> to vector<16x36xf32>
    %228 = arith.divf %224, %227 : vector<16x36xf32>
    %cst_113 = arith.constant dense<0.000000e+00> : vector<16x4xf32>
    %229 = tpu.matmul %228, %207, %cst_113 {dimension_numbers = #tpu.dot_dimension_numbers<[1], [0], [0], [1], [0, 0, 1, 1], [], []>} : vector<16x36xf32>, vector<36x4xf32>, vector<16x4xf32> -> vector<16x4xf32>
    %230 = tpu.concatenate %40, %67, %94, %121, %148, %175, %202, %229 in 1 : vector<16x4xf32>, vector<16x4xf32>, vector<16x4xf32>, vector<16x4xf32>, vector<16x4xf32>, vector<16x4xf32>, vector<16x4xf32>, vector<16x4xf32> -> vector<16x32xf32>
    %c0_114 = arith.constant 0 : index
    %c0_115 = arith.constant 0 : index
    %c0_116 = arith.constant 0 : index
    %231 = vector.load %arg4[%c0_114, %c0_115, %c0_116] : memref<1x16x32xf32, #tpu.memory_space<vmem>>, vector<1x16x32xf32>
    %232 = vector.shape_cast %231 : vector<1x16x32xf32> to vector<16x32xf32>
    %233 = vector.shape_cast %230 : vector<16x32xf32> to vector<1x16x32xf32>
    tpu.vector_store %arg4[%c0_114, %c0_115, %c0_116], %233 {strides = array<i32>} : memref<1x16x32xf32, #tpu.memory_space<vmem>>, vector<1x16x32xf32>,
    return
  }
  func.func @transform_0(%arg0: i32) -> (i32, i32, i32) {
    %c0_i32 = arith.constant 0 : i32
    %c0_i32_0 = arith.constant 0 : i32
    %c0_i32_1 = arith.constant 0 : i32
    return %arg0, %c0_i32, %c0_i32_0 : i32, i32, i32
  }
  func.func @transform_1(%arg0: i32) -> (i32, i32) {
    %c0_i32 = arith.constant 0 : i32
    %c0_i32_0 = arith.constant 0 : i32
    %c0_i32_1 = arith.constant 0 : i32
    return %c0_i32, %c0_i32_0 : i32, i32
  }
  func.func @transform_2(%arg0: i32) -> (i32, i32, i32, i32) {
    %c0_i32 = arith.constant 0 : i32
    %c0_i32_0 = arith.constant 0 : i32
    %c0_i32_1 = arith.constant 0 : i32
    %c0_i32_2 = arith.constant 0 : i32
    %c0_i32_3 = arith.constant 0 : i32
    return %c0_i32, %c0_i32_0, %c0_i32_1, %c0_i32_2 : i32, i32, i32, i32
  }
  func.func @transform_3(%arg0: i32) -> (i32, i32, i32) {
    %c0_i32 = arith.constant 0 : i32
    %c0_i32_0 = arith.constant 0 : i32
    %c0_i32_1 = arith.constant 0 : i32
    return %arg0, %c0_i32, %c0_i32_0 : i32, i32, i32
  }
}

module attributes {stable_mosaic.version = 11 : i64} {
  func.func @_post_attn_kernel(%arg0: i32, %arg1: memref<32x32xf32, #tpu.memory_space<vmem>>, %arg2: memref<32x32xf32, #tpu.memory_space<vmem>>, %arg3: memref<1x32xf32, #tpu.memory_space<vmem>>, %arg4: memref<1x32xf32, #tpu.memory_space<vmem>>, %arg5: memref<32x64xf32, #tpu.memory_space<vmem>>, %arg6: memref<1x64xf32, #tpu.memory_space<vmem>>, %arg7: memref<64x32xf32, #tpu.memory_space<vmem>>, %arg8: memref<1x32xf32, #tpu.memory_space<vmem>>, %arg9: memref<1x32xf32, #tpu.memory_space<vmem>>, %arg10: memref<1x32xf32, #tpu.memory_space<vmem>>, %arg11: memref<32x32xf32, #tpu.memory_space<vmem>>) attributes {dimension_semantics = [#tpu.dimension_semantics<parallel>], iteration_bounds = array<i64: 1>, scalar_prefetch = 0 : i64, scratch_operands = 0 : i64, tpu.core_type = #tpu.core_type<tc>, window_params = [{transform_indices = @transform_0, window_bounds = array<i64: 32, 32>}, {transform_indices = @transform_1, window_bounds = array<i64: 32, 32>}, {pipeline_mode = #tpu.pipeline_mode<synchronous>, transform_indices = @transform_2, window_bounds = array<i64: 1, 32>}, {pipeline_mode = #tpu.pipeline_mode<synchronous>, transform_indices = @transform_3, window_bounds = array<i64: 1, 32>}, {pipeline_mode = #tpu.pipeline_mode<synchronous>, transform_indices = @transform_4, window_bounds = array<i64: 32, 64>}, {pipeline_mode = #tpu.pipeline_mode<synchronous>, transform_indices = @transform_5, window_bounds = array<i64: 1, 64>}, {pipeline_mode = #tpu.pipeline_mode<synchronous>, transform_indices = @transform_6, window_bounds = array<i64: 64, 32>}, {pipeline_mode = #tpu.pipeline_mode<synchronous>, transform_indices = @transform_7, window_bounds = array<i64: 1, 32>}, {pipeline_mode = #tpu.pipeline_mode<synchronous>, transform_indices = @transform_8, window_bounds = array<i64: 1, 32>}, {pipeline_mode = #tpu.pipeline_mode<synchronous>, transform_indices = @transform_9, window_bounds = array<i64: 1, 32>}, {transform_indices = @transform_10, window_bounds = array<i64: 32, 32>}]} {
    %c0 = arith.constant 0 : index
    %c0_0 = arith.constant 0 : index
    %0 = vector.load %arg1[%c0, %c0_0] : memref<32x32xf32, #tpu.memory_space<vmem>>, vector<32x32xf32>
    %c0_1 = arith.constant 0 : index
    %c0_2 = arith.constant 0 : index
    %1 = vector.load %arg2[%c0_1, %c0_2] : memref<32x32xf32, #tpu.memory_space<vmem>>, vector<32x32xf32>
    %2 = arith.addf %0, %1 : vector<32x32xf32>
    %c0_3 = arith.constant 0 : index
    %c0_4 = arith.constant 0 : index
    %3 = vector.load %arg3[%c0_3, %c0_4] : memref<1x32xf32, #tpu.memory_space<vmem>>, vector<1x32xf32>
    %c0_5 = arith.constant 0 : index
    %c0_6 = arith.constant 0 : index
    %4 = vector.load %arg4[%c0_5, %c0_6] : memref<1x32xf32, #tpu.memory_space<vmem>>, vector<1x32xf32>
    %cst = arith.constant dense<0.000000e+00> : vector<32xf32>
    %5 = vector.multi_reduction <add>, %2, %cst [1] : vector<32x32xf32> to vector<32xf32>
    %6 = vector.shape_cast %5 : vector<32xf32> to vector<32x1xf32>
    %cst_7 = arith.constant 3.200000e+01 : f32
    %7 = vector.broadcast %cst_7 : f32 to vector<32x1xf32>
    %8 = arith.divf %6, %7 : vector<32x1xf32>
    %9 = vector.broadcast %8 : vector<32x1xf32> to vector<32x32xf32>
    %10 = arith.subf %2, %9 : vector<32x32xf32>
    %11 = arith.mulf %10, %10 : vector<32x32xf32>
    %cst_8 = arith.constant dense<0.000000e+00> : vector<32xf32>
    %12 = vector.multi_reduction <add>, %11, %cst_8 [1] : vector<32x32xf32> to vector<32xf32>
    %13 = vector.shape_cast %12 : vector<32xf32> to vector<32x1xf32>
    %cst_9 = arith.constant 3.200000e+01 : f32
    %14 = vector.broadcast %cst_9 : f32 to vector<32x1xf32>
    %15 = arith.divf %13, %14 : vector<32x1xf32>
    %16 = vector.broadcast %8 : vector<32x1xf32> to vector<32x32xf32>
    %17 = arith.subf %2, %16 : vector<32x32xf32>
    %cst_10 = arith.constant 9.99999974E-6 : f32
    %18 = vector.broadcast %cst_10 : f32 to vector<32x1xf32>
    %19 = arith.addf %15, %18 : vector<32x1xf32>
    %20 = math.rsqrt %19 : vector<32x1xf32>
    %21 = vector.broadcast %20 : vector<32x1xf32> to vector<32x32xf32>
    %22 = arith.mulf %17, %21 : vector<32x32xf32>
    %23 = vector.broadcast %3 : vector<1x32xf32> to vector<32x32xf32>
    %24 = arith.mulf %22, %23 : vector<32x32xf32>
    %25 = vector.broadcast %4 : vector<1x32xf32> to vector<32x32xf32>
    %26 = arith.addf %24, %25 : vector<32x32xf32>
    %c0_11 = arith.constant 0 : index
    %c0_12 = arith.constant 0 : index
    %27 = vector.load %arg5[%c0_11, %c0_12] : memref<32x64xf32, #tpu.memory_space<vmem>>, vector<32x64xf32>
    %cst_13 = arith.constant dense<0.000000e+00> : vector<32x64xf32>
    %28 = tpu.matmul %26, %27, %cst_13 {dimension_numbers = #tpu.dot_dimension_numbers<[1], [0], [0], [1], [0, 0, 1, 1], [], []>} : vector<32x32xf32>, vector<32x64xf32>, vector<32x64xf32> -> vector<32x64xf32>
    %c0_14 = arith.constant 0 : index
    %c0_15 = arith.constant 0 : index
    %29 = vector.load %arg6[%c0_14, %c0_15] : memref<1x64xf32, #tpu.memory_space<vmem>>, vector<1x64xf32>
    %30 = vector.broadcast %29 : vector<1x64xf32> to vector<32x64xf32>
    %31 = arith.addf %28, %30 : vector<32x64xf32>
    %cst_16 = arith.constant 5.000000e-01 : f32
    %32 = vector.broadcast %cst_16 : f32 to vector<32x64xf32>
    %33 = arith.mulf %32, %31 : vector<32x64xf32>
    %cst_17 = arith.constant 4.471500e-02 : f32
    %34 = vector.broadcast %cst_17 : f32 to vector<32x64xf32>
    %35 = arith.mulf %34, %31 : vector<32x64xf32>
    %36 = arith.mulf %35, %31 : vector<32x64xf32>
    %37 = arith.mulf %36, %31 : vector<32x64xf32>
    %38 = arith.addf %31, %37 : vector<32x64xf32>
    %cst_18 = arith.constant 0.797884583 : f32
    %39 = vector.broadcast %cst_18 : f32 to vector<32x64xf32>
    %40 = arith.mulf %39, %38 : vector<32x64xf32>
    %41 = math.tanh %40 : vector<32x64xf32>
    %cst_19 = arith.constant 1.000000e+00 : f32
    %42 = vector.broadcast %cst_19 : f32 to vector<32x64xf32>
    %43 = arith.addf %42, %41 : vector<32x64xf32>
    %44 = arith.mulf %33, %43 : vector<32x64xf32>
    %c0_20 = arith.constant 0 : index
    %c0_21 = arith.constant 0 : index
    %45 = vector.load %arg7[%c0_20, %c0_21] : memref<64x32xf32, #tpu.memory_space<vmem>>, vector<64x32xf32>
    %cst_22 = arith.constant dense<0.000000e+00> : vector<32x32xf32>
    %46 = tpu.matmul %44, %45, %cst_22 {dimension_numbers = #tpu.dot_dimension_numbers<[1], [0], [0], [1], [0, 0, 1, 1], [], []>} : vector<32x64xf32>, vector<64x32xf32>, vector<32x32xf32> -> vector<32x32xf32>
    %c0_23 = arith.constant 0 : index
    %c0_24 = arith.constant 0 : index
    %47 = vector.load %arg8[%c0_23, %c0_24] : memref<1x32xf32, #tpu.memory_space<vmem>>, vector<1x32xf32>
    %48 = vector.broadcast %47 : vector<1x32xf32> to vector<32x32xf32>
    %49 = arith.addf %46, %48 : vector<32x32xf32>
    %50 = arith.addf %26, %49 : vector<32x32xf32>
    %c0_25 = arith.constant 0 : index
    %c0_26 = arith.constant 0 : index
    %51 = vector.load %arg9[%c0_25, %c0_26] : memref<1x32xf32, #tpu.memory_space<vmem>>, vector<1x32xf32>
    %c0_27 = arith.constant 0 : index
    %c0_28 = arith.constant 0 : index
    %52 = vector.load %arg10[%c0_27, %c0_28] : memref<1x32xf32, #tpu.memory_space<vmem>>, vector<1x32xf32>
    %cst_29 = arith.constant dense<0.000000e+00> : vector<32xf32>
    %53 = vector.multi_reduction <add>, %50, %cst_29 [1] : vector<32x32xf32> to vector<32xf32>
    %54 = vector.shape_cast %53 : vector<32xf32> to vector<32x1xf32>
    %cst_30 = arith.constant 3.200000e+01 : f32
    %55 = vector.broadcast %cst_30 : f32 to vector<32x1xf32>
    %56 = arith.divf %54, %55 : vector<32x1xf32>
    %57 = vector.broadcast %56 : vector<32x1xf32> to vector<32x32xf32>
    %58 = arith.subf %50, %57 : vector<32x32xf32>
    %59 = arith.mulf %58, %58 : vector<32x32xf32>
    %cst_31 = arith.constant dense<0.000000e+00> : vector<32xf32>
    %60 = vector.multi_reduction <add>, %59, %cst_31 [1] : vector<32x32xf32> to vector<32xf32>
    %61 = vector.shape_cast %60 : vector<32xf32> to vector<32x1xf32>
    %cst_32 = arith.constant 3.200000e+01 : f32
    %62 = vector.broadcast %cst_32 : f32 to vector<32x1xf32>
    %63 = arith.divf %61, %62 : vector<32x1xf32>
    %64 = vector.broadcast %56 : vector<32x1xf32> to vector<32x32xf32>
    %65 = arith.subf %50, %64 : vector<32x32xf32>
    %cst_33 = arith.constant 9.99999974E-6 : f32
    %66 = vector.broadcast %cst_33 : f32 to vector<32x1xf32>
    %67 = arith.addf %63, %66 : vector<32x1xf32>
    %68 = math.rsqrt %67 : vector<32x1xf32>
    %69 = vector.broadcast %68 : vector<32x1xf32> to vector<32x32xf32>
    %70 = arith.mulf %65, %69 : vector<32x32xf32>
    %71 = vector.broadcast %51 : vector<1x32xf32> to vector<32x32xf32>
    %72 = arith.mulf %70, %71 : vector<32x32xf32>
    %73 = vector.broadcast %52 : vector<1x32xf32> to vector<32x32xf32>
    %74 = arith.addf %72, %73 : vector<32x32xf32>
    %c0_34 = arith.constant 0 : index
    %c0_35 = arith.constant 0 : index
    %75 = vector.load %arg11[%c0_34, %c0_35] : memref<32x32xf32, #tpu.memory_space<vmem>>, vector<32x32xf32>
    tpu.vector_store %arg11[%c0_34, %c0_35], %74 {strides = array<i32>} : memref<32x32xf32, #tpu.memory_space<vmem>>, vector<32x32xf32>,
    return
  }
  func.func @transform_0(%arg0: i32) -> (i32, i32) {
    %c0_i32 = arith.constant 0 : i32
    %c0_i32_0 = arith.constant 0 : i32
    return %arg0, %c0_i32 : i32, i32
  }
  func.func @transform_1(%arg0: i32) -> (i32, i32) {
    %c0_i32 = arith.constant 0 : i32
    %c0_i32_0 = arith.constant 0 : i32
    return %arg0, %c0_i32 : i32, i32
  }
  func.func @transform_2(%arg0: i32) -> (i32, i32) {
    %c0_i32 = arith.constant 0 : i32
    %c0_i32_0 = arith.constant 0 : i32
    %c0_i32_1 = arith.constant 0 : i32
    return %c0_i32, %c0_i32_0 : i32, i32
  }
  func.func @transform_3(%arg0: i32) -> (i32, i32) {
    %c0_i32 = arith.constant 0 : i32
    %c0_i32_0 = arith.constant 0 : i32
    %c0_i32_1 = arith.constant 0 : i32
    return %c0_i32, %c0_i32_0 : i32, i32
  }
  func.func @transform_4(%arg0: i32) -> (i32, i32) {
    %c0_i32 = arith.constant 0 : i32
    %c0_i32_0 = arith.constant 0 : i32
    %c0_i32_1 = arith.constant 0 : i32
    return %c0_i32, %c0_i32_0 : i32, i32
  }
  func.func @transform_5(%arg0: i32) -> (i32, i32) {
    %c0_i32 = arith.constant 0 : i32
    %c0_i32_0 = arith.constant 0 : i32
    %c0_i32_1 = arith.constant 0 : i32
    return %c0_i32, %c0_i32_0 : i32, i32
  }
  func.func @transform_6(%arg0: i32) -> (i32, i32) {
    %c0_i32 = arith.constant 0 : i32
    %c0_i32_0 = arith.constant 0 : i32
    %c0_i32_1 = arith.constant 0 : i32
    return %c0_i32, %c0_i32_0 : i32, i32
  }
  func.func @transform_7(%arg0: i32) -> (i32, i32) {
    %c0_i32 = arith.constant 0 : i32
    %c0_i32_0 = arith.constant 0 : i32
    %c0_i32_1 = arith.constant 0 : i32
    return %c0_i32, %c0_i32_0 : i32, i32
  }
  func.func @transform_8(%arg0: i32) -> (i32, i32) {
    %c0_i32 = arith.constant 0 : i32
    %c0_i32_0 = arith.constant 0 : i32
    %c0_i32_1 = arith.constant 0 : i32
    return %c0_i32, %c0_i32_0 : i32, i32
  }
  func.func @transform_9(%arg0: i32) -> (i32, i32) {
    %c0_i32 = arith.constant 0 : i32
    %c0_i32_0 = arith.constant 0 : i32
    %c0_i32_1 = arith.constant 0 : i32
    return %c0_i32, %c0_i32_0 : i32, i32
  }
  func.func @transform_10(%arg0: i32) -> (i32, i32) {
    %c0_i32 = arith.constant 0 : i32
    %c0_i32_0 = arith.constant 0 : i32
    return %arg0, %c0_i32 : i32, i32
  }
}

module attributes {stable_mosaic.version = 11 : i64} {
  func.func @_linear_kernel(%arg0: i32, %arg1: memref<32x32xf32, #tpu.memory_space<vmem>>, %arg2: memref<32x3xf32, #tpu.memory_space<vmem>>, %arg3: memref<1x3xf32, #tpu.memory_space<vmem>>, %arg4: memref<32x3xf32, #tpu.memory_space<vmem>>) attributes {dimension_semantics = [#tpu.dimension_semantics<parallel>], iteration_bounds = array<i64: 1>, scalar_prefetch = 0 : i64, scratch_operands = 0 : i64, tpu.core_type = #tpu.core_type<tc>, window_params = [{transform_indices = @transform_0, window_bounds = array<i64: 32, 32>}, {pipeline_mode = #tpu.pipeline_mode<synchronous>, transform_indices = @transform_1, window_bounds = array<i64: 32, 3>}, {pipeline_mode = #tpu.pipeline_mode<synchronous>, transform_indices = @transform_2, window_bounds = array<i64: 1, 3>}, {transform_indices = @transform_3, window_bounds = array<i64: 32, 3>}]} {
    %c0 = arith.constant 0 : index
    %c0_0 = arith.constant 0 : index
    %0 = vector.load %arg1[%c0, %c0_0] : memref<32x32xf32, #tpu.memory_space<vmem>>, vector<32x32xf32>
    %c0_1 = arith.constant 0 : index
    %c0_2 = arith.constant 0 : index
    %1 = vector.load %arg2[%c0_1, %c0_2] : memref<32x3xf32, #tpu.memory_space<vmem>>, vector<32x3xf32>
    %cst = arith.constant dense<0.000000e+00> : vector<32x3xf32>
    %2 = tpu.matmul %0, %1, %cst {dimension_numbers = #tpu.dot_dimension_numbers<[1], [0], [0], [1], [0, 0, 1, 1], [], []>} : vector<32x32xf32>, vector<32x3xf32>, vector<32x3xf32> -> vector<32x3xf32>
    %c0_3 = arith.constant 0 : index
    %c0_4 = arith.constant 0 : index
    %3 = vector.load %arg3[%c0_3, %c0_4] : memref<1x3xf32, #tpu.memory_space<vmem>>, vector<1x3xf32>
    %4 = vector.broadcast %3 : vector<1x3xf32> to vector<32x3xf32>
    %5 = arith.addf %2, %4 : vector<32x3xf32>
    %cst_5 = arith.constant 0.000000e+00 : f32
    %6 = vector.broadcast %cst_5 : f32 to vector<32x3xf32>
    %7 = arith.subf %6, %5 : vector<32x3xf32>
    %8 = math.exp %7 : vector<32x3xf32>
    %cst_6 = arith.constant 1.000000e+00 : f32
    %9 = vector.broadcast %cst_6 : f32 to vector<32x3xf32>
    %10 = arith.addf %9, %8 : vector<32x3xf32>
    %cst_7 = arith.constant 1.000000e+00 : f32
    %11 = vector.broadcast %cst_7 : f32 to vector<32x3xf32>
    %12 = arith.divf %11, %10 : vector<32x3xf32>
    %c0_8 = arith.constant 0 : index
    %c0_9 = arith.constant 0 : index
    %13 = vector.load %arg4[%c0_8, %c0_9] : memref<32x3xf32, #tpu.memory_space<vmem>>, vector<32x3xf32>
    tpu.vector_store %arg4[%c0_8, %c0_9], %12 {strides = array<i32>} : memref<32x3xf32, #tpu.memory_space<vmem>>, vector<32x3xf32>,
    return
  }
  func.func @transform_0(%arg0: i32) -> (i32, i32) {
    %c0_i32 = arith.constant 0 : i32
    %c0_i32_0 = arith.constant 0 : i32
    return %arg0, %c0_i32 : i32, i32
  }
  func.func @transform_1(%arg0: i32) -> (i32, i32) {
    %c0_i32 = arith.constant 0 : i32
    %c0_i32_0 = arith.constant 0 : i32
    %c0_i32_1 = arith.constant 0 : i32
    return %c0_i32, %c0_i32_0 : i32, i32
  }
  func.func @transform_2(%arg0: i32) -> (i32, i32) {
    %c0_i32 = arith.constant 0 : i32
    %c0_i32_0 = arith.constant 0 : i32
    %c0_i32_1 = arith.constant 0 : i32
    return %c0_i32, %c0_i32_0 : i32, i32
  }
  func.func @transform_3(%arg0: i32) -> (i32, i32) {
    %c0_i32 = arith.constant 0 : i32
    %c0_i32_0 = arith.constant 0 : i32
    return %arg0, %c0_i32 : i32, i32
  }
}

</mosaic_0001>

<llo_original>
// kernel: net_forward.16
$region0: #{net_forward.16}
  #allocation0 [shape = 'u32[]', space=smem, size = 0x4, offset = 0x4, fixed_abs, tag = 'smem constant byte address 0x4 - core index']
  #allocation1 [shape = 'u32[144,128]{1,0:T(1,128)}', space=vmem, size = 0x12000, scoped, tag = 'internal scratch']
  %s0 = inlined_call_operand.vmem [shape: f32[32,4], index: 0, kind: input, shape index: {}]
  %s1 = inlined_call_operand.vmem [shape: f32[4,32], index: 1, kind: input, shape index: {}]
  %s2 = inlined_call_operand.vmem [shape: f32[1,32], index: 2, kind: input, shape index: {}]
  %s3 = inlined_call_operand.vmem [shape: f32[1,32], index: 3, kind: input, shape index: {}]
  %s4 = inlined_call_operand.vmem [shape: f32[1,32], index: 4, kind: input, shape index: {}]
  %s5 = inlined_call_operand.vmem [shape: f32[32,32], index: 5, kind: output, shape index: {}]
  %s6 = sld [smem:[#allocation0]]
  $region30: #{net_forward.16} parent=0
    _
  %s8 = ssub.s32 1, %s6
  %s9 = scalar_select 0, %s8, %s6
  // Predicated region
  $region2: #{net_forward.16} parent=0 // pred_check
    _
  $region3: #{net_forward.16} parent=0 // pred_check_branch
    %11 = sbr.rel (0) target = $region5
  $region4: #{net_forward.16} parent=0 // pred_region
    _
  $region5: #{net_forward.16} parent=0 // pred_fallthru
    _
  // Predicated region
  $region6: #{net_forward.16} parent=0 // pred_check
    _
  $region7: #{net_forward.16} parent=0 // pred_check_branch
    %13 = sbr.rel (0) target = $region9
  $region8: #{net_forward.16} parent=0 // pred_region
    _
  $region9: #{net_forward.16} parent=0 // pred_fallthru
    _
  // Predicated region
  $region10: #{net_forward.16} parent=0 // pred_check
    _
  $region11: #{net_forward.16} parent=0 // pred_check_branch
    %15 = sbr.rel (0) target = $region13
  $region12: #{net_forward.16} parent=0 // pred_region
    _
  $region13: #{net_forward.16} parent=0 // pred_fallthru
    _
  // Predicated region
  $region14: #{net_forward.16} parent=0 // pred_check
    _
  $region15: #{net_forward.16} parent=0 // pred_check_branch
    %17 = sbr.rel (0) target = $region17
  $region16: #{net_forward.16} parent=0 // pred_region
    _
  $region17: #{net_forward.16} parent=0 // pred_fallthru
    _
  // Predicated region
  $region18: #{net_forward.16} parent=0 // pred_check
    _
  $region19: #{net_forward.16} parent=0 // pred_check_branch
    %19 = sbr.rel (0) target = $region21
  $region20: #{net_forward.16} parent=0 // pred_region
    _
  $region21: #{net_forward.16} parent=0 // pred_fallthru
    _
  %v20 = vld [vmem:[%s0] sm:$0xff]
  %v21 = vld [vmem:[%s0 + $0x8] sm:$0xff]
  %v22 = vld [vmem:[%s0 + $0x10] sm:$0xff]
  %v23 = vld [vmem:[%s0 + $0x18] sm:$0xff]
  %v24 = vld [vmem:[%s1] sm:$0xf]
  %v25 = vld [vmem:[%s2] sm:$0x1]
  %v27 = vlaneseq
  %v28 = vshrl.u32 %v27, 7
  %v29 = vsub.s32 0, %v28
  %v30 = vrot.slane %v25, %v29
  %vm32 = vcmask 31744
  %v34 = vsel %vm32, %v20, 0
  %v37 = vsel %vm32, %v21, 0
  %v40 = vsel %vm32, %v22, 0
  %v43 = vsel %vm32, %v23, 0
  %vm45 = vcmask 1043456
  %v47 = vsel %vm45, %v24, 0
  %49 = vmatprep.subr.mxu0 0.0
  %50 = vmatpush1.msra.mxu0 0.0
  %51 = vmatprep.subr.mxu0 0.0
  %52 = vmatpush1.msra.mxu0 0.0
  %53 = vmatprep.subr.mxu0 0.0
  %54 = vmatpush1.msra.mxu0 0.0
  %55 = vmatprep.subr.mxu0 0.0
  %56 = vmatpush1.msra.mxu0 0.0
  %57 = vmatprep.subr.mxu0 0.0
  %58 = vmatpush1.msra.mxu0 0.0
  %59 = vmatprep.subr.mxu0 0.0
  %60 = vmatpush1.msra.mxu0 0.0
  %61 = vmatprep.subr.mxu0 0.0
  %62 = vmatpush1.msra.mxu0 0.0
  %63 = vmatprep.subr.mxu0 0.0
  %64 = vmatpush1.msra.mxu0 0.0
  %65 = vmatprep.subr.mxu0 0.0
  %66 = vmatpush1.msra.mxu0 0.0
  %67 = vmatprep.subr.mxu0 0.0
  %68 = vmatpush1.msra.mxu0 0.0
  %69 = vmatprep.subr.mxu0 0.0
  %70 = vmatpush1.msra.mxu0 0.0
  %71 = vmatprep.subr.mxu0 0.0
  %72 = vmatpush1.msra.mxu0 0.0
  %73 = vmatprep.subr.mxu0 0.0
  %74 = vmatpush1.msra.mxu0 0.0
  %75 = vmatprep.subr.mxu0 0.0
  %76 = vmatpush1.msra.mxu0 0.0
  %77 = vmatprep.subr.mxu0 0.0
  %78 = vmatpush1.msra.mxu0 0.0
  %79 = vmatprep.subr.mxu0 0.0
  %80 = vmatpush1.msra.mxu0 %v47
  %81 = vmatprep.subr.mxu0 0.0
  %82 = vmatpush2.msra.mxu0 0.0
  %83 = vmatprep.subr.mxu0 0.0
  %84 = vmatpush2.msra.mxu0 0.0
  %85 = vmatprep.subr.mxu0 0.0
  %86 = vmatpush2.msra.mxu0 0.0
  %87 = vmatprep.subr.mxu0 0.0
  %88 = vmatpush2.msra.mxu0 0.0
  %89 = vmatprep.subr.mxu0 0.0
  %90 = vmatpush2.msra.mxu0 0.0
  %91 = vmatprep.subr.mxu0 0.0
  %92 = vmatpush2.msra.mxu0 0.0
  %93 = vmatprep.subr.mxu0 0.0
  %94 = vmatpush2.msra.mxu0 0.0
  %95 = vmatprep.subr.mxu0 0.0
  %96 = vmatpush2.msra.mxu0 0.0
  %97 = vmatprep.subr.mxu0 0.0
  %98 = vmatpush2.msra.mxu0 0.0
  %99 = vmatprep.subr.mxu0 0.0
  %100 = vmatpush2.msra.mxu0 0.0
  %101 = vmatprep.subr.mxu0 0.0
  %102 = vmatpush2.msra.mxu0 0.0
  %103 = vmatprep.subr.mxu0 0.0
  %104 = vmatpush2.msra.mxu0 0.0
  %105 = vmatprep.subr.mxu0 0.0
  %106 = vmatpush2.msra.mxu0 0.0
  %107 = vmatprep.subr.mxu0 0.0
  %108 = vmatpush2.msra.mxu0 0.0
  %109 = vmatprep.subr.mxu0 0.0
  %110 = vmatpush2.msra.mxu0 0.0
  %111 = vmatprep.subr.mxu0 0.0
  %112 = vmatpush2.msra.mxu0 0.0
  %113 = vmatprep.mubr.f32.mxu0 0.0
  %114 = vmatmul.mubr.f32.gmra.mxu0 %v34
  %v115 = vpop.f32.mrf.mxu0
  %v116 = vadd.f32 %v30, %v115
  %v117 = vpop.f32.mrf.mxu0
  %118 = vmatprep.mubr.f32.mxu0 0.0
  %119 = vmatmul.mubr.f32.gmra.mxu0 %v37
  %v120 = vpop.f32.mrf.mxu0
  %v121 = vadd.f32 %v30, %v120
  %v122 = vpop.f32.mrf.mxu0
  %123 = vmatprep.mubr.f32.mxu0 0.0
  %124 = vmatmul.mubr.f32.gmra.mxu0 %v40
  %v125 = vpop.f32.mrf.mxu0
  %v126 = vadd.f32 %v30, %v125
  %v127 = vpop.f32.mrf.mxu0
  %128 = vmatprep.mubr.f32.mxu0 0.0
  %129 = vmatmul.mubr.f32.gmra.mxu0 %v43
  %v130 = vpop.f32.mrf.mxu0
  %v131 = vadd.f32 %v30, %v130
  %v132 = vpop.f32.mrf.mxu0
  %133 = vdwg.mxu0
  %v134 = vld [vmem:[%s3] sm:$0x1]
  %v135 = vld [vmem:[%s4] sm:$0x1]
  %vm136 = vcmask 261120
  %v137 = vsel %vm136, %v116, 0.0
  %138 = vadd.xlane.f32.xlu0 %v137
  %v139 = vpop.xlane.xlu0 %138
  %v140 = vsel %vm136, %v121, 0.0
  %141 = vadd.xlane.f32.xlu0 %v140
  %v142 = vpop.xlane.xlu0 %141
  %v143 = vsel %vm136, %v126, 0.0
  %144 = vadd.xlane.f32.xlu0 %v143
  %v145 = vpop.xlane.xlu0 %144
  %v146 = vsel %vm136, %v131, 0.0
  %147 = vadd.xlane.f32.xlu0 %v146
  %v148 = vpop.xlane.xlu0 %147
  %v149 = vrcp.pop 32.0
  %v150 = vmul.f32 %v139, %v149
  %v151 = vmul.f32 %v142, %v149
  %v152 = vmul.f32 %v145, %v149
  %v153 = vmul.f32 %v148, %v149
  %v154 = vsub.f32 %v116, %v150
  %v155 = vsub.f32 %v121, %v151
  %v156 = vsub.f32 %v126, %v152
  %v157 = vsub.f32 %v131, %v153
  %v158 = vmul.f32 %v154, %v154
  %v159 = vmul.f32 %v155, %v155
  %v160 = vmul.f32 %v156, %v156
  %v161 = vmul.f32 %v157, %v157
  %v162 = vsel %vm136, %v158, 0.0
  %163 = vadd.xlane.f32.xlu0 %v162
  %v164 = vpop.xlane.xlu0 %163
  %v165 = vsel %vm136, %v159, 0.0
  %166 = vadd.xlane.f32.xlu0 %v165
  %v167 = vpop.xlane.xlu0 %166
  %v168 = vsel %vm136, %v160, 0.0
  %169 = vadd.xlane.f32.xlu0 %v168
  %v170 = vpop.xlane.xlu0 %169
  %v171 = vsel %vm136, %v161, 0.0
  %172 = vadd.xlane.f32.xlu0 %v171
  %v173 = vpop.xlane.xlu0 %172
  %v174 = vmul.f32 %v164, %v149
  %v175 = vmul.f32 %v167, %v149
  %v176 = vmul.f32 %v170, %v149
  %v177 = vmul.f32 %v173, %v149
  %v178 = vadd.f32 %v174, 1e-05
  %v179 = vadd.f32 %v175, 1e-05
  %v180 = vadd.f32 %v176, 1e-05
  %v181 = vadd.f32 %v177, 1e-05
  %v182 = vrsqrt.pop %v178
  %v183 = vrsqrt.pop %v179
  %v184 = vrsqrt.pop %v180
  %v185 = vrsqrt.pop %v181
  %v186 = vmul.f32 %v154, %v182
  %v187 = vmul.f32 %v155, %v183
  %v188 = vmul.f32 %v156, %v184
  %v189 = vmul.f32 %v157, %v185
  %v191 = vlaneseq
  %v192 = vshrl.u32 %v191, 7
  %v193 = vsub.s32 0, %v192
  %v194 = vrot.slane %v134, %v193
  %v196 = vmul.f32 %v186, %v194
  %v197 = vmul.f32 %v187, %v194
  %v198 = vmul.f32 %v188, %v194
  %v199 = vmul.f32 %v189, %v194
  %v201 = vlaneseq
  %v202 = vshrl.u32 %v201, 7
  %v203 = vsub.s32 0, %v202
  %v204 = vrot.slane %v135, %v203
  %v206 = vadd.f32 %v196, %v204
  %v207 = vadd.f32 %v197, %v204
  %v208 = vadd.f32 %v198, %v204
  %v209 = vadd.f32 %v199, %v204
  %v210 = vmul.f32 %v206, 0.5
  %v211 = vmul.f32 %v207, 0.5
  %v212 = vmul.f32 %v208, 0.5
  %v213 = vmul.f32 %v209, 0.5
  %v214 = vmul.f32 %v206, 0.044715
  %v215 = vmul.f32 %v207, 0.044715
  %v216 = vmul.f32 %v208, 0.044715
  %v217 = vmul.f32 %v209, 0.044715
  %v218 = vmul.f32 %v214, %v206
  %v219 = vmul.f32 %v215, %v207
  %v220 = vmul.f32 %v216, %v208
  %v221 = vmul.f32 %v217, %v209
  %v222 = vmul.f32 %v218, %v206
  %v223 = vmul.f32 %v219, %v207
  %v224 = vmul.f32 %v220, %v208
  %v225 = vmul.f32 %v221, %v209
  %v226 = vadd.f32 %v206, %v222
  %v227 = vadd.f32 %v207, %v223
  %v228 = vadd.f32 %v208, %v224
  %v229 = vadd.f32 %v209, %v225
  %v230 = vmul.f32 %v226, 0.7978846
  %v231 = vmul.f32 %v227, 0.7978846
  %v232 = vmul.f32 %v228, 0.7978846
  %v233 = vmul.f32 %v229, 0.7978846
  %v234 = vtanh.pop %v230
  %v235 = vtanh.pop %v231
  %v236 = vtanh.pop %v232
  %v237 = vtanh.pop %v233
  %v238 = vadd.f32 %v234, 1.0
  %v239 = vadd.f32 %v235, 1.0
  %v240 = vadd.f32 %v236, 1.0
  %v241 = vadd.f32 %v237, 1.0
  %v242 = vmul.f32 %v210, %v238
  %v243 = vmul.f32 %v211, %v239
  %v244 = vmul.f32 %v212, %v240
  %v245 = vmul.f32 %v213, %v241
  %246 = vst.msk [vmem:[%s5] sm:$0xff] %vm136, %v242
  %247 = vst.msk [vmem:[%s5 + $0x8] sm:$0xff] %vm136, %v243
  %248 = vst.msk [vmem:[%s5 + $0x10] sm:$0xff] %vm136, %v244
  %249 = vst.msk [vmem:[%s5 + $0x18] sm:$0xff] %vm136, %v245
  // Predicated region
  $region22: #{net_forward.16} parent=0 // pred_check
    _
  $region23: #{net_forward.16} parent=0 // pred_check_branch
    %251 = sbr.rel (0) target = $region25
  $region24: #{net_forward.16} parent=0 // pred_region
    _
  $region25: #{net_forward.16} parent=0 // pred_fallthru
    _
  // Predicated region
  $region26: #{net_forward.16} parent=0 // pred_check
    _
  $region27: #{net_forward.16} parent=0 // pred_check_branch
    %253 = sbr.rel (0) target = $region29
  $region28: #{net_forward.16} parent=0 // pred_region
    _
  $region29: #{net_forward.16} parent=0 // pred_fallthru
    _

// kernel: net_forward.17
$region0: #{net_forward.17}
  #allocation0 [shape = 'u32[]', space=smem, size = 0x4, offset = 0x4, fixed_abs, tag = 'smem constant byte address 0x4 - core index']
  #allocation1 [shape = 'u32[144,128]{1,0:T(1,128)}', space=vmem, size = 0x12000, scoped, tag = 'internal scratch']
  %s0 = inlined_call_operand.vmem [shape: f32[32,32], index: 0, kind: input, shape index: {}]
  %s1 = inlined_call_operand.vmem [shape: f32[32,32], index: 1, kind: input, shape index: {}]
  %s2 = inlined_call_operand.vmem [shape: f32[1,32], index: 2, kind: input, shape index: {}]
  %s3 = inlined_call_operand.vmem [shape: f32[1,32], index: 3, kind: input, shape index: {}]
  %s4 = inlined_call_operand.vmem [shape: f32[1,32], index: 4, kind: input, shape index: {}]
  %s5 = inlined_call_operand.vmem [shape: f32[32,32], index: 5, kind: output, shape index: {}]
  %s6 = sld [smem:[#allocation0]]
  $region30: #{net_forward.17} parent=0
    _
  %s8 = ssub.s32 1, %s6
  %s9 = scalar_select 0, %s8, %s6
  // Predicated region
  $region2: #{net_forward.17} parent=0 // pred_check
    _
  $region3: #{net_forward.17} parent=0 // pred_check_branch
    %11 = sbr.rel (0) target = $region5
  $region4: #{net_forward.17} parent=0 // pred_region
    _
  $region5: #{net_forward.17} parent=0 // pred_fallthru
    _
  // Predicated region
  $region6: #{net_forward.17} parent=0 // pred_check
    _
  $region7: #{net_forward.17} parent=0 // pred_check_branch
    %13 = sbr.rel (0) target = $region9
  $region8: #{net_forward.17} parent=0 // pred_region
    _
  $region9: #{net_forward.17} parent=0 // pred_fallthru
    _
  // Predicated region
  $region10: #{net_forward.17} parent=0 // pred_check
    _
  $region11: #{net_forward.17} parent=0 // pred_check_branch
    %15 = sbr.rel (0) target = $region13
  $region12: #{net_forward.17} parent=0 // pred_region
    _
  $region13: #{net_forward.17} parent=0 // pred_fallthru
    _
  // Predicated region
  $region14: #{net_forward.17} parent=0 // pred_check
    _
  $region15: #{net_forward.17} parent=0 // pred_check_branch
    %17 = sbr.rel (0) target = $region17
  $region16: #{net_forward.17} parent=0 // pred_region
    _
  $region17: #{net_forward.17} parent=0 // pred_fallthru
    _
  // Predicated region
  $region18: #{net_forward.17} parent=0 // pred_check
    _
  $region19: #{net_forward.17} parent=0 // pred_check_branch
    %19 = sbr.rel (0) target = $region21
  $region20: #{net_forward.17} parent=0 // pred_region
    _
  $region21: #{net_forward.17} parent=0 // pred_fallthru
    _
  %v20 = vld [vmem:[%s0] sm:$0xff]
  %v21 = vld [vmem:[%s0 + $0x8] sm:$0xff]
  %v22 = vld [vmem:[%s0 + $0x10] sm:$0xff]
  %v23 = vld [vmem:[%s0 + $0x18] sm:$0xff]
  %v24 = vld [vmem:[%s1] sm:$0xff]
  %v25 = vld [vmem:[%s1 + $0x8] sm:$0xff]
  %v26 = vld [vmem:[%s1 + $0x10] sm:$0xff]
  %v27 = vld [vmem:[%s1 + $0x18] sm:$0xff]
  %v28 = vld [vmem:[%s2] sm:$0x1]
  %v30 = vlaneseq
  %v31 = vshrl.u32 %v30, 7
  %v32 = vsub.s32 0, %v31
  %v33 = vrot.slane %v28, %v32
  %vm35 = vcmask 261120
  %v37 = vsel %vm35, %v20, 0
  %v40 = vsel %vm35, %v21, 0
  %v43 = vsel %vm35, %v22, 0
  %v46 = vsel %vm35, %v23, 0
  %48 = vmatprep.subr.mxu0 0.0
  %49 = vmatpush1.msra.mxu0 0.0
  %50 = vmatprep.subr.mxu0 0.0
  %51 = vmatpush1.msra.mxu0 0.0
  %52 = vmatprep.subr.mxu0 0.0
  %53 = vmatpush1.msra.mxu0 0.0
  %54 = vmatprep.subr.mxu0 0.0
  %55 = vmatpush1.msra.mxu0 0.0
  %56 = vmatprep.subr.mxu0 0.0
  %57 = vmatpush1.msra.mxu0 0.0
  %58 = vmatprep.subr.mxu0 0.0
  %59 = vmatpush1.msra.mxu0 0.0
  %60 = vmatprep.subr.mxu0 0.0
  %61 = vmatpush1.msra.mxu0 0.0
  %62 = vmatprep.subr.mxu0 0.0
  %63 = vmatpush1.msra.mxu0 0.0
  %64 = vmatprep.subr.mxu0 0.0
  %65 = vmatpush1.msra.mxu0 0.0
  %66 = vmatprep.subr.mxu0 0.0
  %67 = vmatpush1.msra.mxu0 0.0
  %68 = vmatprep.subr.mxu0 0.0
  %69 = vmatpush1.msra.mxu0 0.0
  %70 = vmatprep.subr.mxu0 0.0
  %71 = vmatpush1.msra.mxu0 0.0
  %72 = vmatprep.subr.mxu0 0.0
  %73 = vmatpush1.msra.mxu0 %v27
  %74 = vmatprep.subr.mxu0 0.0
  %75 = vmatpush1.msra.mxu0 %v26
  %76 = vmatprep.subr.mxu0 0.0
  %77 = vmatpush1.msra.mxu0 %v25
  %78 = vmatprep.subr.mxu0 0.0
  %79 = vmatpush1.msra.mxu0 %v24
  %80 = vmatprep.subr.mxu0 0.0
  %81 = vmatpush2.msra.mxu0 0.0
  %82 = vmatprep.subr.mxu0 0.0
  %83 = vmatpush2.msra.mxu0 0.0
  %84 = vmatprep.subr.mxu0 0.0
  %85 = vmatpush2.msra.mxu0 0.0
  %86 = vmatprep.subr.mxu0 0.0
  %87 = vmatpush2.msra.mxu0 0.0
  %88 = vmatprep.subr.mxu0 0.0
  %89 = vmatpush2.msra.mxu0 0.0
  %90 = vmatprep.subr.mxu0 0.0
  %91 = vmatpush2.msra.mxu0 0.0
  %92 = vmatprep.subr.mxu0 0.0
  %93 = vmatpush2.msra.mxu0 0.0
  %94 = vmatprep.subr.mxu0 0.0
  %95 = vmatpush2.msra.mxu0 0.0
  %96 = vmatprep.subr.mxu0 0.0
  %97 = vmatpush2.msra.mxu0 0.0
  %98 = vmatprep.subr.mxu0 0.0
  %99 = vmatpush2.msra.mxu0 0.0
  %100 = vmatprep.subr.mxu0 0.0
  %101 = vmatpush2.msra.mxu0 0.0
  %102 = vmatprep.subr.mxu0 0.0
  %103 = vmatpush2.msra.mxu0 0.0
  %104 = vmatprep.subr.mxu0 0.0
  %105 = vmatpush2.msra.mxu0 0.0
  %106 = vmatprep.subr.mxu0 0.0
  %107 = vmatpush2.msra.mxu0 0.0
  %108 = vmatprep.subr.mxu0 0.0
  %109 = vmatpush2.msra.mxu0 0.0
  %110 = vmatprep.subr.mxu0 0.0
  %111 = vmatpush2.msra.mxu0 0.0
  %112 = vmatprep.mubr.f32.mxu0 0.0
  %113 = vmatmul.mubr.f32.gmra.mxu0 %v37
  %v114 = vpop.f32.mrf.mxu0
  %v115 = vadd.f32 %v33, %v114
  %v116 = vpop.f32.mrf.mxu0
  %117 = vmatprep.mubr.f32.mxu0 0.0
  %118 = vmatmul.mubr.f32.gmra.mxu0 %v40
  %v119 = vpop.f32.mrf.mxu0
  %v120 = vadd.f32 %v33, %v119
  %v121 = vpop.f32.mrf.mxu0
  %122 = vmatprep.mubr.f32.mxu0 0.0
  %123 = vmatmul.mubr.f32.gmra.mxu0 %v43
  %v124 = vpop.f32.mrf.mxu0
  %v125 = vadd.f32 %v33, %v124
  %v126 = vpop.f32.mrf.mxu0
  %127 = vmatprep.mubr.f32.mxu0 0.0
  %128 = vmatmul.mubr.f32.gmra.mxu0 %v46
  %v129 = vpop.f32.mrf.mxu0
  %v130 = vadd.f32 %v33, %v129
  %v131 = vpop.f32.mrf.mxu0
  %132 = vdwg.mxu0
  %v133 = vld [vmem:[%s3] sm:$0x1]
  %v134 = vld [vmem:[%s4] sm:$0x1]
  %v135 = vsel %vm35, %v115, 0.0
  %136 = vadd.xlane.f32.xlu0 %v135
  %v137 = vpop.xlane.xlu0 %136
  %v138 = vsel %vm35, %v120, 0.0
  %139 = vadd.xlane.f32.xlu0 %v138
  %v140 = vpop.xlane.xlu0 %139
  %v141 = vsel %vm35, %v125, 0.0
  %142 = vadd.xlane.f32.xlu0 %v141
  %v143 = vpop.xlane.xlu0 %142
  %v144 = vsel %vm35, %v130, 0.0
  %145 = vadd.xlane.f32.xlu0 %v144
  %v146 = vpop.xlane.xlu0 %145
  %v147 = vrcp.pop 32.0
  %v148 = vmul.f32 %v137, %v147
  %v149 = vmul.f32 %v140, %v147
  %v150 = vmul.f32 %v143, %v147
  %v151 = vmul.f32 %v146, %v147
  %v152 = vsub.f32 %v115, %v148
  %v153 = vsub.f32 %v120, %v149
  %v154 = vsub.f32 %v125, %v150
  %v155 = vsub.f32 %v130, %v151
  %v156 = vmul.f32 %v152, %v152
  %v157 = vmul.f32 %v153, %v153
  %v158 = vmul.f32 %v154, %v154
  %v159 = vmul.f32 %v155, %v155
  %v160 = vsel %vm35, %v156, 0.0
  %161 = vadd.xlane.f32.xlu0 %v160
  %v162 = vpop.xlane.xlu0 %161
  %v163 = vsel %vm35, %v157, 0.0
  %164 = vadd.xlane.f32.xlu0 %v163
  %v165 = vpop.xlane.xlu0 %164
  %v166 = vsel %vm35, %v158, 0.0
  %167 = vadd.xlane.f32.xlu0 %v166
  %v168 = vpop.xlane.xlu0 %167
  %v169 = vsel %vm35, %v159, 0.0
  %170 = vadd.xlane.f32.xlu0 %v169
  %v171 = vpop.xlane.xlu0 %170
  %v172 = vmul.f32 %v162, %v147
  %v173 = vmul.f32 %v165, %v147
  %v174 = vmul.f32 %v168, %v147
  %v175 = vmul.f32 %v171, %v147
  %v176 = vadd.f32 %v172, 1e-05
  %v177 = vadd.f32 %v173, 1e-05
  %v178 = vadd.f32 %v174, 1e-05
  %v179 = vadd.f32 %v175, 1e-05
  %v180 = vrsqrt.pop %v176
  %v181 = vrsqrt.pop %v177
  %v182 = vrsqrt.pop %v178
  %v183 = vrsqrt.pop %v179
  %v184 = vmul.f32 %v152, %v180
  %v185 = vmul.f32 %v153, %v181
  %v186 = vmul.f32 %v154, %v182
  %v187 = vmul.f32 %v155, %v183
  %v189 = vlaneseq
  %v190 = vshrl.u32 %v189, 7
  %v191 = vsub.s32 0, %v190
  %v192 = vrot.slane %v133, %v191
  %v194 = vmul.f32 %v184, %v192
  %v195 = vmul.f32 %v185, %v192
  %v196 = vmul.f32 %v186, %v192
  %v197 = vmul.f32 %v187, %v192
  %v199 = vlaneseq
  %v200 = vshrl.u32 %v199, 7
  %v201 = vsub.s32 0, %v200
  %v202 = vrot.slane %v134, %v201
  %v204 = vadd.f32 %v194, %v202
  %v205 = vadd.f32 %v195, %v202
  %v206 = vadd.f32 %v196, %v202
  %v207 = vadd.f32 %v197, %v202
  %v208 = vmul.f32 %v204, 0.5
  %v209 = vmul.f32 %v205, 0.5
  %v210 = vmul.f32 %v206, 0.5
  %v211 = vmul.f32 %v207, 0.5
  %v212 = vmul.f32 %v204, 0.044715
  %v213 = vmul.f32 %v205, 0.044715
  %v214 = vmul.f32 %v206, 0.044715
  %v215 = vmul.f32 %v207, 0.044715
  %v216 = vmul.f32 %v212, %v204
  %v217 = vmul.f32 %v213, %v205
  %v218 = vmul.f32 %v214, %v206
  %v219 = vmul.f32 %v215, %v207
  %v220 = vmul.f32 %v216, %v204
  %v221 = vmul.f32 %v217, %v205
  %v222 = vmul.f32 %v218, %v206
  %v223 = vmul.f32 %v219, %v207
  %v224 = vadd.f32 %v204, %v220
  %v225 = vadd.f32 %v205, %v221
  %v226 = vadd.f32 %v206, %v222
  %v227 = vadd.f32 %v207, %v223
  %v228 = vmul.f32 %v224, 0.7978846
  %v229 = vmul.f32 %v225, 0.7978846
  %v230 = vmul.f32 %v226, 0.7978846
  %v231 = vmul.f32 %v227, 0.7978846
  %v232 = vtanh.pop %v228
  %v233 = vtanh.pop %v229
  %v234 = vtanh.pop %v230
  %v235 = vtanh.pop %v231
  %v236 = vadd.f32 %v232, 1.0
  %v237 = vadd.f32 %v233, 1.0
  %v238 = vadd.f32 %v234, 1.0
  %v239 = vadd.f32 %v235, 1.0
  %v240 = vmul.f32 %v208, %v236
  %v241 = vmul.f32 %v209, %v237
  %v242 = vmul.f32 %v210, %v238
  %v243 = vmul.f32 %v211, %v239
  %244 = vst.msk [vmem:[%s5] sm:$0xff] %vm35, %v240
  %245 = vst.msk [vmem:[%s5 + $0x8] sm:$0xff] %vm35, %v241
  %246 = vst.msk [vmem:[%s5 + $0x10] sm:$0xff] %vm35, %v242
  %247 = vst.msk [vmem:[%s5 + $0x18] sm:$0xff] %vm35, %v243
  // Predicated region
  $region22: #{net_forward.17} parent=0 // pred_check
    _
  $region23: #{net_forward.17} parent=0 // pred_check_branch
    %249 = sbr.rel (0) target = $region25
  $region24: #{net_forward.17} parent=0 // pred_region
    _
  $region25: #{net_forward.17} parent=0 // pred_fallthru
    _
  // Predicated region
  $region26: #{net_forward.17} parent=0 // pred_check
    _
  $region27: #{net_forward.17} parent=0 // pred_check_branch
    %251 = sbr.rel (0) target = $region29
  $region28: #{net_forward.17} parent=0 // pred_region
    _
  $region29: #{net_forward.17} parent=0 // pred_fallthru
    _

// kernel: net_forward.18
$region0: #{net_forward.18}
  #allocation0 [shape = 'u32[]', space=smem, size = 0x4, offset = 0x4, fixed_abs, tag = 'smem constant byte address 0x4 - core index']
  #allocation1 [shape = 'u32[144,128]{1,0:T(1,128)}', space=vmem, size = 0x12000, scoped, tag = 'internal scratch']
  %s0 = inlined_call_operand.vmem [shape: f32[32,32], index: 0, kind: input, shape index: {}]
  %s1 = inlined_call_operand.vmem [shape: f32[32,32], index: 1, kind: input, shape index: {}]
  %s2 = inlined_call_operand.vmem [shape: f32[1,32], index: 2, kind: input, shape index: {}]
  %s3 = inlined_call_operand.vmem [shape: f32[1,32], index: 3, kind: input, shape index: {}]
  %s4 = inlined_call_operand.vmem [shape: f32[1,32], index: 4, kind: input, shape index: {}]
  %s5 = inlined_call_operand.vmem [shape: f32[32,32], index: 5, kind: output, shape index: {}]
  %s6 = sld [smem:[#allocation0]]
  $region30: #{net_forward.18} parent=0
    _
  %s8 = ssub.s32 1, %s6
  %s9 = scalar_select 0, %s8, %s6
  // Predicated region
  $region2: #{net_forward.18} parent=0 // pred_check
    _
  $region3: #{net_forward.18} parent=0 // pred_check_branch
    %11 = sbr.rel (0) target = $region5
  $region4: #{net_forward.18} parent=0 // pred_region
    _
  $region5: #{net_forward.18} parent=0 // pred_fallthru
    _
  // Predicated region
  $region6: #{net_forward.18} parent=0 // pred_check
    _
  $region7: #{net_forward.18} parent=0 // pred_check_branch
    %13 = sbr.rel (0) target = $region9
  $region8: #{net_forward.18} parent=0 // pred_region
    _
  $region9: #{net_forward.18} parent=0 // pred_fallthru
    _
  // Predicated region
  $region10: #{net_forward.18} parent=0 // pred_check
    _
  $region11: #{net_forward.18} parent=0 // pred_check_branch
    %15 = sbr.rel (0) target = $region13
  $region12: #{net_forward.18} parent=0 // pred_region
    _
  $region13: #{net_forward.18} parent=0 // pred_fallthru
    _
  // Predicated region
  $region14: #{net_forward.18} parent=0 // pred_check
    _
  $region15: #{net_forward.18} parent=0 // pred_check_branch
    %17 = sbr.rel (0) target = $region17
  $region16: #{net_forward.18} parent=0 // pred_region
    _
  $region17: #{net_forward.18} parent=0 // pred_fallthru
    _
  // Predicated region
  $region18: #{net_forward.18} parent=0 // pred_check
    _
  $region19: #{net_forward.18} parent=0 // pred_check_branch
    %19 = sbr.rel (0) target = $region21
  $region20: #{net_forward.18} parent=0 // pred_region
    _
  $region21: #{net_forward.18} parent=0 // pred_fallthru
    _
  %v20 = vld [vmem:[%s0] sm:$0xff]
  %v21 = vld [vmem:[%s0 + $0x8] sm:$0xff]
  %v22 = vld [vmem:[%s0 + $0x10] sm:$0xff]
  %v23 = vld [vmem:[%s0 + $0x18] sm:$0xff]
  %v24 = vld [vmem:[%s1] sm:$0xff]
  %v25 = vld [vmem:[%s1 + $0x8] sm:$0xff]
  %v26 = vld [vmem:[%s1 + $0x10] sm:$0xff]
  %v27 = vld [vmem:[%s1 + $0x18] sm:$0xff]
  %v28 = vld [vmem:[%s2] sm:$0x1]
  %v30 = vlaneseq
  %v31 = vshrl.u32 %v30, 7
  %v32 = vsub.s32 0, %v31
  %v33 = vrot.slane %v28, %v32
  %vm35 = vcmask 261120
  %v37 = vsel %vm35, %v20, 0
  %v40 = vsel %vm35, %v21, 0
  %v43 = vsel %vm35, %v22, 0
  %v46 = vsel %vm35, %v23, 0
  %48 = vmatprep.subr.mxu0 0.0
  %49 = vmatpush1.msra.mxu0 0.0
  %50 = vmatprep.subr.mxu0 0.0
  %51 = vmatpush1.msra.mxu0 0.0
  %52 = vmatprep.subr.mxu0 0.0
  %53 = vmatpush1.msra.mxu0 0.0
  %54 = vmatprep.subr.mxu0 0.0
  %55 = vmatpush1.msra.mxu0 0.0
  %56 = vmatprep.subr.mxu0 0.0
  %57 = vmatpush1.msra.mxu0 0.0
  %58 = vmatprep.subr.mxu0 0.0
  %59 = vmatpush1.msra.mxu0 0.0
  %60 = vmatprep.subr.mxu0 0.0
  %61 = vmatpush1.msra.mxu0 0.0
  %62 = vmatprep.subr.mxu0 0.0
  %63 = vmatpush1.msra.mxu0 0.0
  %64 = vmatprep.subr.mxu0 0.0
  %65 = vmatpush1.msra.mxu0 0.0
  %66 = vmatprep.subr.mxu0 0.0
  %67 = vmatpush1.msra.mxu0 0.0
  %68 = vmatprep.subr.mxu0 0.0
  %69 = vmatpush1.msra.mxu0 0.0
  %70 = vmatprep.subr.mxu0 0.0
  %71 = vmatpush1.msra.mxu0 0.0
  %72 = vmatprep.subr.mxu0 0.0
  %73 = vmatpush1.msra.mxu0 %v27
  %74 = vmatprep.subr.mxu0 0.0
  %75 = vmatpush1.msra.mxu0 %v26
  %76 = vmatprep.subr.mxu0 0.0
  %77 = vmatpush1.msra.mxu0 %v25
  %78 = vmatprep.subr.mxu0 0.0
  %79 = vmatpush1.msra.mxu0 %v24
  %80 = vmatprep.subr.mxu0 0.0
  %81 = vmatpush2.msra.mxu0 0.0
  %82 = vmatprep.subr.mxu0 0.0
  %83 = vmatpush2.msra.mxu0 0.0
  %84 = vmatprep.subr.mxu0 0.0
  %85 = vmatpush2.msra.mxu0 0.0
  %86 = vmatprep.subr.mxu0 0.0
  %87 = vmatpush2.msra.mxu0 0.0
  %88 = vmatprep.subr.mxu0 0.0
  %89 = vmatpush2.msra.mxu0 0.0
  %90 = vmatprep.subr.mxu0 0.0
  %91 = vmatpush2.msra.mxu0 0.0
  %92 = vmatprep.subr.mxu0 0.0
  %93 = vmatpush2.msra.mxu0 0.0
  %94 = vmatprep.subr.mxu0 0.0
  %95 = vmatpush2.msra.mxu0 0.0
  %96 = vmatprep.subr.mxu0 0.0
  %97 = vmatpush2.msra.mxu0 0.0
  %98 = vmatprep.subr.mxu0 0.0
  %99 = vmatpush2.msra.mxu0 0.0
  %100 = vmatprep.subr.mxu0 0.0
  %101 = vmatpush2.msra.mxu0 0.0
  %102 = vmatprep.subr.mxu0 0.0
  %103 = vmatpush2.msra.mxu0 0.0
  %104 = vmatprep.subr.mxu0 0.0
  %105 = vmatpush2.msra.mxu0 0.0
  %106 = vmatprep.subr.mxu0 0.0
  %107 = vmatpush2.msra.mxu0 0.0
  %108 = vmatprep.subr.mxu0 0.0
  %109 = vmatpush2.msra.mxu0 0.0
  %110 = vmatprep.subr.mxu0 0.0
  %111 = vmatpush2.msra.mxu0 0.0
  %112 = vmatprep.mubr.f32.mxu0 0.0
  %113 = vmatmul.mubr.f32.gmra.mxu0 %v37
  %v114 = vpop.f32.mrf.mxu0
  %v115 = vadd.f32 %v33, %v114
  %v116 = vpop.f32.mrf.mxu0
  %117 = vmatprep.mubr.f32.mxu0 0.0
  %118 = vmatmul.mubr.f32.gmra.mxu0 %v40
  %v119 = vpop.f32.mrf.mxu0
  %v120 = vadd.f32 %v33, %v119
  %v121 = vpop.f32.mrf.mxu0
  %122 = vmatprep.mubr.f32.mxu0 0.0
  %123 = vmatmul.mubr.f32.gmra.mxu0 %v43
  %v124 = vpop.f32.mrf.mxu0
  %v125 = vadd.f32 %v33, %v124
  %v126 = vpop.f32.mrf.mxu0
  %127 = vmatprep.mubr.f32.mxu0 0.0
  %128 = vmatmul.mubr.f32.gmra.mxu0 %v46
  %v129 = vpop.f32.mrf.mxu0
  %v130 = vadd.f32 %v33, %v129
  %v131 = vpop.f32.mrf.mxu0
  %132 = vdwg.mxu0
  %v133 = vld [vmem:[%s3] sm:$0x1]
  %v134 = vld [vmem:[%s4] sm:$0x1]
  %v135 = vsel %vm35, %v115, 0.0
  %136 = vadd.xlane.f32.xlu0 %v135
  %v137 = vpop.xlane.xlu0 %136
  %v138 = vsel %vm35, %v120, 0.0
  %139 = vadd.xlane.f32.xlu0 %v138
  %v140 = vpop.xlane.xlu0 %139
  %v141 = vsel %vm35, %v125, 0.0
  %142 = vadd.xlane.f32.xlu0 %v141
  %v143 = vpop.xlane.xlu0 %142
  %v144 = vsel %vm35, %v130, 0.0
  %145 = vadd.xlane.f32.xlu0 %v144
  %v146 = vpop.xlane.xlu0 %145
  %v147 = vrcp.pop 32.0
  %v148 = vmul.f32 %v137, %v147
  %v149 = vmul.f32 %v140, %v147
  %v150 = vmul.f32 %v143, %v147
  %v151 = vmul.f32 %v146, %v147
  %v152 = vsub.f32 %v115, %v148
  %v153 = vsub.f32 %v120, %v149
  %v154 = vsub.f32 %v125, %v150
  %v155 = vsub.f32 %v130, %v151
  %v156 = vmul.f32 %v152, %v152
  %v157 = vmul.f32 %v153, %v153
  %v158 = vmul.f32 %v154, %v154
  %v159 = vmul.f32 %v155, %v155
  %v160 = vsel %vm35, %v156, 0.0
  %161 = vadd.xlane.f32.xlu0 %v160
  %v162 = vpop.xlane.xlu0 %161
  %v163 = vsel %vm35, %v157, 0.0
  %164 = vadd.xlane.f32.xlu0 %v163
  %v165 = vpop.xlane.xlu0 %164
  %v166 = vsel %vm35, %v158, 0.0
  %167 = vadd.xlane.f32.xlu0 %v166
  %v168 = vpop.xlane.xlu0 %167
  %v169 = vsel %vm35, %v159, 0.0
  %170 = vadd.xlane.f32.xlu0 %v169
  %v171 = vpop.xlane.xlu0 %170
  %v172 = vmul.f32 %v162, %v147
  %v173 = vmul.f32 %v165, %v147
  %v174 = vmul.f32 %v168, %v147
  %v175 = vmul.f32 %v171, %v147
  %v176 = vadd.f32 %v172, 1e-05
  %v177 = vadd.f32 %v173, 1e-05
  %v178 = vadd.f32 %v174, 1e-05
  %v179 = vadd.f32 %v175, 1e-05
  %v180 = vrsqrt.pop %v176
  %v181 = vrsqrt.pop %v177
  %v182 = vrsqrt.pop %v178
  %v183 = vrsqrt.pop %v179
  %v184 = vmul.f32 %v152, %v180
  %v185 = vmul.f32 %v153, %v181
  %v186 = vmul.f32 %v154, %v182
  %v187 = vmul.f32 %v155, %v183
  %v189 = vlaneseq
  %v190 = vshrl.u32 %v189, 7
  %v191 = vsub.s32 0, %v190
  %v192 = vrot.slane %v133, %v191
  %v194 = vmul.f32 %v184, %v192
  %v195 = vmul.f32 %v185, %v192
  %v196 = vmul.f32 %v186, %v192
  %v197 = vmul.f32 %v187, %v192
  %v199 = vlaneseq
  %v200 = vshrl.u32 %v199, 7
  %v201 = vsub.s32 0, %v200
  %v202 = vrot.slane %v134, %v201
  %v204 = vadd.f32 %v194, %v202
  %v205 = vadd.f32 %v195, %v202
  %v206 = vadd.f32 %v196, %v202
  %v207 = vadd.f32 %v197, %v202
  %208 = vst.msk [vmem:[%s5] sm:$0xff] %vm35, %v204
  %209 = vst.msk [vmem:[%s5 + $0x8] sm:$0xff] %vm35, %v205
  %210 = vst.msk [vmem:[%s5 + $0x10] sm:$0xff] %vm35, %v206
  %211 = vst.msk [vmem:[%s5 + $0x18] sm:$0xff] %vm35, %v207
  // Predicated region
  $region22: #{net_forward.18} parent=0 // pred_check
    _
  $region23: #{net_forward.18} parent=0 // pred_check_branch
    %213 = sbr.rel (0) target = $region25
  $region24: #{net_forward.18} parent=0 // pred_region
    _
  $region25: #{net_forward.18} parent=0 // pred_fallthru
    _
  // Predicated region
  $region26: #{net_forward.18} parent=0 // pred_check
    _
  $region27: #{net_forward.18} parent=0 // pred_check_branch
    %215 = sbr.rel (0) target = $region29
  $region28: #{net_forward.18} parent=0 // pred_region
    _
  $region29: #{net_forward.18} parent=0 // pred_fallthru
    _

// kernel: net_forward.20
$region0: #{net_forward.20}
  #allocation0 [shape = 'u32[]', space=smem, size = 0x4, offset = 0x4, fixed_abs, tag = 'smem constant byte address 0x4 - core index']
  #allocation1 [shape = 'u32[144,128]{1,0:T(1,128)}', space=vmem, size = 0x12000, scoped, tag = 'internal scratch']
  %s0 = inlined_call_operand.vmem [shape: f32[32,32], index: 0, kind: input, shape index: {}]
  %s1 = inlined_call_operand.vmem [shape: f32[32,32], index: 1, kind: input, shape index: {}]
  %s2 = inlined_call_operand.vmem [shape: f32[1,32], index: 2, kind: input, shape index: {}]
  %s3 = inlined_call_operand.vmem [shape: f32[1,32], index: 3, kind: input, shape index: {}]
  %s4 = inlined_call_operand.vmem [shape: f32[32,64], index: 4, kind: input, shape index: {}]
  %s5 = inlined_call_operand.vmem [shape: f32[1,64], index: 5, kind: input, shape index: {}]
  %s6 = inlined_call_operand.vmem [shape: f32[64,32], index: 6, kind: input, shape index: {}]
  %s7 = inlined_call_operand.vmem [shape: f32[1,32], index: 7, kind: input, shape index: {}]
  %s8 = inlined_call_operand.vmem [shape: f32[1,32], index: 8, kind: input, shape index: {}]
  %s9 = inlined_call_operand.vmem [shape: f32[1,32], index: 9, kind: input, shape index: {}]
  %s10 = inlined_call_operand.vmem [shape: f32[32,32], index: 10, kind: output, shape index: {}]
  %s11 = sld [smem:[#allocation0]]
  $region50: #{net_forward.20} parent=0
    _
  %s13 = ssub.s32 1, %s11
  %s14 = scalar_select 0, %s13, %s11
  // Predicated region
  $region2: #{net_forward.20} parent=0 // pred_check
    _
  $region3: #{net_forward.20} parent=0 // pred_check_branch
    %16 = sbr.rel (0) target = $region5
  $region4: #{net_forward.20} parent=0 // pred_region
    _
  $region5: #{net_forward.20} parent=0 // pred_fallthru
    _
  // Predicated region
  $region6: #{net_forward.20} parent=0 // pred_check
    _
  $region7: #{net_forward.20} parent=0 // pred_check_branch
    %18 = sbr.rel (0) target = $region9
  $region8: #{net_forward.20} parent=0 // pred_region
    _
  $region9: #{net_forward.20} parent=0 // pred_fallthru
    _
  // Predicated region
  $region10: #{net_forward.20} parent=0 // pred_check
    _
  $region11: #{net_forward.20} parent=0 // pred_check_branch
    %20 = sbr.rel (0) target = $region13
  $region12: #{net_forward.20} parent=0 // pred_region
    _
  $region13: #{net_forward.20} parent=0 // pred_fallthru
    _
  // Predicated region
  $region14: #{net_forward.20} parent=0 // pred_check
    _
  $region15: #{net_forward.20} parent=0 // pred_check_branch
    %22 = sbr.rel (0) target = $region17
  $region16: #{net_forward.20} parent=0 // pred_region
    _
  $region17: #{net_forward.20} parent=0 // pred_fallthru
    _
  // Predicated region
  $region18: #{net_forward.20} parent=0 // pred_check
    _
  $region19: #{net_forward.20} parent=0 // pred_check_branch
    %24 = sbr.rel (0) target = $region21
  $region20: #{net_forward.20} parent=0 // pred_region
    _
  $region21: #{net_forward.20} parent=0 // pred_fallthru
    _
  // Predicated region
  $region22: #{net_forward.20} parent=0 // pred_check
    _
  $region23: #{net_forward.20} parent=0 // pred_check_branch
    %26 = sbr.rel (0) target = $region25
  $region24: #{net_forward.20} parent=0 // pred_region
    _
  $region25: #{net_forward.20} parent=0 // pred_fallthru
    _
  // Predicated region
  $region26: #{net_forward.20} parent=0 // pred_check
    _
  $region27: #{net_forward.20} parent=0 // pred_check_branch
    %28 = sbr.rel (0) target = $region29
  $region28: #{net_forward.20} parent=0 // pred_region
    _
  $region29: #{net_forward.20} parent=0 // pred_fallthru
    _
  // Predicated region
  $region30: #{net_forward.20} parent=0 // pred_check
    _
  $region31: #{net_forward.20} parent=0 // pred_check_branch
    %30 = sbr.rel (0) target = $region33
  $region32: #{net_forward.20} parent=0 // pred_region
    _
  $region33: #{net_forward.20} parent=0 // pred_fallthru
    _
  // Predicated region
  $region34: #{net_forward.20} parent=0 // pred_check
    _
  $region35: #{net_forward.20} parent=0 // pred_check_branch
    %32 = sbr.rel (0) target = $region37
  $region36: #{net_forward.20} parent=0 // pred_region
    _
  $region37: #{net_forward.20} parent=0 // pred_fallthru
    _
  // Predicated region
  $region38: #{net_forward.20} parent=0 // pred_check
    _
  $region39: #{net_forward.20} parent=0 // pred_check_branch
    %34 = sbr.rel (0) target = $region41
  $region40: #{net_forward.20} parent=0 // pred_region
    _
  $region41: #{net_forward.20} parent=0 // pred_fallthru
    _
  %v35 = vld [vmem:[%s0] sm:$0xff]
  %v36 = vld [vmem:[%s0 + $0x8] sm:$0xff]
  %v37 = vld [vmem:[%s0 + $0x10] sm:$0xff]
  %v38 = vld [vmem:[%s0 + $0x18] sm:$0xff]
  %v39 = vld [vmem:[%s1] sm:$0xff]
  %v40 = vld [vmem:[%s1 + $0x8] sm:$0xff]
  %v41 = vld [vmem:[%s1 + $0x10] sm:$0xff]
  %v42 = vld [vmem:[%s1 + $0x18] sm:$0xff]
  %v43 = vadd.f32 %v35, %v39
  %v44 = vadd.f32 %v36, %v40
  %v45 = vadd.f32 %v37, %v41
  %v46 = vadd.f32 %v38, %v42
  %v47 = vld [vmem:[%s2] sm:$0x1]
  %v48 = vld [vmem:[%s3] sm:$0x1]
  %vm49 = vcmask 261120
  %v50 = vsel %vm49, %v43, 0.0
  %51 = vadd.xlane.f32.xlu0 %v50
  %v52 = vpop.xlane.xlu0 %51
  %v53 = vsel %vm49, %v44, 0.0
  %54 = vadd.xlane.f32.xlu0 %v53
  %v55 = vpop.xlane.xlu0 %54
  %v56 = vsel %vm49, %v45, 0.0
  %57 = vadd.xlane.f32.xlu0 %v56
  %v58 = vpop.xlane.xlu0 %57
  %v59 = vsel %vm49, %v46, 0.0
  %60 = vadd.xlane.f32.xlu0 %v59
  %v61 = vpop.xlane.xlu0 %60
  %v62 = vrcp.pop 32.0
  %v63 = vmul.f32 %v52, %v62
  %v64 = vmul.f32 %v55, %v62
  %v65 = vmul.f32 %v58, %v62
  %v66 = vmul.f32 %v61, %v62
  %v67 = vsub.f32 %v43, %v63
  %v68 = vsub.f32 %v44, %v64
  %v69 = vsub.f32 %v45, %v65
  %v70 = vsub.f32 %v46, %v66
  %v71 = vmul.f32 %v67, %v67
  %v72 = vmul.f32 %v68, %v68
  %v73 = vmul.f32 %v69, %v69
  %v74 = vmul.f32 %v70, %v70
  %v75 = vsel %vm49, %v71, 0.0
  %76 = vadd.xlane.f32.xlu0 %v75
  %v77 = vpop.xlane.xlu0 %76
  %v78 = vsel %vm49, %v72, 0.0
  %79 = vadd.xlane.f32.xlu0 %v78
  %v80 = vpop.xlane.xlu0 %79
  %v81 = vsel %vm49, %v73, 0.0
  %82 = vadd.xlane.f32.xlu0 %v81
  %v83 = vpop.xlane.xlu0 %82
  %v84 = vsel %vm49, %v74, 0.0
  %85 = vadd.xlane.f32.xlu0 %v84
  %v86 = vpop.xlane.xlu0 %85
  %v87 = vmul.f32 %v77, %v62
  %v88 = vmul.f32 %v80, %v62
  %v89 = vmul.f32 %v83, %v62
  %v90 = vmul.f32 %v86, %v62
  %v91 = vadd.f32 %v87, 1e-05
  %v92 = vadd.f32 %v88, 1e-05
  %v93 = vadd.f32 %v89, 1e-05
  %v94 = vadd.f32 %v90, 1e-05
  %v95 = vrsqrt.pop %v91
  %v96 = vrsqrt.pop %v92
  %v97 = vrsqrt.pop %v93
  %v98 = vrsqrt.pop %v94
  %v99 = vmul.f32 %v67, %v95
  %v100 = vmul.f32 %v68, %v96
  %v101 = vmul.f32 %v69, %v97
  %v102 = vmul.f32 %v70, %v98
  %v104 = vlaneseq
  %v105 = vshrl.u32 %v104, 7
  %v106 = vsub.s32 0, %v105
  %v107 = vrot.slane %v47, %v106
  %v109 = vmul.f32 %v99, %v107
  %v110 = vmul.f32 %v100, %v107
  %v111 = vmul.f32 %v101, %v107
  %v112 = vmul.f32 %v102, %v107
  %v114 = vlaneseq
  %v115 = vshrl.u32 %v114, 7
  %v116 = vsub.s32 0, %v115
  %v117 = vrot.slane %v48, %v116
  %v119 = vadd.f32 %v109, %v117
  %v120 = vadd.f32 %v110, %v117
  %v121 = vadd.f32 %v111, %v117
  %v122 = vadd.f32 %v112, %v117
  %v123 = vld [vmem:[%s4] sm:$0xff]
  %v124 = vld [vmem:[%s4 + $0x8] sm:$0xff]
  %v125 = vld [vmem:[%s4 + $0x10] sm:$0xff]
  %v126 = vld [vmem:[%s4 + $0x18] sm:$0xff]
  %v127 = vld [vmem:[%s5] sm:$0x1]
  %v129 = vlaneseq
  %v130 = vshrl.u32 %v129, 7
  %v131 = vsub.s32 0, %v130
  %v132 = vrot.slane %v127, %v131
  %v135 = vsel %vm49, %v119, 0
  %v138 = vsel %vm49, %v120, 0
  %v141 = vsel %vm49, %v121, 0
  %v144 = vsel %vm49, %v122, 0
  %146 = vmatprep.subr.mxu0 0.0
  %147 = vmatpush1.msra.mxu0 0.0
  %148 = vmatprep.subr.mxu0 0.0
  %149 = vmatpush1.msra.mxu0 0.0
  %150 = vmatprep.subr.mxu0 0.0
  %151 = vmatpush1.msra.mxu0 0.0
  %152 = vmatprep.subr.mxu0 0.0
  %153 = vmatpush1.msra.mxu0 0.0
  %154 = vmatprep.subr.mxu0 0.0
  %155 = vmatpush1.msra.mxu0 0.0
  %156 = vmatprep.subr.mxu0 0.0
  %157 = vmatpush1.msra.mxu0 0.0
  %158 = vmatprep.subr.mxu0 0.0
  %159 = vmatpush1.msra.mxu0 0.0
  %160 = vmatprep.subr.mxu0 0.0
  %161 = vmatpush1.msra.mxu0 0.0
  %162 = vmatprep.subr.mxu0 0.0
  %163 = vmatpush1.msra.mxu0 0.0
  %164 = vmatprep.subr.mxu0 0.0
  %165 = vmatpush1.msra.mxu0 0.0
  %166 = vmatprep.subr.mxu0 0.0
  %167 = vmatpush1.msra.mxu0 0.0
  %168 = vmatprep.subr.mxu0 0.0
  %169 = vmatpush1.msra.mxu0 0.0
  %170 = vmatprep.subr.mxu0 0.0
  %171 = vmatpush1.msra.mxu0 %v126
  %172 = vmatprep.subr.mxu0 0.0
  %173 = vmatpush1.msra.mxu0 %v125
  %174 = vmatprep.subr.mxu0 0.0
  %175 = vmatpush1.msra.mxu0 %v124
  %176 = vmatprep.subr.mxu0 0.0
  %177 = vmatpush1.msra.mxu0 %v123
  %178 = vmatprep.subr.mxu0 0.0
  %179 = vmatpush2.msra.mxu0 0.0
  %180 = vmatprep.subr.mxu0 0.0
  %181 = vmatpush2.msra.mxu0 0.0
  %182 = vmatprep.subr.mxu0 0.0
  %183 = vmatpush2.msra.mxu0 0.0
  %184 = vmatprep.subr.mxu0 0.0
  %185 = vmatpush2.msra.mxu0 0.0
  %186 = vmatprep.subr.mxu0 0.0
  %187 = vmatpush2.msra.mxu0 0.0
  %188 = vmatprep.subr.mxu0 0.0
  %189 = vmatpush2.msra.mxu0 0.0
  %190 = vmatprep.subr.mxu0 0.0
  %191 = vmatpush2.msra.mxu0 0.0
  %192 = vmatprep.subr.mxu0 0.0
  %193 = vmatpush2.msra.mxu0 0.0
  %194 = vmatprep.subr.mxu0 0.0
  %195 = vmatpush2.msra.mxu0 0.0
  %196 = vmatprep.subr.mxu0 0.0
  %197 = vmatpush2.msra.mxu0 0.0
  %198 = vmatprep.subr.mxu0 0.0
  %199 = vmatpush2.msra.mxu0 0.0
  %200 = vmatprep.subr.mxu0 0.0
  %201 = vmatpush2.msra.mxu0 0.0
  %202 = vmatprep.subr.mxu0 0.0
  %203 = vmatpush2.msra.mxu0 0.0
  %204 = vmatprep.subr.mxu0 0.0
  %205 = vmatpush2.msra.mxu0 0.0
  %206 = vmatprep.subr.mxu0 0.0
  %207 = vmatpush2.msra.mxu0 0.0
  %208 = vmatprep.subr.mxu0 0.0
  %209 = vmatpush2.msra.mxu0 0.0
  %210 = vmatprep.mubr.f32.mxu0 0.0
  %211 = vmatmul.mubr.f32.gmra.mxu0 %v135
  %v212 = vpop.f32.mrf.mxu0
  %v213 = vadd.f32 %v132, %v212
  %v214 = vpop.f32.mrf.mxu0
  %215 = vmatprep.mubr.f32.mxu0 0.0
  %216 = vmatmul.mubr.f32.gmra.mxu0 %v138
  %v217 = vpop.f32.mrf.mxu0
  %v218 = vadd.f32 %v132, %v217
  %v219 = vpop.f32.mrf.mxu0
  %220 = vmatprep.mubr.f32.mxu0 0.0
  %221 = vmatmul.mubr.f32.gmra.mxu0 %v141
  %v222 = vpop.f32.mrf.mxu0
  %v223 = vadd.f32 %v132, %v222
  %v224 = vpop.f32.mrf.mxu0
  %225 = vmatprep.mubr.f32.mxu0 0.0
  %226 = vmatmul.mubr.f32.gmra.mxu0 %v144
  %v227 = vpop.f32.mrf.mxu0
  %v228 = vadd.f32 %v132, %v227
  %v229 = vpop.f32.mrf.mxu0
  %230 = vdwg.mxu0
  %v231 = vmul.f32 %v213, 0.5
  %v232 = vmul.f32 %v218, 0.5
  %v233 = vmul.f32 %v223, 0.5
  %v234 = vmul.f32 %v228, 0.5
  %v235 = vmul.f32 %v213, 0.044715
  %v236 = vmul.f32 %v218, 0.044715
  %v237 = vmul.f32 %v223, 0.044715
  %v238 = vmul.f32 %v228, 0.044715
  %v239 = vmul.f32 %v235, %v213
  %v240 = vmul.f32 %v236, %v218
  %v241 = vmul.f32 %v237, %v223
  %v242 = vmul.f32 %v238, %v228
  %v243 = vmul.f32 %v239, %v213
  %v244 = vmul.f32 %v240, %v218
  %v245 = vmul.f32 %v241, %v223
  %v246 = vmul.f32 %v242, %v228
  %v247 = vadd.f32 %v213, %v243
  %v248 = vadd.f32 %v218, %v244
  %v249 = vadd.f32 %v223, %v245
  %v250 = vadd.f32 %v228, %v246
  %v251 = vmul.f32 %v247, 0.7978846
  %v252 = vmul.f32 %v248, 0.7978846
  %v253 = vmul.f32 %v249, 0.7978846
  %v254 = vmul.f32 %v250, 0.7978846
  %v255 = vtanh.pop %v251
  %v256 = vtanh.pop %v252
  %v257 = vtanh.pop %v253
  %v258 = vtanh.pop %v254
  %v259 = vadd.f32 %v255, 1.0
  %v260 = vadd.f32 %v256, 1.0
  %v261 = vadd.f32 %v257, 1.0
  %v262 = vadd.f32 %v258, 1.0
  %v263 = vmul.f32 %v231, %v259
  %v264 = vmul.f32 %v232, %v260
  %v265 = vmul.f32 %v233, %v261
  %v266 = vmul.f32 %v234, %v262
  %v267 = vld [vmem:[%s6] sm:$0xff]
  %v268 = vld [vmem:[%s6 + $0x8] sm:$0xff]
  %v269 = vld [vmem:[%s6 + $0x10] sm:$0xff]
  %v270 = vld [vmem:[%s6 + $0x18] sm:$0xff]
  %v271 = vld [vmem:[%s6 + $0x20] sm:$0xff]
  %v272 = vld [vmem:[%s6 + $0x28] sm:$0xff]
  %v273 = vld [vmem:[%s6 + $0x30] sm:$0xff]
  %v274 = vld [vmem:[%s6 + $0x38] sm:$0xff]
  %v275 = vld [vmem:[%s7] sm:$0x1]
  %v277 = vlaneseq
  %v278 = vshrl.u32 %v277, 7
  %v279 = vsub.s32 0, %v278
  %v280 = vrot.slane %v275, %v279
  %vm282 = vcmask 523264
  %v284 = vsel %vm282, %v263, 0
  %v287 = vsel %vm282, %v264, 0
  %v290 = vsel %vm282, %v265, 0
  %v293 = vsel %vm282, %v266, 0
  %295 = vmatprep.subr.mxu0 0.0
  %296 = vmatpush1.msra.mxu0 0.0
  %297 = vmatprep.subr.mxu0 0.0
  %298 = vmatpush1.msra.mxu0 0.0
  %299 = vmatprep.subr.mxu0 0.0
  %300 = vmatpush1.msra.mxu0 0.0
  %301 = vmatprep.subr.mxu0 0.0
  %302 = vmatpush1.msra.mxu0 0.0
  %303 = vmatprep.subr.mxu0 0.0
  %304 = vmatpush1.msra.mxu0 0.0
  %305 = vmatprep.subr.mxu0 0.0
  %306 = vmatpush1.msra.mxu0 0.0
  %307 = vmatprep.subr.mxu0 0.0
  %308 = vmatpush1.msra.mxu0 0.0
  %309 = vmatprep.subr.mxu0 0.0
  %310 = vmatpush1.msra.mxu0 0.0
  %311 = vmatprep.subr.mxu0 0.0
  %312 = vmatpush1.msra.mxu0 %v274
  %313 = vmatprep.subr.mxu0 0.0
  %314 = vmatpush1.msra.mxu0 %v273
  %315 = vmatprep.subr.mxu0 0.0
  %316 = vmatpush1.msra.mxu0 %v272
  %317 = vmatprep.subr.mxu0 0.0
  %318 = vmatpush1.msra.mxu0 %v271
  %319 = vmatprep.subr.mxu0 0.0
  %320 = vmatpush1.msra.mxu0 %v270
  %321 = vmatprep.subr.mxu0 0.0
  %322 = vmatpush1.msra.mxu0 %v269
  %323 = vmatprep.subr.mxu0 0.0
  %324 = vmatpush1.msra.mxu0 %v268
  %325 = vmatprep.subr.mxu0 0.0
  %326 = vmatpush1.msra.mxu0 %v267
  %327 = vmatprep.subr.mxu0 0.0
  %328 = vmatpush2.msra.mxu0 0.0
  %329 = vmatprep.subr.mxu0 0.0
  %330 = vmatpush2.msra.mxu0 0.0
  %331 = vmatprep.subr.mxu0 0.0
  %332 = vmatpush2.msra.mxu0 0.0
  %333 = vmatprep.subr.mxu0 0.0
  %334 = vmatpush2.msra.mxu0 0.0
  %335 = vmatprep.subr.mxu0 0.0
  %336 = vmatpush2.msra.mxu0 0.0
  %337 = vmatprep.subr.mxu0 0.0
  %338 = vmatpush2.msra.mxu0 0.0
  %339 = vmatprep.subr.mxu0 0.0
  %340 = vmatpush2.msra.mxu0 0.0
  %341 = vmatprep.subr.mxu0 0.0
  %342 = vmatpush2.msra.mxu0 0.0
  %343 = vmatprep.subr.mxu0 0.0
  %344 = vmatpush2.msra.mxu0 0.0
  %345 = vmatprep.subr.mxu0 0.0
  %346 = vmatpush2.msra.mxu0 0.0
  %347 = vmatprep.subr.mxu0 0.0
  %348 = vmatpush2.msra.mxu0 0.0
  %349 = vmatprep.subr.mxu0 0.0
  %350 = vmatpush2.msra.mxu0 0.0
  %351 = vmatprep.subr.mxu0 0.0
  %352 = vmatpush2.msra.mxu0 0.0
  %353 = vmatprep.subr.mxu0 0.0
  %354 = vmatpush2.msra.mxu0 0.0
  %355 = vmatprep.subr.mxu0 0.0
  %356 = vmatpush2.msra.mxu0 0.0
  %357 = vmatprep.subr.mxu0 0.0
  %358 = vmatpush2.msra.mxu0 0.0
  %359 = vmatprep.mubr.f32.mxu0 0.0
  %360 = vmatmul.mubr.f32.gmra.mxu0 %v284
  %v361 = vpop.f32.mrf.mxu0
  %v362 = vadd.f32 %v280, %v361
  %v363 = vpop.f32.mrf.mxu0
  %364 = vmatprep.mubr.f32.mxu0 0.0
  %365 = vmatmul.mubr.f32.gmra.mxu0 %v287
  %v366 = vpop.f32.mrf.mxu0
  %v367 = vadd.f32 %v280, %v366
  %v368 = vpop.f32.mrf.mxu0
  %369 = vmatprep.mubr.f32.mxu0 0.0
  %370 = vmatmul.mubr.f32.gmra.mxu0 %v290
  %v371 = vpop.f32.mrf.mxu0
  %v372 = vadd.f32 %v280, %v371
  %v373 = vpop.f32.mrf.mxu0
  %374 = vmatprep.mubr.f32.mxu0 0.0
  %375 = vmatmul.mubr.f32.gmra.mxu0 %v293
  %v376 = vpop.f32.mrf.mxu0
  %v377 = vadd.f32 %v280, %v376
  %v378 = vpop.f32.mrf.mxu0
  %379 = vdwg.mxu0
  %v380 = vadd.f32 %v119, %v362
  %v381 = vadd.f32 %v120, %v367
  %v382 = vadd.f32 %v121, %v372
  %v383 = vadd.f32 %v122, %v377
  %v384 = vld [vmem:[%s8] sm:$0x1]
  %v385 = vld [vmem:[%s9] sm:$0x1]
  %v386 = vsel %vm49, %v380, 0.0
  %387 = vadd.xlane.f32.xlu0 %v386
  %v388 = vpop.xlane.xlu0 %387
  %v389 = vsel %vm49, %v381, 0.0
  %390 = vadd.xlane.f32.xlu0 %v389
  %v391 = vpop.xlane.xlu0 %390
  %v392 = vsel %vm49, %v382, 0.0
  %393 = vadd.xlane.f32.xlu0 %v392
  %v394 = vpop.xlane.xlu0 %393
  %v395 = vsel %vm49, %v383, 0.0
  %396 = vadd.xlane.f32.xlu0 %v395
  %v397 = vpop.xlane.xlu0 %396
  %v398 = vmul.f32 %v388, %v62
  %v399 = vmul.f32 %v391, %v62
  %v400 = vmul.f32 %v394, %v62
  %v401 = vmul.f32 %v397, %v62
  %v402 = vsub.f32 %v380, %v398
  %v403 = vsub.f32 %v381, %v399
  %v404 = vsub.f32 %v382, %v400
  %v405 = vsub.f32 %v383, %v401
  %v406 = vmul.f32 %v402, %v402
  %v407 = vmul.f32 %v403, %v403
  %v408 = vmul.f32 %v404, %v404
  %v409 = vmul.f32 %v405, %v405
  %v410 = vsel %vm49, %v406, 0.0
  %411 = vadd.xlane.f32.xlu0 %v410
  %v412 = vpop.xlane.xlu0 %411
  %v413 = vsel %vm49, %v407, 0.0
  %414 = vadd.xlane.f32.xlu0 %v413
  %v415 = vpop.xlane.xlu0 %414
  %v416 = vsel %vm49, %v408, 0.0
  %417 = vadd.xlane.f32.xlu0 %v416
  %v418 = vpop.xlane.xlu0 %417
  %v419 = vsel %vm49, %v409, 0.0
  %420 = vadd.xlane.f32.xlu0 %v419
  %v421 = vpop.xlane.xlu0 %420
  %v422 = vmul.f32 %v412, %v62
  %v423 = vmul.f32 %v415, %v62
  %v424 = vmul.f32 %v418, %v62
  %v425 = vmul.f32 %v421, %v62
  %v426 = vadd.f32 %v422, 1e-05
  %v427 = vadd.f32 %v423, 1e-05
  %v428 = vadd.f32 %v424, 1e-05
  %v429 = vadd.f32 %v425, 1e-05
  %v430 = vrsqrt.pop %v426
  %v431 = vrsqrt.pop %v427
  %v432 = vrsqrt.pop %v428
  %v433 = vrsqrt.pop %v429
  %v434 = vmul.f32 %v402, %v430
  %v435 = vmul.f32 %v403, %v431
  %v436 = vmul.f32 %v404, %v432
  %v437 = vmul.f32 %v405, %v433
  %v439 = vlaneseq
  %v440 = vshrl.u32 %v439, 7
  %v441 = vsub.s32 0, %v440
  %v442 = vrot.slane %v384, %v441
  %v444 = vmul.f32 %v434, %v442
  %v445 = vmul.f32 %v435, %v442
  %v446 = vmul.f32 %v436, %v442
  %v447 = vmul.f32 %v437, %v442
  %v449 = vlaneseq
  %v450 = vshrl.u32 %v449, 7
  %v451 = vsub.s32 0, %v450
  %v452 = vrot.slane %v385, %v451
  %v454 = vadd.f32 %v444, %v452
  %v455 = vadd.f32 %v445, %v452
  %v456 = vadd.f32 %v446, %v452
  %v457 = vadd.f32 %v447, %v452
  %458 = vst.msk [vmem:[%s10] sm:$0xff] %vm49, %v454
  %459 = vst.msk [vmem:[%s10 + $0x8] sm:$0xff] %vm49, %v455
  %460 = vst.msk [vmem:[%s10 + $0x10] sm:$0xff] %vm49, %v456
  %461 = vst.msk [vmem:[%s10 + $0x18] sm:$0xff] %vm49, %v457
  // Predicated region
  $region42: #{net_forward.20} parent=0 // pred_check
    _
  $region43: #{net_forward.20} parent=0 // pred_check_branch
    %463 = sbr.rel (0) target = $region45
  $region44: #{net_forward.20} parent=0 // pred_region
    _
  $region45: #{net_forward.20} parent=0 // pred_fallthru
    _
  // Predicated region
  $region46: #{net_forward.20} parent=0 // pred_check
    _
  $region47: #{net_forward.20} parent=0 // pred_check_branch
    %465 = sbr.rel (0) target = $region49
  $region48: #{net_forward.20} parent=0 // pred_region
    _
  $region49: #{net_forward.20} parent=0 // pred_fallthru
    _

// kernel: net_forward.19
$region0: #{net_forward.19}
  #allocation0 [shape = 'u32[]', space=smem, size = 0x4, offset = 0x4, fixed_abs, tag = 'smem constant byte address 0x4 - core index']
  #allocation1 [shape = 'u32[144,128]{1,0:T(1,128)}', space=vmem, size = 0x12000, scoped, tag = 'internal scratch']
  #allocation2 [shape = 'f32[16,96]{1,0:T(8,128)}', space=vmem, size = 0x2000, scoped, tag = 'scratch operand']
  %s0 = inlined_call_operand.vmem [shape: f32[2,16,32], index: 0, kind: input, shape index: {}]
  %s1 = inlined_call_operand.vmem [shape: f32[32,96], index: 1, kind: input, shape index: {}]
  %s2 = inlined_call_operand.vmem [shape: f32[8,16,4,36], index: 2, kind: input, shape index: {}]
  %s3 = inlined_call_operand.vmem [shape: f32[2,16,32], index: 3, kind: output, shape index: {}]
  %s4 = sld [smem:[#allocation0]]
  $region45: #{net_forward.19} parent=0
    _
  %s6 = ssub.s32 1, %s4
  %s7 = scalar_select 0, %s6, %s4
  loop: start=0, step=1, limit=4
  $region2: #{net_forward.19} parent=0 // loop_pre_header
    _
  $region3: #{net_forward.19} parent=0 // loop_header
    %s9 = sphi 0, %s13
    %p10 = scmp.ge.s32.totalorder %s9, 4
    %s19 = sphi 0, %s21
    %s22 = sphi 0, %s19
    %s23 = sphi 0, %s22
    %s39 = sphi 0, %s23
    %s43 = sphi 0, %s43
    %s45 = sphi 0, %s43
    %s46 = sphi 0, %s45
    %s60 = sphi 0, %s46
    %s64 = sphi 0, %s64
    %s66 = sphi 0, %s64
    %s67 = sphi 0, %s66
    %s81 = sphi 0, %s67
    %s87 = sphi 0, %s89
    %s90 = sphi 0, %s87
    %s91 = sphi 0, %s90
    %s107 = sphi 0, %s91
  $region4: #{net_forward.19} parent=0 // loop_header_branch
    %12 = sbr.rel (%p10) target = $region8
  $region5: #{net_forward.19} parent=0 // loop_body
    %s14 = ssub.s32 %s9, 1
    %s15 = ssub.s32 %s9, 2
    %s16 = sadd.s32 %s9, 1
    %s17 = ssub.s32 %s9, %s16
    %p18 = scmp.eq.s32.totalorder %s17, 0
    %s20 = sadd.s32 %s19, 1
    %s21 = scalar_select %p18, %s19, %s20
    %p24 = pneg %p18
    %p25 = scmp.eq.s32.totalorder %s9, 1
    %p26 = por %p24, %p25
    %p27 = scmp.ne.s32.totalorder %s19, %s22
    %p28 = scmp.eq.s32.totalorder %s9, 0
    %p29 = por %p27, %p28
    %p30 = scmp.ne.s32.totalorder %s19, %s22
    %p31 = scmp.eq.s32.totalorder %s14, 1
    %p32 = por %p30, %p31
    %p33 = scmp.ne.s32.totalorder %s22, %s23
    %p34 = scmp.eq.s32.totalorder %s14, 0
    %p35 = por %p33, %p34
    %p36 = scmp.ne.s32.totalorder %s22, %s23
    %p37 = scmp.eq.s32.totalorder %s15, 1
    %p38 = por %p36, %p37
    %p40 = scmp.ne.s32.totalorder %s23, %s39
    %p41 = scmp.eq.s32.totalorder %s15, 0
    %p42 = por %p40, %p41
    %s44 = sadd.s32 %s43, 1
    %p47 = scmp.eq.s32.totalorder %s9, 1
    %p48 = scmp.ne.s32.totalorder %s43, %s45
    %p49 = scmp.eq.s32.totalorder %s9, 0
    %p50 = por %p48, %p49
    %p51 = scmp.ne.s32.totalorder %s43, %s45
    %p52 = scmp.eq.s32.totalorder %s14, 1
    %p53 = por %p51, %p52
    %p54 = scmp.ne.s32.totalorder %s45, %s46
    %p55 = scmp.eq.s32.totalorder %s14, 0
    %p56 = por %p54, %p55
    %p57 = scmp.ne.s32.totalorder %s45, %s46
    %p58 = scmp.eq.s32.totalorder %s15, 1
    %p59 = por %p57, %p58
    %p61 = scmp.ne.s32.totalorder %s46, %s60
    %p62 = scmp.eq.s32.totalorder %s15, 0
    %p63 = por %p61, %p62
    %s65 = sadd.s32 %s64, 1
    %p68 = scmp.eq.s32.totalorder %s9, 1
    %p69 = scmp.ne.s32.totalorder %s64, %s66
    %p70 = scmp.eq.s32.totalorder %s9, 0
    %p71 = por %p69, %p70
    %p72 = scmp.ne.s32.totalorder %s64, %s66
    %p73 = scmp.eq.s32.totalorder %s14, 1
    %p74 = por %p72, %p73
    %p75 = scmp.ne.s32.totalorder %s66, %s67
    %p76 = scmp.eq.s32.totalorder %s14, 0
    %p77 = por %p75, %p76
    %p78 = scmp.ne.s32.totalorder %s66, %s67
    %p79 = scmp.eq.s32.totalorder %s15, 1
    %p80 = por %p78, %p79
    %p82 = scmp.ne.s32.totalorder %s67, %s81
    %p83 = scmp.eq.s32.totalorder %s15, 0
    %p84 = por %p82, %p83
    %s85 = ssub.s32 %s9, %s16
    %p86 = scmp.eq.s32.totalorder %s85, 0
    %s88 = sadd.s32 %s87, 1
    %s89 = scalar_select %p86, %s87, %s88
    %p92 = pneg %p86
    %p93 = scmp.eq.s32.totalorder %s9, 1
    %p94 = por %p92, %p93
    %p95 = scmp.ne.s32.totalorder %s87, %s90
    %p96 = scmp.eq.s32.totalorder %s9, 0
    %p97 = por %p95, %p96
    %p98 = scmp.ne.s32.totalorder %s87, %s90
    %p99 = scmp.eq.s32.totalorder %s14, 1
    %p100 = por %p98, %p99
    %p101 = scmp.ne.s32.totalorder %s90, %s91
    %p102 = scmp.eq.s32.totalorder %s14, 0
    %p103 = por %p101, %p102
    %p104 = scmp.ne.s32.totalorder %s90, %s91
    %p105 = scmp.eq.s32.totalorder %s15, 1
    %p106 = por %p104, %p105
    %p108 = scmp.ne.s32.totalorder %s91, %s107
    %p109 = scmp.eq.s32.totalorder %s15, 0
    %p110 = por %p108, %p109
    %p111 = scmp.le.s32.totalorder 1, %s9
    %p112 = scmp.lt.s32.totalorder %s9, 3
    %p113 = pnand %p111, %p112
    %p114 = pneg %p113
    // Predicated region
    $region9: #{net_forward.19} parent=5 // pred_check
      _
    $region10: #{net_forward.19} parent=5 // pred_check_branch
      %116 = sbr.rel (%p113) target = $region12
    $region11: #{net_forward.19} parent=5 // pred_region
      %s117 = ssub.s32 %s9, 1
      // Predicated region
      $region13: #{net_forward.19} parent=11 // pred_check
        %p118 = pneg %p56
      $region14: #{net_forward.19} parent=11 // pred_check_branch
        %120 = sbr.rel (%p118) target = $region16
      $region15: #{net_forward.19} parent=11 // pred_region
        _
      $region16: #{net_forward.19} parent=11 // pred_fallthru
        _
      // Predicated region
      $region17: #{net_forward.19} parent=11 // pred_check
        %p121 = pneg %p77
      $region18: #{net_forward.19} parent=11 // pred_check_branch
        %123 = sbr.rel (%p121) target = $region20
      $region19: #{net_forward.19} parent=11 // pred_region
        _
      $region20: #{net_forward.19} parent=11 // pred_fallthru
        _
    $region12: #{net_forward.19} parent=5 // pred_fallthru
      _
    %p124 = scmp.lt.s32.totalorder %s9, 2
    // Predicated region
    $region21: #{net_forward.19} parent=5 // pred_check
      %p125 = pneg %p124
    $region22: #{net_forward.19} parent=5 // pred_check_branch
      %127 = sbr.rel (%p125) target = $region24
    $region23: #{net_forward.19} parent=5 // pred_region
      // Predicated region
      $region25: #{net_forward.19} parent=23 // pred_check
        %p128 = pneg %p29
      $region26: #{net_forward.19} parent=23 // pred_check_branch
        %130 = sbr.rel (%p128) target = $region28
      $region27: #{net_forward.19} parent=23 // pred_region
        %p131 = scmp.lt.s32.totalorder %s9, 1
        %s132 = scalar_select %p131, %s9, 1
        %s133 = smul.addr %s132, 2
        %s134 = smul.addr %s133, 8
        %s135 = scalar_lea.vmem %s0, %s134
      $region28: #{net_forward.19} parent=23 // pred_fallthru
        _
    $region24: #{net_forward.19} parent=5 // pred_fallthru
      _
    %p136 = scmp.le.s32.totalorder 1, %s9
    %p137 = scmp.lt.s32.totalorder %s9, 3
    %p138 = pnand %p136, %p137
    %p139 = pneg %p138
    // Predicated region
    $region29: #{net_forward.19} parent=5 // pred_check
      _
    $region30: #{net_forward.19} parent=5 // pred_check_branch
      %141 = sbr.rel (%p138) target = $region32
    $region31: #{net_forward.19} parent=5 // pred_region
      %s142 = ssub.s32 %s9, 1
      %p143 = scmp.lt.s32.totalorder %s14, 1
      %s144 = scalar_select %p143, %s14, 1
      %s145 = smul.addr %s144, 2
      %s146 = smul.addr %s145, 8
      %s147 = scalar_lea.vmem %s0, %s146
      %p148 = pneg %p35
      %p149 = pneg %p32
      %p150 = pneg %p56
      %p151 = pneg %p53
      %p152 = pneg %p77
      %p153 = pneg %p74
      %p154 = pneg %p103
      %p155 = pneg %p100
      %p156 = scmp.lt.s32.totalorder %s14, 1
      %s157 = scalar_select %p156, %s14, 1
      %s158 = smul.addr %s157, 2
      %s159 = smul.addr %s158, 8
      %s160 = scalar_lea.vmem %s3, %s159
      %p161 = scmp.lt.s32.totalorder %s14, 1
      %s162 = scalar_select %p161, %s14, 1
      %s163 = smul.addr %s162, 2
      %s164 = smul.addr %s163, 8
      %s165 = scalar_lea.vmem %s0, %s164
      %p166 = scmp.lt.s32.totalorder %s14, 1
      %s167 = scalar_select %p166, %s14, 1
      %s168 = smul.addr %s167, 2
      %s169 = smul.addr %s168, 8
      %s170 = scalar_lea.vmem %s3, %s169
      %v171 = vld [vmem:[%s165] sm:$0xff]
      %v172 = vld [vmem:[%s165 + $0x8] sm:$0xff]
      %v173 = vld [vmem:[%s1] sm:$0xff]
      %v174 = vld [vmem:[%s1 + $0x8] sm:$0xff]
      %v175 = vld [vmem:[%s1 + $0x10] sm:$0xff]
      %v176 = vld [vmem:[%s1 + $0x18] sm:$0xff]
      %vm177 = vcmask 261120
      %v179 = vsel %vm177, %v171, 0
      %v182 = vsel %vm177, %v172, 0
      %184 = vmatprep.subr.mxu0 0.0
      %185 = vmatpush1.msra.mxu0 0.0
      %186 = vmatprep.subr.mxu0 0.0
      %187 = vmatpush1.msra.mxu0 0.0
      %188 = vmatprep.subr.mxu0 0.0
      %189 = vmatpush1.msra.mxu0 0.0
      %190 = vmatprep.subr.mxu0 0.0
      %191 = vmatpush1.msra.mxu0 0.0
      %192 = vmatprep.subr.mxu0 0.0
      %193 = vmatpush1.msra.mxu0 0.0
      %194 = vmatprep.subr.mxu0 0.0
      %195 = vmatpush1.msra.mxu0 0.0
      %196 = vmatprep.subr.mxu0 0.0
      %197 = vmatpush1.msra.mxu0 0.0
      %198 = vmatprep.subr.mxu0 0.0
      %199 = vmatpush1.msra.mxu0 0.0
      %200 = vmatprep.subr.mxu0 0.0
      %201 = vmatpush1.msra.mxu0 0.0
      %202 = vmatprep.subr.mxu0 0.0
      %203 = vmatpush1.msra.mxu0 0.0
      %204 = vmatprep.subr.mxu0 0.0
      %205 = vmatpush1.msra.mxu0 0.0
      %206 = vmatprep.subr.mxu0 0.0
      %207 = vmatpush1.msra.mxu0 0.0
      %208 = vmatprep.subr.mxu0 0.0
      %209 = vmatpush1.msra.mxu0 %v176
      %210 = vmatprep.subr.mxu0 0.0
      %211 = vmatpush1.msra.mxu0 %v175
      %212 = vmatprep.subr.mxu0 0.0
      %213 = vmatpush1.msra.mxu0 %v174
      %214 = vmatprep.subr.mxu0 0.0
      %215 = vmatpush1.msra.mxu0 %v173
      %216 = vmatprep.subr.mxu0 0.0
      %217 = vmatpush2.msra.mxu0 0.0
      %218 = vmatprep.subr.mxu0 0.0
      %219 = vmatpush2.msra.mxu0 0.0
      %220 = vmatprep.subr.mxu0 0.0
      %221 = vmatpush2.msra.mxu0 0.0
      %222 = vmatprep.subr.mxu0 0.0
      %223 = vmatpush2.msra.mxu0 0.0
      %224 = vmatprep.subr.mxu0 0.0
      %225 = vmatpush2.msra.mxu0 0.0
      %226 = vmatprep.subr.mxu0 0.0
      %227 = vmatpush2.msra.mxu0 0.0
      %228 = vmatprep.subr.mxu0 0.0
      %229 = vmatpush2.msra.mxu0 0.0
      %230 = vmatprep.subr.mxu0 0.0
      %231 = vmatpush2.msra.mxu0 0.0
      %232 = vmatprep.subr.mxu0 0.0
      %233 = vmatpush2.msra.mxu0 0.0
      %234 = vmatprep.subr.mxu0 0.0
      %235 = vmatpush2.msra.mxu0 0.0
      %236 = vmatprep.subr.mxu0 0.0
      %237 = vmatpush2.msra.mxu0 0.0
      %238 = vmatprep.subr.mxu0 0.0
      %239 = vmatpush2.msra.mxu0 0.0
      %240 = vmatprep.subr.mxu0 0.0
      %241 = vmatpush2.msra.mxu0 0.0
      %242 = vmatprep.subr.mxu0 0.0
      %243 = vmatpush2.msra.mxu0 0.0
      %244 = vmatprep.subr.mxu0 0.0
      %245 = vmatpush2.msra.mxu0 0.0
      %246 = vmatprep.subr.mxu0 0.0
      %247 = vmatpush2.msra.mxu0 0.0
      %248 = vmatprep.mubr.f32.mxu0 0.0
      %249 = vmatmul.mubr.f32.gmra.mxu0 %v179
      %v250 = vpop.f32.mrf.mxu0
      %v251 = vadd.f32 0.0, %v250
      %v252 = vpop.f32.mrf.mxu0
      %253 = vmatprep.mubr.f32.mxu0 0.0
      %254 = vmatmul.mubr.f32.gmra.mxu0 %v182
      %v255 = vpop.f32.mrf.mxu0
      %v256 = vadd.f32 0.0, %v255
      %v257 = vpop.f32.mrf.mxu0
      %258 = vdwg.mxu0
      %vm259 = vcmask 785408
      %260 = vst.msk [vmem:[#allocation2] sm:$0xff] %vm259, %v251
      %261 = vst.msk [vmem:[#allocation2 + $0x8] sm:$0xff] %vm259, %v256
      %v262 = vlaneseq
      %v263 = vand.u32 %v262, 127
      %v264 = vlaneseq
      %v265 = vshrl.u32 %v264, 7
      %v266 = vadd.s32 %v265, 8
      %v267 = vsub.s32 %v263, %v265
      %v268 = vsub.s32 %v263, %v266
      %vm269 = vcmp.ge.s32.totalorder %v267, 0
      %vm270 = vcmp.ge.s32.totalorder %v268, 0
      %vm271 = vcmp.lt.s32.totalorder %v267, 21
      %vm272 = vcmp.lt.s32.totalorder %v268, 21
      %vm273 = vmand %vm269, %vm271
      %vm274 = vmand %vm270, %vm272
      %v275 = vld [vmem:[#allocation2] sm:$0xff]
      %v276 = vld [vmem:[#allocation2 + $0x8] sm:$0xff]
      %vm279 = vcmask 1041408
      %v280 = vrot.slane %v275, 6
      %v281 = vrot.slane %v276, 6
      %v282 = vsel %vm279, %v280, %v281
      %283 = vrot.lane.b32.xlu0 %v280, 96
      %v284 = vpop.permute.xlu0 %283
      %285 = vrot.lane.b32.xlu0 %v282, 96
      %v286 = vpop.permute.xlu0 %285
      %287 = vrot.lane.b32.xlu0 %v281, 96
      %v288 = vpop.permute.xlu0 %287
      %v291 = vsel %vm279, 0.0, %v284
      %v292 = vsel %vm279, %v288, 0.0
      %293 = vrot.lane.b32.xlu0 %v280, 64
      %v294 = vpop.permute.xlu0 %293
      %295 = vrot.lane.b32.xlu0 %v282, 64
      %v296 = vpop.permute.xlu0 %295
      %297 = vrot.lane.b32.xlu0 %v281, 64
      %v298 = vpop.permute.xlu0 %297
      %v302 = vsel %vm279, 0.0, %v294
      %v303 = vsel %vm279, %v298, 0.0
      %v304 = vlaneseq
      %v305 = vshrl.u32 %v304, 7
      %v306 = vsub.s32 0, %v305
      %v307 = vrot.slane %v275, %v306
      %309 = vbcast.lane.b32.xlu0 %v307, 256
      %v310 = vpop.permute.xlu0 %309
      %v311 = vlaneseq
      %v312 = vshrl.u32 %v311, 7
      %v313 = vsub.s32 1, %v312
      %v314 = vrot.slane %v275, %v313
      %316 = vbcast.lane.b32.xlu0 %v314, 256
      %v317 = vpop.permute.xlu0 %316
      %v318 = vlaneseq
      %v319 = vshrl.u32 %v318, 7
      %v320 = vsub.s32 2, %v319
      %v321 = vrot.slane %v275, %v320
      %323 = vbcast.lane.b32.xlu0 %v321, 256
      %v324 = vpop.permute.xlu0 %323
      %v325 = vlaneseq
      %v326 = vshrl.u32 %v325, 7
      %v327 = vsub.s32 3, %v326
      %v328 = vrot.slane %v275, %v327
      %330 = vbcast.lane.b32.xlu0 %v328, 256
      %v331 = vpop.permute.xlu0 %330
      %v332 = vlaneseq
      %v333 = vshrl.u32 %v332, 7
      %v334 = vsub.s32 4, %v333
      %v335 = vrot.slane %v275, %v334
      %337 = vbcast.lane.b32.xlu0 %v335, 256
      %v338 = vpop.permute.xlu0 %337
      %v339 = vlaneseq
      %v340 = vshrl.u32 %v339, 7
      %v341 = vsub.s32 5, %v340
      %v342 = vrot.slane %v275, %v341
      %344 = vbcast.lane.b32.xlu0 %v342, 256
      %v345 = vpop.permute.xlu0 %344
      %v346 = vlaneseq
      %v347 = vshrl.u32 %v346, 7
      %v348 = vsub.s32 6, %v347
      %v349 = vrot.slane %v275, %v348
      %351 = vbcast.lane.b32.xlu0 %v349, 256
      %v352 = vpop.permute.xlu0 %351
      %v353 = vlaneseq
      %v354 = vshrl.u32 %v353, 7
      %v355 = vsub.s32 7, %v354
      %v356 = vrot.slane %v275, %v355
      %358 = vbcast.lane.b32.xlu0 %v356, 256
      %v359 = vpop.permute.xlu0 %358
      %v360 = vlaneseq
      %v361 = vshrl.u32 %v360, 7
      %v362 = vsub.s32 0, %v361
      %v363 = vrot.slane %v276, %v362
      %365 = vbcast.lane.b32.xlu0 %v363, 256
      %v366 = vpop.permute.xlu0 %365
      %v367 = vlaneseq
      %v368 = vshrl.u32 %v367, 7
      %v369 = vsub.s32 1, %v368
      %v370 = vrot.slane %v276, %v369
      %372 = vbcast.lane.b32.xlu0 %v370, 256
      %v373 = vpop.permute.xlu0 %372
      %v374 = vlaneseq
      %v375 = vshrl.u32 %v374, 7
      %v376 = vsub.s32 2, %v375
      %v377 = vrot.slane %v276, %v376
      %379 = vbcast.lane.b32.xlu0 %v377, 256
      %v380 = vpop.permute.xlu0 %379
      %v381 = vlaneseq
      %v382 = vshrl.u32 %v381, 7
      %v383 = vsub.s32 3, %v382
      %v384 = vrot.slane %v276, %v383
      %386 = vbcast.lane.b32.xlu0 %v384, 256
      %v387 = vpop.permute.xlu0 %386
      %v388 = vlaneseq
      %v389 = vshrl.u32 %v388, 7
      %v390 = vsub.s32 4, %v389
      %v391 = vrot.slane %v276, %v390
      %393 = vbcast.lane.b32.xlu0 %v391, 256
      %v394 = vpop.permute.xlu0 %393
      %v395 = vlaneseq
      %v396 = vshrl.u32 %v395, 7
      %v397 = vsub.s32 5, %v396
      %v398 = vrot.slane %v276, %v397
      %400 = vbcast.lane.b32.xlu0 %v398, 256
      %v401 = vpop.permute.xlu0 %400
      %v402 = vlaneseq
      %v403 = vshrl.u32 %v402, 7
      %v404 = vsub.s32 6, %v403
      %v405 = vrot.slane %v276, %v404
      %407 = vbcast.lane.b32.xlu0 %v405, 256
      %v408 = vpop.permute.xlu0 %407
      %v409 = vlaneseq
      %v410 = vshrl.u32 %v409, 7
      %v411 = vsub.s32 7, %v410
      %v412 = vrot.slane %v276, %v411
      %414 = vbcast.lane.b32.xlu0 %v412, 256
      %v415 = vpop.permute.xlu0 %414
      %v416 = vld [vmem:[%s2] sm:$0xf]
      %v417 = vld [vmem:[%s2 + $0x4] sm:$0xf]
      %v418 = vld [vmem:[%s2 + $0x8] sm:$0xf]
      %v419 = vld [vmem:[%s2 + $0xc] sm:$0xf]
      %v420 = vld [vmem:[%s2 + $0x10] sm:$0xf]
      %v421 = vld [vmem:[%s2 + $0x14] sm:$0xf]
      %v422 = vld [vmem:[%s2 + $0x18] sm:$0xf]
      %v423 = vld [vmem:[%s2 + $0x1c] sm:$0xf]
      %v424 = vld [vmem:[%s2 + $0x20] sm:$0xf]
      %v425 = vld [vmem:[%s2 + $0x24] sm:$0xf]
      %v426 = vld [vmem:[%s2 + $0x28] sm:$0xf]
      %v427 = vld [vmem:[%s2 + $0x2c] sm:$0xf]
      %v428 = vld [vmem:[%s2 + $0x30] sm:$0xf]
      %v429 = vld [vmem:[%s2 + $0x34] sm:$0xf]
      %v430 = vld [vmem:[%s2 + $0x38] sm:$0xf]
      %v431 = vld [vmem:[%s2 + $0x3c] sm:$0xf]
      %v432 = vmul.f32 %v310, %v416
      %v433 = vmul.f32 %v317, %v417
      %v434 = vmul.f32 %v324, %v418
      %v435 = vmul.f32 %v331, %v419
      %v436 = vmul.f32 %v338, %v420
      %v437 = vmul.f32 %v345, %v421
      %v438 = vmul.f32 %v352, %v422
      %v439 = vmul.f32 %v359, %v423
      %v440 = vmul.f32 %v366, %v424
      %v441 = vmul.f32 %v373, %v425
      %v442 = vmul.f32 %v380, %v426
      %v443 = vmul.f32 %v387, %v427
      %v444 = vmul.f32 %v394, %v428
      %v445 = vmul.f32 %v401, %v429
      %v446 = vmul.f32 %v408, %v430
      %v447 = vmul.f32 %v415, %v431
      %vm448 = vcmask 289792
      %v449 = vsel %vm448, %v432, 0.0
      %v450 = vrot.slane %v449, 4
      %v451 = vadd.f32 %v449, %v450
      %v452 = vrot.slane %v451, 2
      %v453 = vadd.f32 %v451, %v452
      %v454 = vrot.slane %v453, 1
      %v455 = vadd.f32 %v453, %v454
      %v456 = vsel %vm448, %v433, 0.0
      %v457 = vrot.slane %v456, 4
      %v458 = vadd.f32 %v456, %v457
      %v459 = vrot.slane %v458, 2
      %v460 = vadd.f32 %v458, %v459
      %v461 = vrot.slane %v460, 1
      %v462 = vadd.f32 %v460, %v461
      %v463 = vsel %vm448, %v434, 0.0
      %v464 = vrot.slane %v463, 4
      %v465 = vadd.f32 %v463, %v464
      %v466 = vrot.slane %v465, 2
      %v467 = vadd.f32 %v465, %v466
      %v468 = vrot.slane %v467, 1
      %v469 = vadd.f32 %v467, %v468
      %v470 = vsel %vm448, %v435, 0.0
      %v471 = vrot.slane %v470, 4
      %v472 = vadd.f32 %v470, %v471
      %v473 = vrot.slane %v472, 2
      %v474 = vadd.f32 %v472, %v473
      %v475 = vrot.slane %v474, 1
      %v476 = vadd.f32 %v474, %v475
      %v477 = vsel %vm448, %v436, 0.0
      %v478 = vrot.slane %v477, 4
      %v479 = vadd.f32 %v477, %v478
      %v480 = vrot.slane %v479, 2
      %v481 = vadd.f32 %v479, %v480
      %v482 = vrot.slane %v481, 1
      %v483 = vadd.f32 %v481, %v482
      %v484 = vsel %vm448, %v437, 0.0
      %v485 = vrot.slane %v484, 4
      %v486 = vadd.f32 %v484, %v485
      %v487 = vrot.slane %v486, 2
      %v488 = vadd.f32 %v486, %v487
      %v489 = vrot.slane %v488, 1
      %v490 = vadd.f32 %v488, %v489
      %v491 = vsel %vm448, %v438, 0.0
      %v492 = vrot.slane %v491, 4
      %v493 = vadd.f32 %v491, %v492
      %v494 = vrot.slane %v493, 2
      %v495 = vadd.f32 %v493, %v494
      %v496 = vrot.slane %v495, 1
      %v497 = vadd.f32 %v495, %v496
      %v498 = vsel %vm448, %v439, 0.0
      %v499 = vrot.slane %v498, 4
      %v500 = vadd.f32 %v498, %v499
      %v501 = vrot.slane %v500, 2
      %v502 = vadd.f32 %v500, %v501
      %v503 = vrot.slane %v502, 1
      %v504 = vadd.f32 %v502, %v503
      %v505 = vsel %vm448, %v440, 0.0
      %v506 = vrot.slane %v505, 4
      %v507 = vadd.f32 %v505, %v506
      %v508 = vrot.slane %v507, 2
      %v509 = vadd.f32 %v507, %v508
      %v510 = vrot.slane %v509, 1
      %v511 = vadd.f32 %v509, %v510
      %v512 = vsel %vm448, %v441, 0.0
      %v513 = vrot.slane %v512, 4
      %v514 = vadd.f32 %v512, %v513
      %v515 = vrot.slane %v514, 2
      %v516 = vadd.f32 %v514, %v515
      %v517 = vrot.slane %v516, 1
      %v518 = vadd.f32 %v516, %v517
      %v519 = vsel %vm448, %v442, 0.0
      %v520 = vrot.slane %v519, 4
      %v521 = vadd.f32 %v519, %v520
      %v522 = vrot.slane %v521, 2
      %v523 = vadd.f32 %v521, %v522
      %v524 = vrot.slane %v523, 1
      %v525 = vadd.f32 %v523, %v524
      %v526 = vsel %vm448, %v443, 0.0
      %v527 = vrot.slane %v526, 4
      %v528 = vadd.f32 %v526, %v527
      %v529 = vrot.slane %v528, 2
      %v530 = vadd.f32 %v528, %v529
      %v531 = vrot.slane %v530, 1
      %v532 = vadd.f32 %v530, %v531
      %v533 = vsel %vm448, %v444, 0.0
      %v534 = vrot.slane %v533, 4
      %v535 = vadd.f32 %v533, %v534
      %v536 = vrot.slane %v535, 2
      %v537 = vadd.f32 %v535, %v536
      %v538 = vrot.slane %v537, 1
      %v539 = vadd.f32 %v537, %v538
      %v540 = vsel %vm448, %v445, 0.0
      %v541 = vrot.slane %v540, 4
      %v542 = vadd.f32 %v540, %v541
      %v543 = vrot.slane %v542, 2
      %v544 = vadd.f32 %v542, %v543
      %v545 = vrot.slane %v544, 1
      %v546 = vadd.f32 %v544, %v545
      %v547 = vsel %vm448, %v446, 0.0
      %v548 = vrot.slane %v547, 4
      %v549 = vadd.f32 %v547, %v548
      %v550 = vrot.slane %v549, 2
      %v551 = vadd.f32 %v549, %v550
      %v552 = vrot.slane %v551, 1
      %v553 = vadd.f32 %v551, %v552
      %v554 = vsel %vm448, %v447, 0.0
      %v555 = vrot.slane %v554, 4
      %v556 = vadd.f32 %v554, %v555
      %v557 = vrot.slane %v556, 2
      %v558 = vadd.f32 %v556, %v557
      %v559 = vrot.slane %v558, 1
      %v560 = vadd.f32 %v558, %v559
      %vm577 = vcmask 1041409
      %v578 = vsel %vm577, %v462, %v455
      %vm579 = vcmask 1042434
      %v580 = vsel %vm579, %v469, %v578
      %vm581 = vcmask 1043459
      %v582 = vsel %vm581, %v476, %v580
      %vm583 = vcmask 1044484
      %v584 = vsel %vm583, %v483, %v582
      %vm585 = vcmask 1045509
      %v586 = vsel %vm585, %v490, %v584
      %vm587 = vcmask 1046534
      %v588 = vsel %vm587, %v497, %v586
      %vm589 = vcmask 1047559
      %v590 = vsel %vm589, %v504, %v588
      %v591 = vsel %vm577, %v518, %v511
      %v592 = vsel %vm579, %v525, %v591
      %v593 = vsel %vm581, %v532, %v592
      %v594 = vsel %vm583, %v539, %v593
      %v595 = vsel %vm585, %v546, %v594
      %v596 = vsel %vm587, %v553, %v595
      %v597 = vsel %vm589, %v560, %v596
      %vm600 = vcmask 31744
      %v601 = vsel %vm600, %v275, 0
      %v603 = vsel %vm600, %v276, 0
      %v606 = vsel %vm600, 0.0, 0
      %v609 = vsel %vm600, %v291, 0
      %v611 = vsel %vm600, %v286, 0
      %v614 = vsel %vm600, %v292, 0
      %616 = vmatprep.subr.mxu0 0.0
      %617 = vmatpush1.xpose.msra.mxu0 0.0
      %618 = vmatprep.subr.mxu0 0.0
      %619 = vmatpush1.xpose.msra.mxu0 0.0
      %620 = vmatprep.subr.mxu0 0.0
      %621 = vmatpush1.xpose.msra.mxu0 0.0
      %622 = vmatprep.subr.mxu0 0.0
      %623 = vmatpush1.xpose.msra.mxu0 0.0
      %624 = vmatprep.subr.mxu0 0.0
      %625 = vmatpush1.xpose.msra.mxu0 0.0
      %626 = vmatprep.subr.mxu0 0.0
      %627 = vmatpush1.xpose.msra.mxu0 0.0
      %628 = vmatprep.subr.mxu0 0.0
      %629 = vmatpush1.xpose.msra.mxu0 0.0
      %630 = vmatprep.subr.mxu0 0.0
      %631 = vmatpush1.xpose.msra.mxu0 0.0
      %632 = vmatprep.subr.mxu0 0.0
      %633 = vmatpush1.xpose.msra.mxu0 0.0
      %634 = vmatprep.subr.mxu0 0.0
      %635 = vmatpush1.xpose.msra.mxu0 0.0
      %636 = vmatprep.subr.mxu0 0.0
      %637 = vmatpush1.xpose.msra.mxu0 0.0
      %638 = vmatprep.subr.mxu0 0.0
      %639 = vmatpush1.xpose.msra.mxu0 %v606
      %640 = vmatprep.subr.mxu0 0.0
      %641 = vmatpush1.xpose.msra.mxu0 %v614
      %642 = vmatprep.subr.mxu0 0.0
      %643 = vmatpush1.xpose.msra.mxu0 %v611
      %644 = vmatprep.subr.mxu0 0.0
      %645 = vmatpush1.xpose.msra.mxu0 %v609
      %646 = vmatprep.subr.mxu0 0.0
      %647 = vmatpush1.xpose.msra.mxu0 %v606
      %648 = vmatprep.subr.mxu0 0.0
      %649 = vmatpush2.xpose.msra.mxu0 0.0
      %650 = vmatprep.subr.mxu0 0.0
      %651 = vmatpush2.xpose.msra.mxu0 0.0
      %652 = vmatprep.subr.mxu0 0.0
      %653 = vmatpush2.xpose.msra.mxu0 0.0
      %654 = vmatprep.subr.mxu0 0.0
      %655 = vmatpush2.xpose.msra.mxu0 0.0
      %656 = vmatprep.subr.mxu0 0.0
      %657 = vmatpush2.xpose.msra.mxu0 0.0
      %658 = vmatprep.subr.mxu0 0.0
      %659 = vmatpush2.xpose.msra.mxu0 0.0
      %660 = vmatprep.subr.mxu0 0.0
      %661 = vmatpush2.xpose.msra.mxu0 0.0
      %662 = vmatprep.subr.mxu0 0.0
      %663 = vmatpush2.xpose.msra.mxu0 0.0
      %664 = vmatprep.subr.mxu0 0.0
      %665 = vmatpush2.xpose.msra.mxu0 0.0
      %666 = vmatprep.subr.mxu0 0.0
      %667 = vmatpush2.xpose.msra.mxu0 0.0
      %668 = vmatprep.subr.mxu0 0.0
      %669 = vmatpush2.xpose.msra.mxu0 0.0
      %670 = vmatprep.subr.mxu0 0.0
      %671 = vmatpush2.xpose.msra.mxu0 0.0
      %672 = vmatprep.subr.mxu0 0.0
      %673 = vmatpush2.xpose.msra.mxu0 0.0
      %674 = vmatprep.subr.mxu0 0.0
      %675 = vmatpush2.xpose.msra.mxu0 0.0
      %676 = vmatprep.subr.mxu0 0.0
      %677 = vmatpush2.xpose.msra.mxu0 0.0
      %678 = vmatprep.subr.mxu0 0.0
      %679 = vmatpush2.xpose.msra.mxu0 0.0
      %680 = vmatprep.mubr.f32.mxu0 0.0
      %681 = vmatmul.mubr.f32.gmra.mxu0 %v601
      %v682 = vpop.f32.mrf.mxu0
      %v683 = vadd.f32 %v590, %v682
      %v684 = vpop.f32.mrf.mxu0
      %685 = vmatprep.mubr.f32.mxu0 0.0
      %686 = vmatmul.mubr.f32.gmra.mxu0 %v603
      %v687 = vpop.f32.mrf.mxu0
      %v688 = vadd.f32 %v597, %v687
      %v689 = vpop.f32.mrf.mxu0
      %690 = vdwg.mxu0
      %v691 = vmul.f32 %v683, 0.17677669
      %v692 = vmul.f32 %v688, 0.17677669
      %v693 = vsel %vm273, %v691, -1e+30
      %v694 = vsel %vm274, %v692, -1e+30
      %vm695 = vcmask 293888
      %v696 = vsel %vm695, %v693, -inf
      %697 = vmax.xlane.f32.xlu0 %v696
      %v698 = vpop.xlane.xlu0 %697
      %v699 = vsel %vm695, %v694, -inf
      %700 = vmax.xlane.f32.xlu0 %v699
      %v701 = vpop.xlane.xlu0 %700
      %v702 = vsub.f32 %v693, %v698
      %v703 = vsub.f32 %v694, %v701
      %v704 = vmul.f32 %v702, 1.442695
      %v705 = vpow.pop %v704
      %v706 = vmul.f32 %v703, 1.442695
      %v707 = vpow.pop %v706
      %v708 = vsel %vm695, %v705, 0.0
      %709 = vadd.xlane.f32.xlu0 %v708
      %v710 = vpop.xlane.xlu0 %709
      %v711 = vsel %vm695, %v707, 0.0
      %712 = vadd.xlane.f32.xlu0 %v711
      %v713 = vpop.xlane.xlu0 %712
      %v714 = vrcp.pop %v710
      %v715 = vmul.f32 %v705, %v714
      %v716 = vrcp.pop %v713
      %v717 = vmul.f32 %v707, %v716
      %v719 = vsel %vm695, %v715, 0
      %v722 = vsel %vm695, %v717, 0
      %vm724 = vcmask 1043456
      %v725 = vsel %vm724, 0.0, 0
      %727 = vmatprep.subr.mxu0 0.0
      %728 = vmatpush1.msra.mxu0 0.0
      %729 = vmatprep.subr.mxu0 0.0
      %730 = vmatpush1.msra.mxu0 0.0
      %731 = vmatprep.subr.mxu0 0.0
      %732 = vmatpush1.msra.mxu0 0.0
      %733 = vmatprep.subr.mxu0 0.0
      %734 = vmatpush1.msra.mxu0 0.0
      %735 = vmatprep.subr.mxu0 0.0
      %736 = vmatpush1.msra.mxu0 0.0
      %737 = vmatprep.subr.mxu0 0.0
      %738 = vmatpush1.msra.mxu0 0.0
      %739 = vmatprep.subr.mxu0 0.0
      %740 = vmatpush1.msra.mxu0 0.0
      %741 = vmatprep.subr.mxu0 0.0
      %742 = vmatpush1.msra.mxu0 0.0
      %743 = vmatprep.subr.mxu0 0.0
      %744 = vmatpush1.msra.mxu0 0.0
      %745 = vmatprep.subr.mxu0 0.0
      %746 = vmatpush1.msra.mxu0 0.0
      %747 = vmatprep.subr.mxu0 0.0
      %748 = vmatpush1.msra.mxu0 0.0
      %749 = vmatprep.subr.mxu0 0.0
      %750 = vmatpush1.msra.mxu0 %v725
      %751 = vmatprep.subr.mxu0 0.0
      %752 = vmatpush1.msra.mxu0 %v303
      %753 = vmatprep.subr.mxu0 0.0
      %754 = vmatpush1.msra.mxu0 %v296
      %755 = vmatprep.subr.mxu0 0.0
      %756 = vmatpush1.msra.mxu0 %v302
      %757 = vmatprep.subr.mxu0 0.0
      %758 = vmatpush1.msra.mxu0 0.0
      %759 = vmatprep.subr.mxu0 0.0
      %760 = vmatpush2.msra.mxu0 0.0
      %761 = vmatprep.subr.mxu0 0.0
      %762 = vmatpush2.msra.mxu0 0.0
      %763 = vmatprep.subr.mxu0 0.0
      %764 = vmatpush2.msra.mxu0 0.0
      %765 = vmatprep.subr.mxu0 0.0
      %766 = vmatpush2.msra.mxu0 0.0
      %767 = vmatprep.subr.mxu0 0.0
      %768 = vmatpush2.msra.mxu0 0.0
      %769 = vmatprep.subr.mxu0 0.0
      %770 = vmatpush2.msra.mxu0 0.0
      %771 = vmatprep.subr.mxu0 0.0
      %772 = vmatpush2.msra.mxu0 0.0
      %773 = vmatprep.subr.mxu0 0.0
      %774 = vmatpush2.msra.mxu0 0.0
      %775 = vmatprep.subr.mxu0 0.0
      %776 = vmatpush2.msra.mxu0 0.0
      %777 = vmatprep.subr.mxu0 0.0
      %778 = vmatpush2.msra.mxu0 0.0
      %779 = vmatprep.subr.mxu0 0.0
      %780 = vmatpush2.msra.mxu0 0.0
      %781 = vmatprep.subr.mxu0 0.0
      %782 = vmatpush2.msra.mxu0 0.0
      %783 = vmatprep.subr.mxu0 0.0
      %784 = vmatpush2.msra.mxu0 0.0
      %785 = vmatprep.subr.mxu0 0.0
      %786 = vmatpush2.msra.mxu0 0.0
      %787 = vmatprep.subr.mxu0 0.0
      %788 = vmatpush2.msra.mxu0 0.0
      %789 = vmatprep.subr.mxu0 0.0
      %790 = vmatpush2.msra.mxu0 0.0
      %791 = vmatprep.mubr.f32.mxu0 0.0
      %792 = vmatmul.mubr.f32.gmra.mxu0 %v719
      %v793 = vpop.f32.mrf.mxu0
      %v794 = vadd.f32 0.0, %v793
      %v795 = vpop.f32.mrf.mxu0
      %796 = vmatprep.mubr.f32.mxu0 0.0
      %797 = vmatmul.mubr.f32.gmra.mxu0 %v722
      %v798 = vpop.f32.mrf.mxu0
      %v799 = vadd.f32 0.0, %v798
      %v800 = vpop.f32.mrf.mxu0
      %801 = vdwg.mxu0
      %802 = vrot.lane.b32.xlu0 %v280, 92
      %v803 = vpop.permute.xlu0 %802
      %804 = vrot.lane.b32.xlu0 %v282, 92
      %v805 = vpop.permute.xlu0 %804
      %806 = vrot.lane.b32.xlu0 %v281, 92
      %v807 = vpop.permute.xlu0 %806
      %v810 = vsel %vm279, 0.0, %v803
      %v811 = vsel %vm279, %v807, 0.0
      %812 = vrot.lane.b32.xlu0 %v280, 60
      %v813 = vpop.permute.xlu0 %812
      %814 = vrot.lane.b32.xlu0 %v282, 60
      %v815 = vpop.permute.xlu0 %814
      %816 = vrot.lane.b32.xlu0 %v281, 60
      %v817 = vpop.permute.xlu0 %816
      %v821 = vsel %vm279, 0.0, %v813
      %v822 = vsel %vm279, %v817, 0.0
      %s824 = sor.u32 256, 4
      %825 = vbcast.lane.b32.xlu0 %v307, %s824
      %v826 = vpop.permute.xlu0 %825
      %s828 = sor.u32 256, 4
      %829 = vbcast.lane.b32.xlu0 %v314, %s828
      %v830 = vpop.permute.xlu0 %829
      %s832 = sor.u32 256, 4
      %833 = vbcast.lane.b32.xlu0 %v321, %s832
      %v834 = vpop.permute.xlu0 %833
      %s836 = sor.u32 256, 4
      %837 = vbcast.lane.b32.xlu0 %v328, %s836
      %v838 = vpop.permute.xlu0 %837
      %s840 = sor.u32 256, 4
      %841 = vbcast.lane.b32.xlu0 %v335, %s840
      %v842 = vpop.permute.xlu0 %841
      %s844 = sor.u32 256, 4
      %845 = vbcast.lane.b32.xlu0 %v342, %s844
      %v846 = vpop.permute.xlu0 %845
      %s848 = sor.u32 256, 4
      %849 = vbcast.lane.b32.xlu0 %v349, %s848
      %v850 = vpop.permute.xlu0 %849
      %s852 = sor.u32 256, 4
      %853 = vbcast.lane.b32.xlu0 %v356, %s852
      %v854 = vpop.permute.xlu0 %853
      %s856 = sor.u32 256, 4
      %857 = vbcast.lane.b32.xlu0 %v363, %s856
      %v858 = vpop.permute.xlu0 %857
      %s860 = sor.u32 256, 4
      %861 = vbcast.lane.b32.xlu0 %v370, %s860
      %v862 = vpop.permute.xlu0 %861
      %s864 = sor.u32 256, 4
      %865 = vbcast.lane.b32.xlu0 %v377, %s864
      %v866 = vpop.permute.xlu0 %865
      %s868 = sor.u32 256, 4
      %869 = vbcast.lane.b32.xlu0 %v384, %s868
      %v870 = vpop.permute.xlu0 %869
      %s872 = sor.u32 256, 4
      %873 = vbcast.lane.b32.xlu0 %v391, %s872
      %v874 = vpop.permute.xlu0 %873
      %s876 = sor.u32 256, 4
      %877 = vbcast.lane.b32.xlu0 %v398, %s876
      %v878 = vpop.permute.xlu0 %877
      %s880 = sor.u32 256, 4
      %881 = vbcast.lane.b32.xlu0 %v405, %s880
      %v882 = vpop.permute.xlu0 %881
      %s884 = sor.u32 256, 4
      %885 = vbcast.lane.b32.xlu0 %v412, %s884
      %v886 = vpop.permute.xlu0 %885
      %s887 = scalar_lea.vmem %s2, 64
      %v888 = vld [vmem:[%s887] sm:$0xf]
      %v889 = vld [vmem:[%s887 + $0x4] sm:$0xf]
      %v890 = vld [vmem:[%s887 + $0x8] sm:$0xf]
      %v891 = vld [vmem:[%s887 + $0xc] sm:$0xf]
      %v892 = vld [vmem:[%s887 + $0x10] sm:$0xf]
      %v893 = vld [vmem:[%s887 + $0x14] sm:$0xf]
      %v894 = vld [vmem:[%s887 + $0x18] sm:$0xf]
      %v895 = vld [vmem:[%s887 + $0x1c] sm:$0xf]
      %v896 = vld [vmem:[%s887 + $0x20] sm:$0xf]
      %v897 = vld [vmem:[%s887 + $0x24] sm:$0xf]
      %v898 = vld [vmem:[%s887 + $0x28] sm:$0xf]
      %v899 = vld [vmem:[%s887 + $0x2c] sm:$0xf]
      %v900 = vld [vmem:[%s887 + $0x30] sm:$0xf]
      %v901 = vld [vmem:[%s887 + $0x34] sm:$0xf]
      %v902 = vld [vmem:[%s887 + $0x38] sm:$0xf]
      %v903 = vld [vmem:[%s887 + $0x3c] sm:$0xf]
      %v904 = vmul.f32 %v826, %v888
      %v905 = vmul.f32 %v830, %v889
      %v906 = vmul.f32 %v834, %v890
      %v907 = vmul.f32 %v838, %v891
      %v908 = vmul.f32 %v842, %v892
      %v909 = vmul.f32 %v846, %v893
      %v910 = vmul.f32 %v850, %v894
      %v911 = vmul.f32 %v854, %v895
      %v912 = vmul.f32 %v858, %v896
      %v913 = vmul.f32 %v862, %v897
      %v914 = vmul.f32 %v866, %v898
      %v915 = vmul.f32 %v870, %v899
      %v916 = vmul.f32 %v874, %v900
      %v917 = vmul.f32 %v878, %v901
      %v918 = vmul.f32 %v882, %v902
      %v919 = vmul.f32 %v886, %v903
      %v920 = vsel %vm448, %v904, 0.0
      %v921 = vrot.slane %v920, 4
      %v922 = vadd.f32 %v920, %v921
      %v923 = vrot.slane %v922, 2
      %v924 = vadd.f32 %v922, %v923
      %v925 = vrot.slane %v924, 1
      %v926 = vadd.f32 %v924, %v925
      %v927 = vsel %vm448, %v905, 0.0
      %v928 = vrot.slane %v927, 4
      %v929 = vadd.f32 %v927, %v928
      %v930 = vrot.slane %v929, 2
      %v931 = vadd.f32 %v929, %v930
      %v932 = vrot.slane %v931, 1
      %v933 = vadd.f32 %v931, %v932
      %v934 = vsel %vm448, %v906, 0.0
      %v935 = vrot.slane %v934, 4
      %v936 = vadd.f32 %v934, %v935
      %v937 = vrot.slane %v936, 2
      %v938 = vadd.f32 %v936, %v937
      %v939 = vrot.slane %v938, 1
      %v940 = vadd.f32 %v938, %v939
      %v941 = vsel %vm448, %v907, 0.0
      %v942 = vrot.slane %v941, 4
      %v943 = vadd.f32 %v941, %v942
      %v944 = vrot.slane %v943, 2
      %v945 = vadd.f32 %v943, %v944
      %v946 = vrot.slane %v945, 1
      %v947 = vadd.f32 %v945, %v946
      %v948 = vsel %vm448, %v908, 0.0
      %v949 = vrot.slane %v948, 4
      %v950 = vadd.f32 %v948, %v949
      %v951 = vrot.slane %v950, 2
      %v952 = vadd.f32 %v950, %v951
      %v953 = vrot.slane %v952, 1
      %v954 = vadd.f32 %v952, %v953
      %v955 = vsel %vm448, %v909, 0.0
      %v956 = vrot.slane %v955, 4
      %v957 = vadd.f32 %v955, %v956
      %v958 = vrot.slane %v957, 2
      %v959 = vadd.f32 %v957, %v958
      %v960 = vrot.slane %v959, 1
      %v961 = vadd.f32 %v959, %v960
      %v962 = vsel %vm448, %v910, 0.0
      %v963 = vrot.slane %v962, 4
      %v964 = vadd.f32 %v962, %v963
      %v965 = vrot.slane %v964, 2
      %v966 = vadd.f32 %v964, %v965
      %v967 = vrot.slane %v966, 1
      %v968 = vadd.f32 %v966, %v967
      %v969 = vsel %vm448, %v911, 0.0
      %v970 = vrot.slane %v969, 4
      %v971 = vadd.f32 %v969, %v970
      %v972 = vrot.slane %v971, 2
      %v973 = vadd.f32 %v971, %v972
      %v974 = vrot.slane %v973, 1
      %v975 = vadd.f32 %v973, %v974
      %v976 = vsel %vm448, %v912, 0.0
      %v977 = vrot.slane %v976, 4
      %v978 = vadd.f32 %v976, %v977
      %v979 = vrot.slane %v978, 2
      %v980 = vadd.f32 %v978, %v979
      %v981 = vrot.slane %v980, 1
      %v982 = vadd.f32 %v980, %v981
      %v983 = vsel %vm448, %v913, 0.0
      %v984 = vrot.slane %v983, 4
      %v985 = vadd.f32 %v983, %v984
      %v986 = vrot.slane %v985, 2
      %v987 = vadd.f32 %v985, %v986
      %v988 = vrot.slane %v987, 1
      %v989 = vadd.f32 %v987, %v988
      %v990 = vsel %vm448, %v914, 0.0
      %v991 = vrot.slane %v990, 4
      %v992 = vadd.f32 %v990, %v991
      %v993 = vrot.slane %v992, 2
      %v994 = vadd.f32 %v992, %v993
      %v995 = vrot.slane %v994, 1
      %v996 = vadd.f32 %v994, %v995
      %v997 = vsel %vm448, %v915, 0.0
      %v998 = vrot.slane %v997, 4
      %v999 = vadd.f32 %v997, %v998
      %v1000 = vrot.slane %v999, 2
      %v1001 = vadd.f32 %v999, %v1000
      %v1002 = vrot.slane %v1001, 1
      %v1003 = vadd.f32 %v1001, %v1002
      %v1004 = vsel %vm448, %v916, 0.0
      %v1005 = vrot.slane %v1004, 4
      %v1006 = vadd.f32 %v1004, %v1005
      %v1007 = vrot.slane %v1006, 2
      %v1008 = vadd.f32 %v1006, %v1007
      %v1009 = vrot.slane %v1008, 1
      %v1010 = vadd.f32 %v1008, %v1009
      %v1011 = vsel %vm448, %v917, 0.0
      %v1012 = vrot.slane %v1011, 4
      %v1013 = vadd.f32 %v1011, %v1012
      %v1014 = vrot.slane %v1013, 2
      %v1015 = vadd.f32 %v1013, %v1014
      %v1016 = vrot.slane %v1015, 1
      %v1017 = vadd.f32 %v1015, %v1016
      %v1018 = vsel %vm448, %v918, 0.0
      %v1019 = vrot.slane %v1018, 4
      %v1020 = vadd.f32 %v1018, %v1019
      %v1021 = vrot.slane %v1020, 2
      %v1022 = vadd.f32 %v1020, %v1021
      %v1023 = vrot.slane %v1022, 1
      %v1024 = vadd.f32 %v1022, %v1023
      %v1025 = vsel %vm448, %v919, 0.0
      %v1026 = vrot.slane %v1025, 4
      %v1027 = vadd.f32 %v1025, %v1026
      %v1028 = vrot.slane %v1027, 2
      %v1029 = vadd.f32 %v1027, %v1028
      %v1030 = vrot.slane %v1029, 1
      %v1031 = vadd.f32 %v1029, %v1030
      %1032 = vrot.lane.b32.xlu0 %v275, 124
      %v1033 = vpop.permute.xlu0 %1032
      %1034 = vrot.lane.b32.xlu0 %v276, 124
      %v1035 = vpop.permute.xlu0 %1034
      %v1052 = vsel %vm577, %v933, %v926
      %v1053 = vsel %vm579, %v940, %v1052
      %v1054 = vsel %vm581, %v947, %v1053
      %v1055 = vsel %vm583, %v954, %v1054
      %v1056 = vsel %vm585, %v961, %v1055
      %v1057 = vsel %vm587, %v968, %v1056
      %v1058 = vsel %vm589, %v975, %v1057
      %v1059 = vsel %vm577, %v989, %v982
      %v1060 = vsel %vm579, %v996, %v1059
      %v1061 = vsel %vm581, %v1003, %v1060
      %v1062 = vsel %vm583, %v1010, %v1061
      %v1063 = vsel %vm585, %v1017, %v1062
      %v1064 = vsel %vm587, %v1024, %v1063
      %v1065 = vsel %vm589, %v1031, %v1064
      %v1068 = vsel %vm600, %v1033, 0
      %v1070 = vsel %vm600, %v1035, 0
      %v1073 = vsel %vm600, %v810, 0
      %v1075 = vsel %vm600, %v805, 0
      %v1078 = vsel %vm600, %v811, 0
      %1080 = vmatprep.subr.mxu0 0.0
      %1081 = vmatpush1.xpose.msra.mxu0 0.0
      %1082 = vmatprep.subr.mxu0 0.0
      %1083 = vmatpush1.xpose.msra.mxu0 0.0
      %1084 = vmatprep.subr.mxu0 0.0
      %1085 = vmatpush1.xpose.msra.mxu0 0.0
      %1086 = vmatprep.subr.mxu0 0.0
      %1087 = vmatpush1.xpose.msra.mxu0 0.0
      %1088 = vmatprep.subr.mxu0 0.0
      %1089 = vmatpush1.xpose.msra.mxu0 0.0
      %1090 = vmatprep.subr.mxu0 0.0
      %1091 = vmatpush1.xpose.msra.mxu0 0.0
      %1092 = vmatprep.subr.mxu0 0.0
      %1093 = vmatpush1.xpose.msra.mxu0 0.0
      %1094 = vmatprep.subr.mxu0 0.0
      %1095 = vmatpush1.xpose.msra.mxu0 0.0
      %1096 = vmatprep.subr.mxu0 0.0
      %1097 = vmatpush1.xpose.msra.mxu0 0.0
      %1098 = vmatprep.subr.mxu0 0.0
      %1099 = vmatpush1.xpose.msra.mxu0 0.0
      %1100 = vmatprep.subr.mxu0 0.0
      %1101 = vmatpush1.xpose.msra.mxu0 0.0
      %1102 = vmatprep.subr.mxu0 0.0
      %1103 = vmatpush1.xpose.msra.mxu0 %v606
      %1104 = vmatprep.subr.mxu0 0.0
      %1105 = vmatpush1.xpose.msra.mxu0 %v1078
      %1106 = vmatprep.subr.mxu0 0.0
      %1107 = vmatpush1.xpose.msra.mxu0 %v1075
      %1108 = vmatprep.subr.mxu0 0.0
      %1109 = vmatpush1.xpose.msra.mxu0 %v1073
      %1110 = vmatprep.subr.mxu0 0.0
      %1111 = vmatpush1.xpose.msra.mxu0 %v606
      %1112 = vmatprep.subr.mxu0 0.0
      %1113 = vmatpush2.xpose.msra.mxu0 0.0
      %1114 = vmatprep.subr.mxu0 0.0
      %1115 = vmatpush2.xpose.msra.mxu0 0.0
      %1116 = vmatprep.subr.mxu0 0.0
      %1117 = vmatpush2.xpose.msra.mxu0 0.0
      %1118 = vmatprep.subr.mxu0 0.0
      %1119 = vmatpush2.xpose.msra.mxu0 0.0
      %1120 = vmatprep.subr.mxu0 0.0
      %1121 = vmatpush2.xpose.msra.mxu0 0.0
      %1122 = vmatprep.subr.mxu0 0.0
      %1123 = vmatpush2.xpose.msra.mxu0 0.0
      %1124 = vmatprep.subr.mxu0 0.0
      %1125 = vmatpush2.xpose.msra.mxu0 0.0
      %1126 = vmatprep.subr.mxu0 0.0
      %1127 = vmatpush2.xpose.msra.mxu0 0.0
      %1128 = vmatprep.subr.mxu0 0.0
      %1129 = vmatpush2.xpose.msra.mxu0 0.0
      %1130 = vmatprep.subr.mxu0 0.0
      %1131 = vmatpush2.xpose.msra.mxu0 0.0
      %1132 = vmatprep.subr.mxu0 0.0
      %1133 = vmatpush2.xpose.msra.mxu0 0.0
      %1134 = vmatprep.subr.mxu0 0.0
      %1135 = vmatpush2.xpose.msra.mxu0 0.0
      %1136 = vmatprep.subr.mxu0 0.0
      %1137 = vmatpush2.xpose.msra.mxu0 0.0
      %1138 = vmatprep.subr.mxu0 0.0
      %1139 = vmatpush2.xpose.msra.mxu0 0.0
      %1140 = vmatprep.subr.mxu0 0.0
      %1141 = vmatpush2.xpose.msra.mxu0 0.0
      %1142 = vmatprep.subr.mxu0 0.0
      %1143 = vmatpush2.xpose.msra.mxu0 0.0
      %1144 = vmatprep.mubr.f32.mxu0 0.0
      %1145 = vmatmul.mubr.f32.gmra.mxu0 %v1068
      %v1146 = vpop.f32.mrf.mxu0
      %v1147 = vadd.f32 %v1058, %v1146
      %v1148 = vpop.f32.mrf.mxu0
      %1149 = vmatprep.mubr.f32.mxu0 0.0
      %1150 = vmatmul.mubr.f32.gmra.mxu0 %v1070
      %v1151 = vpop.f32.mrf.mxu0
      %v1152 = vadd.f32 %v1065, %v1151
      %v1153 = vpop.f32.mrf.mxu0
      %1154 = vdwg.mxu0
      %v1155 = vmul.f32 %v1147, 0.17677669
      %v1156 = vmul.f32 %v1152, 0.17677669
      %v1157 = vsel %vm273, %v1155, -1e+30
      %v1158 = vsel %vm274, %v1156, -1e+30
      %v1159 = vsel %vm695, %v1157, -inf
      %1160 = vmax.xlane.f32.xlu0 %v1159
      %v1161 = vpop.xlane.xlu0 %1160
      %v1162 = vsel %vm695, %v1158, -inf
      %1163 = vmax.xlane.f32.xlu0 %v1162
      %v1164 = vpop.xlane.xlu0 %1163
      %v1165 = vsub.f32 %v1157, %v1161
      %v1166 = vsub.f32 %v1158, %v1164
      %v1167 = vmul.f32 %v1165, 1.442695
      %v1168 = vpow.pop %v1167
      %v1169 = vmul.f32 %v1166, 1.442695
      %v1170 = vpow.pop %v1169
      %v1171 = vsel %vm695, %v1168, 0.0
      %1172 = vadd.xlane.f32.xlu0 %v1171
      %v1173 = vpop.xlane.xlu0 %1172
      %v1174 = vsel %vm695, %v1170, 0.0
      %1175 = vadd.xlane.f32.xlu0 %v1174
      %v1176 = vpop.xlane.xlu0 %1175
      %v1177 = vrcp.pop %v1173
      %v1178 = vmul.f32 %v1168, %v1177
      %v1179 = vrcp.pop %v1176
      %v1180 = vmul.f32 %v1170, %v1179
      %v1182 = vsel %vm695, %v1178, 0
      %v1185 = vsel %vm695, %v1180, 0
      %1187 = vmatprep.subr.mxu0 0.0
      %1188 = vmatpush1.msra.mxu0 0.0
      %1189 = vmatprep.subr.mxu0 0.0
      %1190 = vmatpush1.msra.mxu0 0.0
      %1191 = vmatprep.subr.mxu0 0.0
      %1192 = vmatpush1.msra.mxu0 0.0
      %1193 = vmatprep.subr.mxu0 0.0
      %1194 = vmatpush1.msra.mxu0 0.0
      %1195 = vmatprep.subr.mxu0 0.0
      %1196 = vmatpush1.msra.mxu0 0.0
      %1197 = vmatprep.subr.mxu0 0.0
      %1198 = vmatpush1.msra.mxu0 0.0
      %1199 = vmatprep.subr.mxu0 0.0
      %1200 = vmatpush1.msra.mxu0 0.0
      %1201 = vmatprep.subr.mxu0 0.0
      %1202 = vmatpush1.msra.mxu0 0.0
      %1203 = vmatprep.subr.mxu0 0.0
      %1204 = vmatpush1.msra.mxu0 0.0
      %1205 = vmatprep.subr.mxu0 0.0
      %1206 = vmatpush1.msra.mxu0 0.0
      %1207 = vmatprep.subr.mxu0 0.0
      %1208 = vmatpush1.msra.mxu0 0.0
      %1209 = vmatprep.subr.mxu0 0.0
      %1210 = vmatpush1.msra.mxu0 %v725
      %1211 = vmatprep.subr.mxu0 0.0
      %1212 = vmatpush1.msra.mxu0 %v822
      %1213 = vmatprep.subr.mxu0 0.0
      %1214 = vmatpush1.msra.mxu0 %v815
      %1215 = vmatprep.subr.mxu0 0.0
      %1216 = vmatpush1.msra.mxu0 %v821
      %1217 = vmatprep.subr.mxu0 0.0
      %1218 = vmatpush1.msra.mxu0 0.0
      %1219 = vmatprep.subr.mxu0 0.0
      %1220 = vmatpush2.msra.mxu0 0.0
      %1221 = vmatprep.subr.mxu0 0.0
      %1222 = vmatpush2.msra.mxu0 0.0
      %1223 = vmatprep.subr.mxu0 0.0
      %1224 = vmatpush2.msra.mxu0 0.0
      %1225 = vmatprep.subr.mxu0 0.0
      %1226 = vmatpush2.msra.mxu0 0.0
      %1227 = vmatprep.subr.mxu0 0.0
      %1228 = vmatpush2.msra.mxu0 0.0
      %1229 = vmatprep.subr.mxu0 0.0
      %1230 = vmatpush2.msra.mxu0 0.0
      %1231 = vmatprep.subr.mxu0 0.0
      %1232 = vmatpush2.msra.mxu0 0.0
      %1233 = vmatprep.subr.mxu0 0.0
      %1234 = vmatpush2.msra.mxu0 0.0
      %1235 = vmatprep.subr.mxu0 0.0
      %1236 = vmatpush2.msra.mxu0 0.0
      %1237 = vmatprep.subr.mxu0 0.0
      %1238 = vmatpush2.msra.mxu0 0.0
      %1239 = vmatprep.subr.mxu0 0.0
      %1240 = vmatpush2.msra.mxu0 0.0
      %1241 = vmatprep.subr.mxu0 0.0
      %1242 = vmatpush2.msra.mxu0 0.0
      %1243 = vmatprep.subr.mxu0 0.0
      %1244 = vmatpush2.msra.mxu0 0.0
      %1245 = vmatprep.subr.mxu0 0.0
      %1246 = vmatpush2.msra.mxu0 0.0
      %1247 = vmatprep.subr.mxu0 0.0
      %1248 = vmatpush2.msra.mxu0 0.0
      %1249 = vmatprep.subr.mxu0 0.0
      %1250 = vmatpush2.msra.mxu0 0.0
      %1251 = vmatprep.mubr.f32.mxu0 0.0
      %1252 = vmatmul.mubr.f32.gmra.mxu0 %v1182
      %v1253 = vpop.f32.mrf.mxu0
      %v1254 = vadd.f32 0.0, %v1253
      %v1255 = vpop.f32.mrf.mxu0
      %1256 = vmatprep.mubr.f32.mxu0 0.0
      %1257 = vmatmul.mubr.f32.gmra.mxu0 %v1185
      %v1258 = vpop.f32.mrf.mxu0
      %v1259 = vadd.f32 0.0, %v1258
      %v1260 = vpop.f32.mrf.mxu0
      %1261 = vdwg.mxu0
      %1262 = vrot.lane.b32.xlu0 %v280, 88
      %v1263 = vpop.permute.xlu0 %1262
      %1264 = vrot.lane.b32.xlu0 %v282, 88
      %v1265 = vpop.permute.xlu0 %1264
      %1266 = vrot.lane.b32.xlu0 %v281, 88
      %v1267 = vpop.permute.xlu0 %1266
      %v1270 = vsel %vm279, 0.0, %v1263
      %v1271 = vsel %vm279, %v1267, 0.0
      %1272 = vrot.lane.b32.xlu0 %v280, 56
      %v1273 = vpop.permute.xlu0 %1272
      %1274 = vrot.lane.b32.xlu0 %v282, 56
      %v1275 = vpop.permute.xlu0 %1274
      %1276 = vrot.lane.b32.xlu0 %v281, 56
      %v1277 = vpop.permute.xlu0 %1276
      %v1281 = vsel %vm279, 0.0, %v1273
      %v1282 = vsel %vm279, %v1277, 0.0
      %s1284 = sor.u32 256, 8
      %1285 = vbcast.lane.b32.xlu0 %v307, %s1284
      %v1286 = vpop.permute.xlu0 %1285
      %s1288 = sor.u32 256, 8
      %1289 = vbcast.lane.b32.xlu0 %v314, %s1288
      %v1290 = vpop.permute.xlu0 %1289
      %s1292 = sor.u32 256, 8
      %1293 = vbcast.lane.b32.xlu0 %v321, %s1292
      %v1294 = vpop.permute.xlu0 %1293
      %s1296 = sor.u32 256, 8
      %1297 = vbcast.lane.b32.xlu0 %v328, %s1296
      %v1298 = vpop.permute.xlu0 %1297
      %s1300 = sor.u32 256, 8
      %1301 = vbcast.lane.b32.xlu0 %v335, %s1300
      %v1302 = vpop.permute.xlu0 %1301
      %s1304 = sor.u32 256, 8
      %1305 = vbcast.lane.b32.xlu0 %v342, %s1304
      %v1306 = vpop.permute.xlu0 %1305
      %s1308 = sor.u32 256, 8
      %1309 = vbcast.lane.b32.xlu0 %v349, %s1308
      %v1310 = vpop.permute.xlu0 %1309
      %s1312 = sor.u32 256, 8
      %1313 = vbcast.lane.b32.xlu0 %v356, %s1312
      %v1314 = vpop.permute.xlu0 %1313
      %s1316 = sor.u32 256, 8
      %1317 = vbcast.lane.b32.xlu0 %v363, %s1316
      %v1318 = vpop.permute.xlu0 %1317
      %s1320 = sor.u32 256, 8
      %1321 = vbcast.lane.b32.xlu0 %v370, %s1320
      %v1322 = vpop.permute.xlu0 %1321
      %s1324 = sor.u32 256, 8
      %1325 = vbcast.lane.b32.xlu0 %v377, %s1324
      %v1326 = vpop.permute.xlu0 %1325
      %s1328 = sor.u32 256, 8
      %1329 = vbcast.lane.b32.xlu0 %v384, %s1328
      %v1330 = vpop.permute.xlu0 %1329
      %s1332 = sor.u32 256, 8
      %1333 = vbcast.lane.b32.xlu0 %v391, %s1332
      %v1334 = vpop.permute.xlu0 %1333
      %s1336 = sor.u32 256, 8
      %1337 = vbcast.lane.b32.xlu0 %v398, %s1336
      %v1338 = vpop.permute.xlu0 %1337
      %s1340 = sor.u32 256, 8
      %1341 = vbcast.lane.b32.xlu0 %v405, %s1340
      %v1342 = vpop.permute.xlu0 %1341
      %s1344 = sor.u32 256, 8
      %1345 = vbcast.lane.b32.xlu0 %v412, %s1344
      %v1346 = vpop.permute.xlu0 %1345
      %s1347 = scalar_lea.vmem %s2, 128
      %v1348 = vld [vmem:[%s1347] sm:$0xf]
      %v1349 = vld [vmem:[%s1347 + $0x4] sm:$0xf]
      %v1350 = vld [vmem:[%s1347 + $0x8] sm:$0xf]
      %v1351 = vld [vmem:[%s1347 + $0xc] sm:$0xf]
      %v1352 = vld [vmem:[%s1347 + $0x10] sm:$0xf]
      %v1353 = vld [vmem:[%s1347 + $0x14] sm:$0xf]
      %v1354 = vld [vmem:[%s1347 + $0x18] sm:$0xf]
      %v1355 = vld [vmem:[%s1347 + $0x1c] sm:$0xf]
      %v1356 = vld [vmem:[%s1347 + $0x20] sm:$0xf]
      %v1357 = vld [vmem:[%s1347 + $0x24] sm:$0xf]
      %v1358 = vld [vmem:[%s1347 + $0x28] sm:$0xf]
      %v1359 = vld [vmem:[%s1347 + $0x2c] sm:$0xf]
      %v1360 = vld [vmem:[%s1347 + $0x30] sm:$0xf]
      %v1361 = vld [vmem:[%s1347 + $0x34] sm:$0xf]
      %v1362 = vld [vmem:[%s1347 + $0x38] sm:$0xf]
      %v1363 = vld [vmem:[%s1347 + $0x3c] sm:$0xf]
      %v1364 = vmul.f32 %v1286, %v1348
      %v1365 = vmul.f32 %v1290, %v1349
      %v1366 = vmul.f32 %v1294, %v1350
      %v1367 = vmul.f32 %v1298, %v1351
      %v1368 = vmul.f32 %v1302, %v1352
      %v1369 = vmul.f32 %v1306, %v1353
      %v1370 = vmul.f32 %v1310, %v1354
      %v1371 = vmul.f32 %v1314, %v1355
      %v1372 = vmul.f32 %v1318, %v1356
      %v1373 = vmul.f32 %v1322, %v1357
      %v1374 = vmul.f32 %v1326, %v1358
      %v1375 = vmul.f32 %v1330, %v1359
      %v1376 = vmul.f32 %v1334, %v1360
      %v1377 = vmul.f32 %v1338, %v1361
      %v1378 = vmul.f32 %v1342, %v1362
      %v1379 = vmul.f32 %v1346, %v1363
      %v1380 = vsel %vm448, %v1364, 0.0
      %v1381 = vrot.slane %v1380, 4
      %v1382 = vadd.f32 %v1380, %v1381
      %v1383 = vrot.slane %v1382, 2
      %v1384 = vadd.f32 %v1382, %v1383
      %v1385 = vrot.slane %v1384, 1
      %v1386 = vadd.f32 %v1384, %v1385
      %v1387 = vsel %vm448, %v1365, 0.0
      %v1388 = vrot.slane %v1387, 4
      %v1389 = vadd.f32 %v1387, %v1388
      %v1390 = vrot.slane %v1389, 2
      %v1391 = vadd.f32 %v1389, %v1390
      %v1392 = vrot.slane %v1391, 1
      %v1393 = vadd.f32 %v1391, %v1392
      %v1394 = vsel %vm448, %v1366, 0.0
      %v1395 = vrot.slane %v1394, 4
      %v1396 = vadd.f32 %v1394, %v1395
      %v1397 = vrot.slane %v1396, 2
      %v1398 = vadd.f32 %v1396, %v1397
      %v1399 = vrot.slane %v1398, 1
      %v1400 = vadd.f32 %v1398, %v1399
      %v1401 = vsel %vm448, %v1367, 0.0
      %v1402 = vrot.slane %v1401, 4
      %v1403 = vadd.f32 %v1401, %v1402
      %v1404 = vrot.slane %v1403, 2
      %v1405 = vadd.f32 %v1403, %v1404
      %v1406 = vrot.slane %v1405, 1
      %v1407 = vadd.f32 %v1405, %v1406
      %v1408 = vsel %vm448, %v1368, 0.0
      %v1409 = vrot.slane %v1408, 4
      %v1410 = vadd.f32 %v1408, %v1409
      %v1411 = vrot.slane %v1410, 2
      %v1412 = vadd.f32 %v1410, %v1411
      %v1413 = vrot.slane %v1412, 1
      %v1414 = vadd.f32 %v1412, %v1413
      %v1415 = vsel %vm448, %v1369, 0.0
      %v1416 = vrot.slane %v1415, 4
      %v1417 = vadd.f32 %v1415, %v1416
      %v1418 = vrot.slane %v1417, 2
      %v1419 = vadd.f32 %v1417, %v1418
      %v1420 = vrot.slane %v1419, 1
      %v1421 = vadd.f32 %v1419, %v1420
      %v1422 = vsel %vm448, %v1370, 0.0
      %v1423 = vrot.slane %v1422, 4
      %v1424 = vadd.f32 %v1422, %v1423
      %v1425 = vrot.slane %v1424, 2
      %v1426 = vadd.f32 %v1424, %v1425
      %v1427 = vrot.slane %v1426, 1
      %v1428 = vadd.f32 %v1426, %v1427
      %v1429 = vsel %vm448, %v1371, 0.0
      %v1430 = vrot.slane %v1429, 4
      %v1431 = vadd.f32 %v1429, %v1430
      %v1432 = vrot.slane %v1431, 2
      %v1433 = vadd.f32 %v1431, %v1432
      %v1434 = vrot.slane %v1433, 1
      %v1435 = vadd.f32 %v1433, %v1434
      %v1436 = vsel %vm448, %v1372, 0.0
      %v1437 = vrot.slane %v1436, 4
      %v1438 = vadd.f32 %v1436, %v1437
      %v1439 = vrot.slane %v1438, 2
      %v1440 = vadd.f32 %v1438, %v1439
      %v1441 = vrot.slane %v1440, 1
      %v1442 = vadd.f32 %v1440, %v1441
      %v1443 = vsel %vm448, %v1373, 0.0
      %v1444 = vrot.slane %v1443, 4
      %v1445 = vadd.f32 %v1443, %v1444
      %v1446 = vrot.slane %v1445, 2
      %v1447 = vadd.f32 %v1445, %v1446
      %v1448 = vrot.slane %v1447, 1
      %v1449 = vadd.f32 %v1447, %v1448
      %v1450 = vsel %vm448, %v1374, 0.0
      %v1451 = vrot.slane %v1450, 4
      %v1452 = vadd.f32 %v1450, %v1451
      %v1453 = vrot.slane %v1452, 2
      %v1454 = vadd.f32 %v1452, %v1453
      %v1455 = vrot.slane %v1454, 1
      %v1456 = vadd.f32 %v1454, %v1455
      %v1457 = vsel %vm448, %v1375, 0.0
      %v1458 = vrot.slane %v1457, 4
      %v1459 = vadd.f32 %v1457, %v1458
      %v1460 = vrot.slane %v1459, 2
      %v1461 = vadd.f32 %v1459, %v1460
      %v1462 = vrot.slane %v1461, 1
      %v1463 = vadd.f32 %v1461, %v1462
      %v1464 = vsel %vm448, %v1376, 0.0
      %v1465 = vrot.slane %v1464, 4
      %v1466 = vadd.f32 %v1464, %v1465
      %v1467 = vrot.slane %v1466, 2
      %v1468 = vadd.f32 %v1466, %v1467
      %v1469 = vrot.slane %v1468, 1
      %v1470 = vadd.f32 %v1468, %v1469
      %v1471 = vsel %vm448, %v1377, 0.0
      %v1472 = vrot.slane %v1471, 4
      %v1473 = vadd.f32 %v1471, %v1472
      %v1474 = vrot.slane %v1473, 2
      %v1475 = vadd.f32 %v1473, %v1474
      %v1476 = vrot.slane %v1475, 1
      %v1477 = vadd.f32 %v1475, %v1476
      %v1478 = vsel %vm448, %v1378, 0.0
      %v1479 = vrot.slane %v1478, 4
      %v1480 = vadd.f32 %v1478, %v1479
      %v1481 = vrot.slane %v1480, 2
      %v1482 = vadd.f32 %v1480, %v1481
      %v1483 = vrot.slane %v1482, 1
      %v1484 = vadd.f32 %v1482, %v1483
      %v1485 = vsel %vm448, %v1379, 0.0
      %v1486 = vrot.slane %v1485, 4
      %v1487 = vadd.f32 %v1485, %v1486
      %v1488 = vrot.slane %v1487, 2
      %v1489 = vadd.f32 %v1487, %v1488
      %v1490 = vrot.slane %v1489, 1
      %v1491 = vadd.f32 %v1489, %v1490
      %1492 = vrot.lane.b32.xlu0 %v275, 120
      %v1493 = vpop.permute.xlu0 %1492
      %1494 = vrot.lane.b32.xlu0 %v276, 120
      %v1495 = vpop.permute.xlu0 %1494
      %v1512 = vsel %vm577, %v1393, %v1386
      %v1513 = vsel %vm579, %v1400, %v1512
      %v1514 = vsel %vm581, %v1407, %v1513
      %v1515 = vsel %vm583, %v1414, %v1514
      %v1516 = vsel %vm585, %v1421, %v1515
      %v1517 = vsel %vm587, %v1428, %v1516
      %v1518 = vsel %vm589, %v1435, %v1517
      %v1519 = vsel %vm577, %v1449, %v1442
      %v1520 = vsel %vm579, %v1456, %v1519
      %v1521 = vsel %vm581, %v1463, %v1520
      %v1522 = vsel %vm583, %v1470, %v1521
      %v1523 = vsel %vm585, %v1477, %v1522
      %v1524 = vsel %vm587, %v1484, %v1523
      %v1525 = vsel %vm589, %v1491, %v1524
      %v1528 = vsel %vm600, %v1493, 0
      %v1530 = vsel %vm600, %v1495, 0
      %v1533 = vsel %vm600, %v1270, 0
      %v1535 = vsel %vm600, %v1265, 0
      %v1538 = vsel %vm600, %v1271, 0
      %1540 = vmatprep.subr.mxu0 0.0
      %1541 = vmatpush1.xpose.msra.mxu0 0.0
      %1542 = vmatprep.subr.mxu0 0.0
      %1543 = vmatpush1.xpose.msra.mxu0 0.0
      %1544 = vmatprep.subr.mxu0 0.0
      %1545 = vmatpush1.xpose.msra.mxu0 0.0
      %1546 = vmatprep.subr.mxu0 0.0
      %1547 = vmatpush1.xpose.msra.mxu0 0.0
      %1548 = vmatprep.subr.mxu0 0.0
      %1549 = vmatpush1.xpose.msra.mxu0 0.0
      %1550 = vmatprep.subr.mxu0 0.0
      %1551 = vmatpush1.xpose.msra.mxu0 0.0
      %1552 = vmatprep.subr.mxu0 0.0
      %1553 = vmatpush1.xpose.msra.mxu0 0.0
      %1554 = vmatprep.subr.mxu0 0.0
      %1555 = vmatpush1.xpose.msra.mxu0 0.0
      %1556 = vmatprep.subr.mxu0 0.0
      %1557 = vmatpush1.xpose.msra.mxu0 0.0
      %1558 = vmatprep.subr.mxu0 0.0
      %1559 = vmatpush1.xpose.msra.mxu0 0.0
      %1560 = vmatprep.subr.mxu0 0.0
      %1561 = vmatpush1.xpose.msra.mxu0 0.0
      %1562 = vmatprep.subr.mxu0 0.0
      %1563 = vmatpush1.xpose.msra.mxu0 %v606
      %1564 = vmatprep.subr.mxu0 0.0
      %1565 = vmatpush1.xpose.msra.mxu0 %v1538
      %1566 = vmatprep.subr.mxu0 0.0
      %1567 = vmatpush1.xpose.msra.mxu0 %v1535
      %1568 = vmatprep.subr.mxu0 0.0
      %1569 = vmatpush1.xpose.msra.mxu0 %v1533
      %1570 = vmatprep.subr.mxu0 0.0
      %1571 = vmatpush1.xpose.msra.mxu0 %v606
      %1572 = vmatprep.subr.mxu0 0.0
      %1573 = vmatpush2.xpose.msra.mxu0 0.0
      %1574 = vmatprep.subr.mxu0 0.0
      %1575 = vmatpush2.xpose.msra.mxu0 0.0
      %1576 = vmatprep.subr.mxu0 0.0
      %1577 = vmatpush2.xpose.msra.mxu0 0.0
      %1578 = vmatprep.subr.mxu0 0.0
      %1579 = vmatpush2.xpose.msra.mxu0 0.0
      %1580 = vmatprep.subr.mxu0 0.0
      %1581 = vmatpush2.xpose.msra.mxu0 0.0
      %1582 = vmatprep.subr.mxu0 0.0
      %1583 = vmatpush2.xpose.msra.mxu0 0.0
      %1584 = vmatprep.subr.mxu0 0.0
      %1585 = vmatpush2.xpose.msra.mxu0 0.0
      %1586 = vmatprep.subr.mxu0 0.0
      %1587 = vmatpush2.xpose.msra.mxu0 0.0
      %1588 = vmatprep.subr.mxu0 0.0
      %1589 = vmatpush2.xpose.msra.mxu0 0.0
      %1590 = vmatprep.subr.mxu0 0.0
      %1591 = vmatpush2.xpose.msra.mxu0 0.0
      %1592 = vmatprep.subr.mxu0 0.0
      %1593 = vmatpush2.xpose.msra.mxu0 0.0
      %1594 = vmatprep.subr.mxu0 0.0
      %1595 = vmatpush2.xpose.msra.mxu0 0.0
      %1596 = vmatprep.subr.mxu0 0.0
      %1597 = vmatpush2.xpose.msra.mxu0 0.0
      %1598 = vmatprep.subr.mxu0 0.0
      %1599 = vmatpush2.xpose.msra.mxu0 0.0
      %1600 = vmatprep.subr.mxu0 0.0
      %1601 = vmatpush2.xpose.msra.mxu0 0.0
      %1602 = vmatprep.subr.mxu0 0.0
      %1603 = vmatpush2.xpose.msra.mxu0 0.0
      %1604 = vmatprep.mubr.f32.mxu0 0.0
      %1605 = vmatmul.mubr.f32.gmra.mxu0 %v1528
      %v1606 = vpop.f32.mrf.mxu0
      %v1607 = vadd.f32 %v1518, %v1606
      %v1608 = vpop.f32.mrf.mxu0
      %1609 = vmatprep.mubr.f32.mxu0 0.0
      %1610 = vmatmul.mubr.f32.gmra.mxu0 %v1530
      %v1611 = vpop.f32.mrf.mxu0
      %v1612 = vadd.f32 %v1525, %v1611
      %v1613 = vpop.f32.mrf.mxu0
      %1614 = vdwg.mxu0
      %v1615 = vmul.f32 %v1607, 0.17677669
      %v1616 = vmul.f32 %v1612, 0.17677669
      %v1617 = vsel %vm273, %v1615, -1e+30
      %v1618 = vsel %vm274, %v1616, -1e+30
      %v1619 = vsel %vm695, %v1617, -inf
      %1620 = vmax.xlane.f32.xlu0 %v1619
      %v1621 = vpop.xlane.xlu0 %1620
      %v1622 = vsel %vm695, %v1618, -inf
      %1623 = vmax.xlane.f32.xlu0 %v1622
      %v1624 = vpop.xlane.xlu0 %1623
      %v1625 = vsub.f32 %v1617, %v1621
      %v1626 = vsub.f32 %v1618, %v1624
      %v1627 = vmul.f32 %v1625, 1.442695
      %v1628 = vpow.pop %v1627
      %v1629 = vmul.f32 %v1626, 1.442695
      %v1630 = vpow.pop %v1629
      %v1631 = vsel %vm695, %v1628, 0.0
      %1632 = vadd.xlane.f32.xlu0 %v1631
      %v1633 = vpop.xlane.xlu0 %1632
      %v1634 = vsel %vm695, %v1630, 0.0
      %1635 = vadd.xlane.f32.xlu0 %v1634
      %v1636 = vpop.xlane.xlu0 %1635
      %v1637 = vrcp.pop %v1633
      %v1638 = vmul.f32 %v1628, %v1637
      %v1639 = vrcp.pop %v1636
      %v1640 = vmul.f32 %v1630, %v1639
      %v1642 = vsel %vm695, %v1638, 0
      %v1645 = vsel %vm695, %v1640, 0
      %1647 = vmatprep.subr.mxu0 0.0
      %1648 = vmatpush1.msra.mxu0 0.0
      %1649 = vmatprep.subr.mxu0 0.0
      %1650 = vmatpush1.msra.mxu0 0.0
      %1651 = vmatprep.subr.mxu0 0.0
      %1652 = vmatpush1.msra.mxu0 0.0
      %1653 = vmatprep.subr.mxu0 0.0
      %1654 = vmatpush1.msra.mxu0 0.0
      %1655 = vmatprep.subr.mxu0 0.0
      %1656 = vmatpush1.msra.mxu0 0.0
      %1657 = vmatprep.subr.mxu0 0.0
      %1658 = vmatpush1.msra.mxu0 0.0
      %1659 = vmatprep.subr.mxu0 0.0
      %1660 = vmatpush1.msra.mxu0 0.0
      %1661 = vmatprep.subr.mxu0 0.0
      %1662 = vmatpush1.msra.mxu0 0.0
      %1663 = vmatprep.subr.mxu0 0.0
      %1664 = vmatpush1.msra.mxu0 0.0
      %1665 = vmatprep.subr.mxu0 0.0
      %1666 = vmatpush1.msra.mxu0 0.0
      %1667 = vmatprep.subr.mxu0 0.0
      %1668 = vmatpush1.msra.mxu0 0.0
      %1669 = vmatprep.subr.mxu0 0.0
      %1670 = vmatpush1.msra.mxu0 %v725
      %1671 = vmatprep.subr.mxu0 0.0
      %1672 = vmatpush1.msra.mxu0 %v1282
      %1673 = vmatprep.subr.mxu0 0.0
      %1674 = vmatpush1.msra.mxu0 %v1275
      %1675 = vmatprep.subr.mxu0 0.0
      %1676 = vmatpush1.msra.mxu0 %v1281
      %1677 = vmatprep.subr.mxu0 0.0
      %1678 = vmatpush1.msra.mxu0 0.0
      %1679 = vmatprep.subr.mxu0 0.0
      %1680 = vmatpush2.msra.mxu0 0.0
      %1681 = vmatprep.subr.mxu0 0.0
      %1682 = vmatpush2.msra.mxu0 0.0
      %1683 = vmatprep.subr.mxu0 0.0
      %1684 = vmatpush2.msra.mxu0 0.0
      %1685 = vmatprep.subr.mxu0 0.0
      %1686 = vmatpush2.msra.mxu0 0.0
      %1687 = vmatprep.subr.mxu0 0.0
      %1688 = vmatpush2.msra.mxu0 0.0
      %1689 = vmatprep.subr.mxu0 0.0
      %1690 = vmatpush2.msra.mxu0 0.0
      %1691 = vmatprep.subr.mxu0 0.0
      %1692 = vmatpush2.msra.mxu0 0.0
      %1693 = vmatprep.subr.mxu0 0.0
      %1694 = vmatpush2.msra.mxu0 0.0
      %1695 = vmatprep.subr.mxu0 0.0
      %1696 = vmatpush2.msra.mxu0 0.0
      %1697 = vmatprep.subr.mxu0 0.0
      %1698 = vmatpush2.msra.mxu0 0.0
      %1699 = vmatprep.subr.mxu0 0.0
      %1700 = vmatpush2.msra.mxu0 0.0
      %1701 = vmatprep.subr.mxu0 0.0
      %1702 = vmatpush2.msra.mxu0 0.0
      %1703 = vmatprep.subr.mxu0 0.0
      %1704 = vmatpush2.msra.mxu0 0.0
      %1705 = vmatprep.subr.mxu0 0.0
      %1706 = vmatpush2.msra.mxu0 0.0
      %1707 = vmatprep.subr.mxu0 0.0
      %1708 = vmatpush2.msra.mxu0 0.0
      %1709 = vmatprep.subr.mxu0 0.0
      %1710 = vmatpush2.msra.mxu0 0.0
      %1711 = vmatprep.mubr.f32.mxu0 0.0
      %1712 = vmatmul.mubr.f32.gmra.mxu0 %v1642
      %v1713 = vpop.f32.mrf.mxu0
      %v1714 = vadd.f32 0.0, %v1713
      %v1715 = vpop.f32.mrf.mxu0
      %1716 = vmatprep.mubr.f32.mxu0 0.0
      %1717 = vmatmul.mubr.f32.gmra.mxu0 %v1645
      %v1718 = vpop.f32.mrf.mxu0
      %v1719 = vadd.f32 0.0, %v1718
      %v1720 = vpop.f32.mrf.mxu0
      %1721 = vdwg.mxu0
      %1722 = vrot.lane.b32.xlu0 %v280, 84
      %v1723 = vpop.permute.xlu0 %1722
      %1724 = vrot.lane.b32.xlu0 %v282, 84
      %v1725 = vpop.permute.xlu0 %1724
      %1726 = vrot.lane.b32.xlu0 %v281, 84
      %v1727 = vpop.permute.xlu0 %1726
      %v1730 = vsel %vm279, 0.0, %v1723
      %v1731 = vsel %vm279, %v1727, 0.0
      %1732 = vrot.lane.b32.xlu0 %v280, 52
      %v1733 = vpop.permute.xlu0 %1732
      %1734 = vrot.lane.b32.xlu0 %v282, 52
      %v1735 = vpop.permute.xlu0 %1734
      %1736 = vrot.lane.b32.xlu0 %v281, 52
      %v1737 = vpop.permute.xlu0 %1736
      %v1741 = vsel %vm279, 0.0, %v1733
      %v1742 = vsel %vm279, %v1737, 0.0
      %s1744 = sor.u32 256, 12
      %1745 = vbcast.lane.b32.xlu0 %v307, %s1744
      %v1746 = vpop.permute.xlu0 %1745
      %s1748 = sor.u32 256, 12
      %1749 = vbcast.lane.b32.xlu0 %v314, %s1748
      %v1750 = vpop.permute.xlu0 %1749
      %s1752 = sor.u32 256, 12
      %1753 = vbcast.lane.b32.xlu0 %v321, %s1752
      %v1754 = vpop.permute.xlu0 %1753
      %s1756 = sor.u32 256, 12
      %1757 = vbcast.lane.b32.xlu0 %v328, %s1756
      %v1758 = vpop.permute.xlu0 %1757
      %s1760 = sor.u32 256, 12
      %1761 = vbcast.lane.b32.xlu0 %v335, %s1760
      %v1762 = vpop.permute.xlu0 %1761
      %s1764 = sor.u32 256, 12
      %1765 = vbcast.lane.b32.xlu0 %v342, %s1764
      %v1766 = vpop.permute.xlu0 %1765
      %s1768 = sor.u32 256, 12
      %1769 = vbcast.lane.b32.xlu0 %v349, %s1768
      %v1770 = vpop.permute.xlu0 %1769
      %s1772 = sor.u32 256, 12
      %1773 = vbcast.lane.b32.xlu0 %v356, %s1772
      %v1774 = vpop.permute.xlu0 %1773
      %s1776 = sor.u32 256, 12
      %1777 = vbcast.lane.b32.xlu0 %v363, %s1776
      %v1778 = vpop.permute.xlu0 %1777
      %s1780 = sor.u32 256, 12
      %1781 = vbcast.lane.b32.xlu0 %v370, %s1780
      %v1782 = vpop.permute.xlu0 %1781
      %s1784 = sor.u32 256, 12
      %1785 = vbcast.lane.b32.xlu0 %v377, %s1784
      %v1786 = vpop.permute.xlu0 %1785
      %s1788 = sor.u32 256, 12
      %1789 = vbcast.lane.b32.xlu0 %v384, %s1788
      %v1790 = vpop.permute.xlu0 %1789
      %s1792 = sor.u32 256, 12
      %1793 = vbcast.lane.b32.xlu0 %v391, %s1792
      %v1794 = vpop.permute.xlu0 %1793
      %s1796 = sor.u32 256, 12
      %1797 = vbcast.lane.b32.xlu0 %v398, %s1796
      %v1798 = vpop.permute.xlu0 %1797
      %s1800 = sor.u32 256, 12
      %1801 = vbcast.lane.b32.xlu0 %v405, %s1800
      %v1802 = vpop.permute.xlu0 %1801
      %s1804 = sor.u32 256, 12
      %1805 = vbcast.lane.b32.xlu0 %v412, %s1804
      %v1806 = vpop.permute.xlu0 %1805
      %s1807 = scalar_lea.vmem %s2, 192
      %v1808 = vld [vmem:[%s1807] sm:$0xf]
      %v1809 = vld [vmem:[%s1807 + $0x4] sm:$0xf]
      %v1810 = vld [vmem:[%s1807 + $0x8] sm:$0xf]
      %v1811 = vld [vmem:[%s1807 + $0xc] sm:$0xf]
      %v1812 = vld [vmem:[%s1807 + $0x10] sm:$0xf]
      %v1813 = vld [vmem:[%s1807 + $0x14] sm:$0xf]
      %v1814 = vld [vmem:[%s1807 + $0x18] sm:$0xf]
      %v1815 = vld [vmem:[%s1807 + $0x1c] sm:$0xf]
      %v1816 = vld [vmem:[%s1807 + $0x20] sm:$0xf]
      %v1817 = vld [vmem:[%s1807 + $0x24] sm:$0xf]
      %v1818 = vld [vmem:[%s1807 + $0x28] sm:$0xf]
      %v1819 = vld [vmem:[%s1807 + $0x2c] sm:$0xf]
      %v1820 = vld [vmem:[%s1807 + $0x30] sm:$0xf]
      %v1821 = vld [vmem:[%s1807 + $0x34] sm:$0xf]
      %v1822 = vld [vmem:[%s1807 + $0x38] sm:$0xf]
      %v1823 = vld [vmem:[%s1807 + $0x3c] sm:$0xf]
      %v1824 = vmul.f32 %v1746, %v1808
      %v1825 = vmul.f32 %v1750, %v1809
      %v1826 = vmul.f32 %v1754, %v1810
      %v1827 = vmul.f32 %v1758, %v1811
      %v1828 = vmul.f32 %v1762, %v1812
      %v1829 = vmul.f32 %v1766, %v1813
      %v1830 = vmul.f32 %v1770, %v1814
      %v1831 = vmul.f32 %v1774, %v1815
      %v1832 = vmul.f32 %v1778, %v1816
      %v1833 = vmul.f32 %v1782, %v1817
      %v1834 = vmul.f32 %v1786, %v1818
      %v1835 = vmul.f32 %v1790, %v1819
      %v1836 = vmul.f32 %v1794, %v1820
      %v1837 = vmul.f32 %v1798, %v1821
      %v1838 = vmul.f32 %v1802, %v1822
      %v1839 = vmul.f32 %v1806, %v1823
      %v1840 = vsel %vm448, %v1824, 0.0
      %v1841 = vrot.slane %v1840, 4
      %v1842 = vadd.f32 %v1840, %v1841
      %v1843 = vrot.slane %v1842, 2
      %v1844 = vadd.f32 %v1842, %v1843
      %v1845 = vrot.slane %v1844, 1
      %v1846 = vadd.f32 %v1844, %v1845
      %v1847 = vsel %vm448, %v1825, 0.0
      %v1848 = vrot.slane %v1847, 4
      %v1849 = vadd.f32 %v1847, %v1848
      %v1850 = vrot.slane %v1849, 2
      %v1851 = vadd.f32 %v1849, %v1850
      %v1852 = vrot.slane %v1851, 1
      %v1853 = vadd.f32 %v1851, %v1852
      %v1854 = vsel %vm448, %v1826, 0.0
      %v1855 = vrot.slane %v1854, 4
      %v1856 = vadd.f32 %v1854, %v1855
      %v1857 = vrot.slane %v1856, 2
      %v1858 = vadd.f32 %v1856, %v1857
      %v1859 = vrot.slane %v1858, 1
      %v1860 = vadd.f32 %v1858, %v1859
      %v1861 = vsel %vm448, %v1827, 0.0
      %v1862 = vrot.slane %v1861, 4
      %v1863 = vadd.f32 %v1861, %v1862
      %v1864 = vrot.slane %v1863, 2
      %v1865 = vadd.f32 %v1863, %v1864
      %v1866 = vrot.slane %v1865, 1
      %v1867 = vadd.f32 %v1865, %v1866
      %v1868 = vsel %vm448, %v1828, 0.0
      %v1869 = vrot.slane %v1868, 4
      %v1870 = vadd.f32 %v1868, %v1869
      %v1871 = vrot.slane %v1870, 2
      %v1872 = vadd.f32 %v1870, %v1871
      %v1873 = vrot.slane %v1872, 1
      %v1874 = vadd.f32 %v1872, %v1873
      %v1875 = vsel %vm448, %v1829, 0.0
      %v1876 = vrot.slane %v1875, 4
      %v1877 = vadd.f32 %v1875, %v1876
      %v1878 = vrot.slane %v1877, 2
      %v1879 = vadd.f32 %v1877, %v1878
      %v1880 = vrot.slane %v1879, 1
      %v1881 = vadd.f32 %v1879, %v1880
      %v1882 = vsel %vm448, %v1830, 0.0
      %v1883 = vrot.slane %v1882, 4
      %v1884 = vadd.f32 %v1882, %v1883
      %v1885 = vrot.slane %v1884, 2
      %v1886 = vadd.f32 %v1884, %v1885
      %v1887 = vrot.slane %v1886, 1
      %v1888 = vadd.f32 %v1886, %v1887
      %v1889 = vsel %vm448, %v1831, 0.0
      %v1890 = vrot.slane %v1889, 4
      %v1891 = vadd.f32 %v1889, %v1890
      %v1892 = vrot.slane %v1891, 2
      %v1893 = vadd.f32 %v1891, %v1892
      %v1894 = vrot.slane %v1893, 1
      %v1895 = vadd.f32 %v1893, %v1894
      %v1896 = vsel %vm448, %v1832, 0.0
      %v1897 = vrot.slane %v1896, 4
      %v1898 = vadd.f32 %v1896, %v1897
      %v1899 = vrot.slane %v1898, 2
      %v1900 = vadd.f32 %v1898, %v1899
      %v1901 = vrot.slane %v1900, 1
      %v1902 = vadd.f32 %v1900, %v1901
      %v1903 = vsel %vm448, %v1833, 0.0
      %v1904 = vrot.slane %v1903, 4
      %v1905 = vadd.f32 %v1903, %v1904
      %v1906 = vrot.slane %v1905, 2
      %v1907 = vadd.f32 %v1905, %v1906
      %v1908 = vrot.slane %v1907, 1
      %v1909 = vadd.f32 %v1907, %v1908
      %v1910 = vsel %vm448, %v1834, 0.0
      %v1911 = vrot.slane %v1910, 4
      %v1912 = vadd.f32 %v1910, %v1911
      %v1913 = vrot.slane %v1912, 2
      %v1914 = vadd.f32 %v1912, %v1913
      %v1915 = vrot.slane %v1914, 1
      %v1916 = vadd.f32 %v1914, %v1915
      %v1917 = vsel %vm448, %v1835, 0.0
      %v1918 = vrot.slane %v1917, 4
      %v1919 = vadd.f32 %v1917, %v1918
      %v1920 = vrot.slane %v1919, 2
      %v1921 = vadd.f32 %v1919, %v1920
      %v1922 = vrot.slane %v1921, 1
      %v1923 = vadd.f32 %v1921, %v1922
      %v1924 = vsel %vm448, %v1836, 0.0
      %v1925 = vrot.slane %v1924, 4
      %v1926 = vadd.f32 %v1924, %v1925
      %v1927 = vrot.slane %v1926, 2
      %v1928 = vadd.f32 %v1926, %v1927
      %v1929 = vrot.slane %v1928, 1
      %v1930 = vadd.f32 %v1928, %v1929
      %v1931 = vsel %vm448, %v1837, 0.0
      %v1932 = vrot.slane %v1931, 4
      %v1933 = vadd.f32 %v1931, %v1932
      %v1934 = vrot.slane %v1933, 2
      %v1935 = vadd.f32 %v1933, %v1934
      %v1936 = vrot.slane %v1935, 1
      %v1937 = vadd.f32 %v1935, %v1936
      %v1938 = vsel %vm448, %v1838, 0.0
      %v1939 = vrot.slane %v1938, 4
      %v1940 = vadd.f32 %v1938, %v1939
      %v1941 = vrot.slane %v1940, 2
      %v1942 = vadd.f32 %v1940, %v1941
      %v1943 = vrot.slane %v1942, 1
      %v1944 = vadd.f32 %v1942, %v1943
      %v1945 = vsel %vm448, %v1839, 0.0
      %v1946 = vrot.slane %v1945, 4
      %v1947 = vadd.f32 %v1945, %v1946
      %v1948 = vrot.slane %v1947, 2
      %v1949 = vadd.f32 %v1947, %v1948
      %v1950 = vrot.slane %v1949, 1
      %v1951 = vadd.f32 %v1949, %v1950
      %1952 = vrot.lane.b32.xlu0 %v275, 116
      %v1953 = vpop.permute.xlu0 %1952
      %1954 = vrot.lane.b32.xlu0 %v276, 116
      %v1955 = vpop.permute.xlu0 %1954
      %v1972 = vsel %vm577, %v1853, %v1846
      %v1973 = vsel %vm579, %v1860, %v1972
      %v1974 = vsel %vm581, %v1867, %v1973
      %v1975 = vsel %vm583, %v1874, %v1974
      %v1976 = vsel %vm585, %v1881, %v1975
      %v1977 = vsel %vm587, %v1888, %v1976
      %v1978 = vsel %vm589, %v1895, %v1977
      %v1979 = vsel %vm577, %v1909, %v1902
      %v1980 = vsel %vm579, %v1916, %v1979
      %v1981 = vsel %vm581, %v1923, %v1980
      %v1982 = vsel %vm583, %v1930, %v1981
      %v1983 = vsel %vm585, %v1937, %v1982
      %v1984 = vsel %vm587, %v1944, %v1983
      %v1985 = vsel %vm589, %v1951, %v1984
      %v1988 = vsel %vm600, %v1953, 0
      %v1990 = vsel %vm600, %v1955, 0
      %v1993 = vsel %vm600, %v1730, 0
      %v1995 = vsel %vm600, %v1725, 0
      %v1998 = vsel %vm600, %v1731, 0
      %2000 = vmatprep.subr.mxu0 0.0
      %2001 = vmatpush1.xpose.msra.mxu0 0.0
      %2002 = vmatprep.subr.mxu0 0.0
      %2003 = vmatpush1.xpose.msra.mxu0 0.0
      %2004 = vmatprep.subr.mxu0 0.0
      %2005 = vmatpush1.xpose.msra.mxu0 0.0
      %2006 = vmatprep.subr.mxu0 0.0
      %2007 = vmatpush1.xpose.msra.mxu0 0.0
      %2008 = vmatprep.subr.mxu0 0.0
      %2009 = vmatpush1.xpose.msra.mxu0 0.0
      %2010 = vmatprep.subr.mxu0 0.0
      %2011 = vmatpush1.xpose.msra.mxu0 0.0
      %2012 = vmatprep.subr.mxu0 0.0
      %2013 = vmatpush1.xpose.msra.mxu0 0.0
      %2014 = vmatprep.subr.mxu0 0.0
      %2015 = vmatpush1.xpose.msra.mxu0 0.0
      %2016 = vmatprep.subr.mxu0 0.0
      %2017 = vmatpush1.xpose.msra.mxu0 0.0
      %2018 = vmatprep.subr.mxu0 0.0
      %2019 = vmatpush1.xpose.msra.mxu0 0.0
      %2020 = vmatprep.subr.mxu0 0.0
      %2021 = vmatpush1.xpose.msra.mxu0 0.0
      %2022 = vmatprep.subr.mxu0 0.0
      %2023 = vmatpush1.xpose.msra.mxu0 %v606
      %2024 = vmatprep.subr.mxu0 0.0
      %2025 = vmatpush1.xpose.msra.mxu0 %v1998
      %2026 = vmatprep.subr.mxu0 0.0
      %2027 = vmatpush1.xpose.msra.mxu0 %v1995
      %2028 = vmatprep.subr.mxu0 0.0
      %2029 = vmatpush1.xpose.msra.mxu0 %v1993
      %2030 = vmatprep.subr.mxu0 0.0
      %2031 = vmatpush1.xpose.msra.mxu0 %v606
      %2032 = vmatprep.subr.mxu0 0.0
      %2033 = vmatpush2.xpose.msra.mxu0 0.0
      %2034 = vmatprep.subr.mxu0 0.0
      %2035 = vmatpush2.xpose.msra.mxu0 0.0
      %2036 = vmatprep.subr.mxu0 0.0
      %2037 = vmatpush2.xpose.msra.mxu0 0.0
      %2038 = vmatprep.subr.mxu0 0.0
      %2039 = vmatpush2.xpose.msra.mxu0 0.0
      %2040 = vmatprep.subr.mxu0 0.0
      %2041 = vmatpush2.xpose.msra.mxu0 0.0
      %2042 = vmatprep.subr.mxu0 0.0
      %2043 = vmatpush2.xpose.msra.mxu0 0.0
      %2044 = vmatprep.subr.mxu0 0.0
      %2045 = vmatpush2.xpose.msra.mxu0 0.0
      %2046 = vmatprep.subr.mxu0 0.0
      %2047 = vmatpush2.xpose.msra.mxu0 0.0
      %2048 = vmatprep.subr.mxu0 0.0
      %2049 = vmatpush2.xpose.msra.mxu0 0.0
      %2050 = vmatprep.subr.mxu0 0.0
      %2051 = vmatpush2.xpose.msra.mxu0 0.0
      %2052 = vmatprep.subr.mxu0 0.0
      %2053 = vmatpush2.xpose.msra.mxu0 0.0
      %2054 = vmatprep.subr.mxu0 0.0
      %2055 = vmatpush2.xpose.msra.mxu0 0.0
      %2056 = vmatprep.subr.mxu0 0.0
      %2057 = vmatpush2.xpose.msra.mxu0 0.0
      %2058 = vmatprep.subr.mxu0 0.0
      %2059 = vmatpush2.xpose.msra.mxu0 0.0
      %2060 = vmatprep.subr.mxu0 0.0
      %2061 = vmatpush2.xpose.msra.mxu0 0.0
      %2062 = vmatprep.subr.mxu0 0.0
      %2063 = vmatpush2.xpose.msra.mxu0 0.0
      %2064 = vmatprep.mubr.f32.mxu0 0.0
      %2065 = vmatmul.mubr.f32.gmra.mxu0 %v1988
      %v2066 = vpop.f32.mrf.mxu0
      %v2067 = vadd.f32 %v1978, %v2066
      %v2068 = vpop.f32.mrf.mxu0
      %2069 = vmatprep.mubr.f32.mxu0 0.0
      %2070 = vmatmul.mubr.f32.gmra.mxu0 %v1990
      %v2071 = vpop.f32.mrf.mxu0
      %v2072 = vadd.f32 %v1985, %v2071
      %v2073 = vpop.f32.mrf.mxu0
      %2074 = vdwg.mxu0
      %v2075 = vmul.f32 %v2067, 0.17677669
      %v2076 = vmul.f32 %v2072, 0.17677669
      %v2077 = vsel %vm273, %v2075, -1e+30
      %v2078 = vsel %vm274, %v2076, -1e+30
      %v2079 = vsel %vm695, %v2077, -inf
      %2080 = vmax.xlane.f32.xlu0 %v2079
      %v2081 = vpop.xlane.xlu0 %2080
      %v2082 = vsel %vm695, %v2078, -inf
      %2083 = vmax.xlane.f32.xlu0 %v2082
      %v2084 = vpop.xlane.xlu0 %2083
      %v2085 = vsub.f32 %v2077, %v2081
      %v2086 = vsub.f32 %v2078, %v2084
      %v2087 = vmul.f32 %v2085, 1.442695
      %v2088 = vpow.pop %v2087
      %v2089 = vmul.f32 %v2086, 1.442695
      %v2090 = vpow.pop %v2089
      %v2091 = vsel %vm695, %v2088, 0.0
      %2092 = vadd.xlane.f32.xlu0 %v2091
      %v2093 = vpop.xlane.xlu0 %2092
      %v2094 = vsel %vm695, %v2090, 0.0
      %2095 = vadd.xlane.f32.xlu0 %v2094
      %v2096 = vpop.xlane.xlu0 %2095
      %v2097 = vrcp.pop %v2093
      %v2098 = vmul.f32 %v2088, %v2097
      %v2099 = vrcp.pop %v2096
      %v2100 = vmul.f32 %v2090, %v2099
      %v2102 = vsel %vm695, %v2098, 0
      %v2105 = vsel %vm695, %v2100, 0
      %2107 = vmatprep.subr.mxu0 0.0
      %2108 = vmatpush1.msra.mxu0 0.0
      %2109 = vmatprep.subr.mxu0 0.0
      %2110 = vmatpush1.msra.mxu0 0.0
      %2111 = vmatprep.subr.mxu0 0.0
      %2112 = vmatpush1.msra.mxu0 0.0
      %2113 = vmatprep.subr.mxu0 0.0
      %2114 = vmatpush1.msra.mxu0 0.0
      %2115 = vmatprep.subr.mxu0 0.0
      %2116 = vmatpush1.msra.mxu0 0.0
      %2117 = vmatprep.subr.mxu0 0.0
      %2118 = vmatpush1.msra.mxu0 0.0
      %2119 = vmatprep.subr.mxu0 0.0
      %2120 = vmatpush1.msra.mxu0 0.0
      %2121 = vmatprep.subr.mxu0 0.0
      %2122 = vmatpush1.msra.mxu0 0.0
      %2123 = vmatprep.subr.mxu0 0.0
      %2124 = vmatpush1.msra.mxu0 0.0
      %2125 = vmatprep.subr.mxu0 0.0
      %2126 = vmatpush1.msra.mxu0 0.0
      %2127 = vmatprep.subr.mxu0 0.0
      %2128 = vmatpush1.msra.mxu0 0.0
      %2129 = vmatprep.subr.mxu0 0.0
      %2130 = vmatpush1.msra.mxu0 %v725
      %2131 = vmatprep.subr.mxu0 0.0
      %2132 = vmatpush1.msra.mxu0 %v1742
      %2133 = vmatprep.subr.mxu0 0.0
      %2134 = vmatpush1.msra.mxu0 %v1735
      %2135 = vmatprep.subr.mxu0 0.0
      %2136 = vmatpush1.msra.mxu0 %v1741
      %2137 = vmatprep.subr.mxu0 0.0
      %2138 = vmatpush1.msra.mxu0 0.0
      %2139 = vmatprep.subr.mxu0 0.0
      %2140 = vmatpush2.msra.mxu0 0.0
      %2141 = vmatprep.subr.mxu0 0.0
      %2142 = vmatpush2.msra.mxu0 0.0
      %2143 = vmatprep.subr.mxu0 0.0
      %2144 = vmatpush2.msra.mxu0 0.0
      %2145 = vmatprep.subr.mxu0 0.0
      %2146 = vmatpush2.msra.mxu0 0.0
      %2147 = vmatprep.subr.mxu0 0.0
      %2148 = vmatpush2.msra.mxu0 0.0
      %2149 = vmatprep.subr.mxu0 0.0
      %2150 = vmatpush2.msra.mxu0 0.0
      %2151 = vmatprep.subr.mxu0 0.0
      %2152 = vmatpush2.msra.mxu0 0.0
      %2153 = vmatprep.subr.mxu0 0.0
      %2154 = vmatpush2.msra.mxu0 0.0
      %2155 = vmatprep.subr.mxu0 0.0
      %2156 = vmatpush2.msra.mxu0 0.0
      %2157 = vmatprep.subr.mxu0 0.0
      %2158 = vmatpush2.msra.mxu0 0.0
      %2159 = vmatprep.subr.mxu0 0.0
      %2160 = vmatpush2.msra.mxu0 0.0
      %2161 = vmatprep.subr.mxu0 0.0
      %2162 = vmatpush2.msra.mxu0 0.0
      %2163 = vmatprep.subr.mxu0 0.0
      %2164 = vmatpush2.msra.mxu0 0.0
      %2165 = vmatprep.subr.mxu0 0.0
      %2166 = vmatpush2.msra.mxu0 0.0
      %2167 = vmatprep.subr.mxu0 0.0
      %2168 = vmatpush2.msra.mxu0 0.0
      %2169 = vmatprep.subr.mxu0 0.0
      %2170 = vmatpush2.msra.mxu0 0.0
      %2171 = vmatprep.mubr.f32.mxu0 0.0
      %2172 = vmatmul.mubr.f32.gmra.mxu0 %v2102
      %v2173 = vpop.f32.mrf.mxu0
      %v2174 = vadd.f32 0.0, %v2173
      %v2175 = vpop.f32.mrf.mxu0
      %2176 = vmatprep.mubr.f32.mxu0 0.0
      %2177 = vmatmul.mubr.f32.gmra.mxu0 %v2105
      %v2178 = vpop.f32.mrf.mxu0
      %v2179 = vadd.f32 0.0, %v2178
      %v2180 = vpop.f32.mrf.mxu0
      %2181 = vdwg.mxu0
      %2182 = vrot.lane.b32.xlu0 %v280, 80
      %v2183 = vpop.permute.xlu0 %2182
      %2184 = vrot.lane.b32.xlu0 %v282, 80
      %v2185 = vpop.permute.xlu0 %2184
      %2186 = vrot.lane.b32.xlu0 %v281, 80
      %v2187 = vpop.permute.xlu0 %2186
      %v2190 = vsel %vm279, 0.0, %v2183
      %v2191 = vsel %vm279, %v2187, 0.0
      %2192 = vrot.lane.b32.xlu0 %v280, 48
      %v2193 = vpop.permute.xlu0 %2192
      %2194 = vrot.lane.b32.xlu0 %v282, 48
      %v2195 = vpop.permute.xlu0 %2194
      %2196 = vrot.lane.b32.xlu0 %v281, 48
      %v2197 = vpop.permute.xlu0 %2196
      %v2201 = vsel %vm279, 0.0, %v2193
      %v2202 = vsel %vm279, %v2197, 0.0
      %s2204 = sor.u32 256, 16
      %2205 = vbcast.lane.b32.xlu0 %v307, %s2204
      %v2206 = vpop.permute.xlu0 %2205
      %s2208 = sor.u32 256, 16
      %2209 = vbcast.lane.b32.xlu0 %v314, %s2208
      %v2210 = vpop.permute.xlu0 %2209
      %s2212 = sor.u32 256, 16
      %2213 = vbcast.lane.b32.xlu0 %v321, %s2212
      %v2214 = vpop.permute.xlu0 %2213
      %s2216 = sor.u32 256, 16
      %2217 = vbcast.lane.b32.xlu0 %v328, %s2216
      %v2218 = vpop.permute.xlu0 %2217
      %s2220 = sor.u32 256, 16
      %2221 = vbcast.lane.b32.xlu0 %v335, %s2220
      %v2222 = vpop.permute.xlu0 %2221
      %s2224 = sor.u32 256, 16
      %2225 = vbcast.lane.b32.xlu0 %v342, %s2224
      %v2226 = vpop.permute.xlu0 %2225
      %s2228 = sor.u32 256, 16
      %2229 = vbcast.lane.b32.xlu0 %v349, %s2228
      %v2230 = vpop.permute.xlu0 %2229
      %s2232 = sor.u32 256, 16
      %2233 = vbcast.lane.b32.xlu0 %v356, %s2232
      %v2234 = vpop.permute.xlu0 %2233
      %s2236 = sor.u32 256, 16
      %2237 = vbcast.lane.b32.xlu0 %v363, %s2236
      %v2238 = vpop.permute.xlu0 %2237
      %s2240 = sor.u32 256, 16
      %2241 = vbcast.lane.b32.xlu0 %v370, %s2240
      %v2242 = vpop.permute.xlu0 %2241
      %s2244 = sor.u32 256, 16
      %2245 = vbcast.lane.b32.xlu0 %v377, %s2244
      %v2246 = vpop.permute.xlu0 %2245
      %s2248 = sor.u32 256, 16
      %2249 = vbcast.lane.b32.xlu0 %v384, %s2248
      %v2250 = vpop.permute.xlu0 %2249
      %s2252 = sor.u32 256, 16
      %2253 = vbcast.lane.b32.xlu0 %v391, %s2252
      %v2254 = vpop.permute.xlu0 %2253
      %s2256 = sor.u32 256, 16
      %2257 = vbcast.lane.b32.xlu0 %v398, %s2256
      %v2258 = vpop.permute.xlu0 %2257
      %s2260 = sor.u32 256, 16
      %2261 = vbcast.lane.b32.xlu0 %v405, %s2260
      %v2262 = vpop.permute.xlu0 %2261
      %s2264 = sor.u32 256, 16
      %2265 = vbcast.lane.b32.xlu0 %v412, %s2264
      %v2266 = vpop.permute.xlu0 %2265
      %s2267 = scalar_lea.vmem %s2, 256
      %v2268 = vld [vmem:[%s2267] sm:$0xf]
      %v2269 = vld [vmem:[%s2267 + $0x4] sm:$0xf]
      %v2270 = vld [vmem:[%s2267 + $0x8] sm:$0xf]
      %v2271 = vld [vmem:[%s2267 + $0xc] sm:$0xf]
      %v2272 = vld [vmem:[%s2267 + $0x10] sm:$0xf]
      %v2273 = vld [vmem:[%s2267 + $0x14] sm:$0xf]
      %v2274 = vld [vmem:[%s2267 + $0x18] sm:$0xf]
      %v2275 = vld [vmem:[%s2267 + $0x1c] sm:$0xf]
      %v2276 = vld [vmem:[%s2267 + $0x20] sm:$0xf]
      %v2277 = vld [vmem:[%s2267 + $0x24] sm:$0xf]
      %v2278 = vld [vmem:[%s2267 + $0x28] sm:$0xf]
      %v2279 = vld [vmem:[%s2267 + $0x2c] sm:$0xf]
      %v2280 = vld [vmem:[%s2267 + $0x30] sm:$0xf]
      %v2281 = vld [vmem:[%s2267 + $0x34] sm:$0xf]
      %v2282 = vld [vmem:[%s2267 + $0x38] sm:$0xf]
      %v2283 = vld [vmem:[%s2267 + $0x3c] sm:$0xf]
      %v2284 = vmul.f32 %v2206, %v2268
      %v2285 = vmul.f32 %v2210, %v2269
      %v2286 = vmul.f32 %v2214, %v2270
      %v2287 = vmul.f32 %v2218, %v2271
      %v2288 = vmul.f32 %v2222, %v2272
      %v2289 = vmul.f32 %v2226, %v2273
      %v2290 = vmul.f32 %v2230, %v2274
      %v2291 = vmul.f32 %v2234, %v2275
      %v2292 = vmul.f32 %v2238, %v2276
      %v2293 = vmul.f32 %v2242, %v2277
      %v2294 = vmul.f32 %v2246, %v2278
      %v2295 = vmul.f32 %v2250, %v2279
      %v2296 = vmul.f32 %v2254, %v2280
      %v2297 = vmul.f32 %v2258, %v2281
      %v2298 = vmul.f32 %v2262, %v2282
      %v2299 = vmul.f32 %v2266, %v2283
      %v2300 = vsel %vm448, %v2284, 0.0
      %v2301 = vrot.slane %v2300, 4
      %v2302 = vadd.f32 %v2300, %v2301
      %v2303 = vrot.slane %v2302, 2
      %v2304 = vadd.f32 %v2302, %v2303
      %v2305 = vrot.slane %v2304, 1
      %v2306 = vadd.f32 %v2304, %v2305
      %v2307 = vsel %vm448, %v2285, 0.0
      %v2308 = vrot.slane %v2307, 4
      %v2309 = vadd.f32 %v2307, %v2308
      %v2310 = vrot.slane %v2309, 2
      %v2311 = vadd.f32 %v2309, %v2310
      %v2312 = vrot.slane %v2311, 1
      %v2313 = vadd.f32 %v2311, %v2312
      %v2314 = vsel %vm448, %v2286, 0.0
      %v2315 = vrot.slane %v2314, 4
      %v2316 = vadd.f32 %v2314, %v2315
      %v2317 = vrot.slane %v2316, 2
      %v2318 = vadd.f32 %v2316, %v2317
      %v2319 = vrot.slane %v2318, 1
      %v2320 = vadd.f32 %v2318, %v2319
      %v2321 = vsel %vm448, %v2287, 0.0
      %v2322 = vrot.slane %v2321, 4
      %v2323 = vadd.f32 %v2321, %v2322
      %v2324 = vrot.slane %v2323, 2
      %v2325 = vadd.f32 %v2323, %v2324
      %v2326 = vrot.slane %v2325, 1
      %v2327 = vadd.f32 %v2325, %v2326
      %v2328 = vsel %vm448, %v2288, 0.0
      %v2329 = vrot.slane %v2328, 4
      %v2330 = vadd.f32 %v2328, %v2329
      %v2331 = vrot.slane %v2330, 2
      %v2332 = vadd.f32 %v2330, %v2331
      %v2333 = vrot.slane %v2332, 1
      %v2334 = vadd.f32 %v2332, %v2333
      %v2335 = vsel %vm448, %v2289, 0.0
      %v2336 = vrot.slane %v2335, 4
      %v2337 = vadd.f32 %v2335, %v2336
      %v2338 = vrot.slane %v2337, 2
      %v2339 = vadd.f32 %v2337, %v2338
      %v2340 = vrot.slane %v2339, 1
      %v2341 = vadd.f32 %v2339, %v2340
      %v2342 = vsel %vm448, %v2290, 0.0
      %v2343 = vrot.slane %v2342, 4
      %v2344 = vadd.f32 %v2342, %v2343
      %v2345 = vrot.slane %v2344, 2
      %v2346 = vadd.f32 %v2344, %v2345
      %v2347 = vrot.slane %v2346, 1
      %v2348 = vadd.f32 %v2346, %v2347
      %v2349 = vsel %vm448, %v2291, 0.0
      %v2350 = vrot.slane %v2349, 4
      %v2351 = vadd.f32 %v2349, %v2350
      %v2352 = vrot.slane %v2351, 2
      %v2353 = vadd.f32 %v2351, %v2352
      %v2354 = vrot.slane %v2353, 1
      %v2355 = vadd.f32 %v2353, %v2354
      %v2356 = vsel %vm448, %v2292, 0.0
      %v2357 = vrot.slane %v2356, 4
      %v2358 = vadd.f32 %v2356, %v2357
      %v2359 = vrot.slane %v2358, 2
      %v2360 = vadd.f32 %v2358, %v2359
      %v2361 = vrot.slane %v2360, 1
      %v2362 = vadd.f32 %v2360, %v2361
      %v2363 = vsel %vm448, %v2293, 0.0
      %v2364 = vrot.slane %v2363, 4
      %v2365 = vadd.f32 %v2363, %v2364
      %v2366 = vrot.slane %v2365, 2
      %v2367 = vadd.f32 %v2365, %v2366
      %v2368 = vrot.slane %v2367, 1
      %v2369 = vadd.f32 %v2367, %v2368
      %v2370 = vsel %vm448, %v2294, 0.0
      %v2371 = vrot.slane %v2370, 4
      %v2372 = vadd.f32 %v2370, %v2371
      %v2373 = vrot.slane %v2372, 2
      %v2374 = vadd.f32 %v2372, %v2373
      %v2375 = vrot.slane %v2374, 1
      %v2376 = vadd.f32 %v2374, %v2375
      %v2377 = vsel %vm448, %v2295, 0.0
      %v2378 = vrot.slane %v2377, 4
      %v2379 = vadd.f32 %v2377, %v2378
      %v2380 = vrot.slane %v2379, 2
      %v2381 = vadd.f32 %v2379, %v2380
      %v2382 = vrot.slane %v2381, 1
      %v2383 = vadd.f32 %v2381, %v2382
      %v2384 = vsel %vm448, %v2296, 0.0
      %v2385 = vrot.slane %v2384, 4
      %v2386 = vadd.f32 %v2384, %v2385
      %v2387 = vrot.slane %v2386, 2
      %v2388 = vadd.f32 %v2386, %v2387
      %v2389 = vrot.slane %v2388, 1
      %v2390 = vadd.f32 %v2388, %v2389
      %v2391 = vsel %vm448, %v2297, 0.0
      %v2392 = vrot.slane %v2391, 4
      %v2393 = vadd.f32 %v2391, %v2392
      %v2394 = vrot.slane %v2393, 2
      %v2395 = vadd.f32 %v2393, %v2394
      %v2396 = vrot.slane %v2395, 1
      %v2397 = vadd.f32 %v2395, %v2396
      %v2398 = vsel %vm448, %v2298, 0.0
      %v2399 = vrot.slane %v2398, 4
      %v2400 = vadd.f32 %v2398, %v2399
      %v2401 = vrot.slane %v2400, 2
      %v2402 = vadd.f32 %v2400, %v2401
      %v2403 = vrot.slane %v2402, 1
      %v2404 = vadd.f32 %v2402, %v2403
      %v2405 = vsel %vm448, %v2299, 0.0
      %v2406 = vrot.slane %v2405, 4
      %v2407 = vadd.f32 %v2405, %v2406
      %v2408 = vrot.slane %v2407, 2
      %v2409 = vadd.f32 %v2407, %v2408
      %v2410 = vrot.slane %v2409, 1
      %v2411 = vadd.f32 %v2409, %v2410
      %2412 = vrot.lane.b32.xlu0 %v275, 112
      %v2413 = vpop.permute.xlu0 %2412
      %2414 = vrot.lane.b32.xlu0 %v276, 112
      %v2415 = vpop.permute.xlu0 %2414
      %v2432 = vsel %vm577, %v2313, %v2306
      %v2433 = vsel %vm579, %v2320, %v2432
      %v2434 = vsel %vm581, %v2327, %v2433
      %v2435 = vsel %vm583, %v2334, %v2434
      %v2436 = vsel %vm585, %v2341, %v2435
      %v2437 = vsel %vm587, %v2348, %v2436
      %v2438 = vsel %vm589, %v2355, %v2437
      %v2439 = vsel %vm577, %v2369, %v2362
      %v2440 = vsel %vm579, %v2376, %v2439
      %v2441 = vsel %vm581, %v2383, %v2440
      %v2442 = vsel %vm583, %v2390, %v2441
      %v2443 = vsel %vm585, %v2397, %v2442
      %v2444 = vsel %vm587, %v2404, %v2443
      %v2445 = vsel %vm589, %v2411, %v2444
      %v2448 = vsel %vm600, %v2413, 0
      %v2450 = vsel %vm600, %v2415, 0
      %v2453 = vsel %vm600, %v2190, 0
      %v2455 = vsel %vm600, %v2185, 0
      %v2458 = vsel %vm600, %v2191, 0
      %2460 = vmatprep.subr.mxu0 0.0
      %2461 = vmatpush1.xpose.msra.mxu0 0.0
      %2462 = vmatprep.subr.mxu0 0.0
      %2463 = vmatpush1.xpose.msra.mxu0 0.0
      %2464 = vmatprep.subr.mxu0 0.0
      %2465 = vmatpush1.xpose.msra.mxu0 0.0
      %2466 = vmatprep.subr.mxu0 0.0
      %2467 = vmatpush1.xpose.msra.mxu0 0.0
      %2468 = vmatprep.subr.mxu0 0.0
      %2469 = vmatpush1.xpose.msra.mxu0 0.0
      %2470 = vmatprep.subr.mxu0 0.0
      %2471 = vmatpush1.xpose.msra.mxu0 0.0
      %2472 = vmatprep.subr.mxu0 0.0
      %2473 = vmatpush1.xpose.msra.mxu0 0.0
      %2474 = vmatprep.subr.mxu0 0.0
      %2475 = vmatpush1.xpose.msra.mxu0 0.0
      %2476 = vmatprep.subr.mxu0 0.0
      %2477 = vmatpush1.xpose.msra.mxu0 0.0
      %2478 = vmatprep.subr.mxu0 0.0
      %2479 = vmatpush1.xpose.msra.mxu0 0.0
      %2480 = vmatprep.subr.mxu0 0.0
      %2481 = vmatpush1.xpose.msra.mxu0 0.0
      %2482 = vmatprep.subr.mxu0 0.0
      %2483 = vmatpush1.xpose.msra.mxu0 %v606
      %2484 = vmatprep.subr.mxu0 0.0
      %2485 = vmatpush1.xpose.msra.mxu0 %v2458
      %2486 = vmatprep.subr.mxu0 0.0
      %2487 = vmatpush1.xpose.msra.mxu0 %v2455
      %2488 = vmatprep.subr.mxu0 0.0
      %2489 = vmatpush1.xpose.msra.mxu0 %v2453
      %2490 = vmatprep.subr.mxu0 0.0
      %2491 = vmatpush1.xpose.msra.mxu0 %v606
      %2492 = vmatprep.subr.mxu0 0.0
      %2493 = vmatpush2.xpose.msra.mxu0 0.0
      %2494 = vmatprep.subr.mxu0 0.0
      %2495 = vmatpush2.xpose.msra.mxu0 0.0
      %2496 = vmatprep.subr.mxu0 0.0
      %2497 = vmatpush2.xpose.msra.mxu0 0.0
      %2498 = vmatprep.subr.mxu0 0.0
      %2499 = vmatpush2.xpose.msra.mxu0 0.0
      %2500 = vmatprep.subr.mxu0 0.0
      %2501 = vmatpush2.xpose.msra.mxu0 0.0
      %2502 = vmatprep.subr.mxu0 0.0
      %2503 = vmatpush2.xpose.msra.mxu0 0.0
      %2504 = vmatprep.subr.mxu0 0.0
      %2505 = vmatpush2.xpose.msra.mxu0 0.0
      %2506 = vmatprep.subr.mxu0 0.0
      %2507 = vmatpush2.xpose.msra.mxu0 0.0
      %2508 = vmatprep.subr.mxu0 0.0
      %2509 = vmatpush2.xpose.msra.mxu0 0.0
      %2510 = vmatprep.subr.mxu0 0.0
      %2511 = vmatpush2.xpose.msra.mxu0 0.0
      %2512 = vmatprep.subr.mxu0 0.0
      %2513 = vmatpush2.xpose.msra.mxu0 0.0
      %2514 = vmatprep.subr.mxu0 0.0
      %2515 = vmatpush2.xpose.msra.mxu0 0.0
      %2516 = vmatprep.subr.mxu0 0.0
      %2517 = vmatpush2.xpose.msra.mxu0 0.0
      %2518 = vmatprep.subr.mxu0 0.0
      %2519 = vmatpush2.xpose.msra.mxu0 0.0
      %2520 = vmatprep.subr.mxu0 0.0
      %2521 = vmatpush2.xpose.msra.mxu0 0.0
      %2522 = vmatprep.subr.mxu0 0.0
      %2523 = vmatpush2.xpose.msra.mxu0 0.0
      %2524 = vmatprep.mubr.f32.mxu0 0.0
      %2525 = vmatmul.mubr.f32.gmra.mxu0 %v2448
      %v2526 = vpop.f32.mrf.mxu0
      %v2527 = vadd.f32 %v2438, %v2526
      %v2528 = vpop.f32.mrf.mxu0
      %2529 = vmatprep.mubr.f32.mxu0 0.0
      %2530 = vmatmul.mubr.f32.gmra.mxu0 %v2450
      %v2531 = vpop.f32.mrf.mxu0
      %v2532 = vadd.f32 %v2445, %v2531
      %v2533 = vpop.f32.mrf.mxu0
      %2534 = vdwg.mxu0
      %v2535 = vmul.f32 %v2527, 0.17677669
      %v2536 = vmul.f32 %v2532, 0.17677669
      %v2537 = vsel %vm273, %v2535, -1e+30
      %v2538 = vsel %vm274, %v2536, -1e+30
      %v2539 = vsel %vm695, %v2537, -inf
      %2540 = vmax.xlane.f32.xlu0 %v2539
      %v2541 = vpop.xlane.xlu0 %2540
      %v2542 = vsel %vm695, %v2538, -inf
      %2543 = vmax.xlane.f32.xlu0 %v2542
      %v2544 = vpop.xlane.xlu0 %2543
      %v2545 = vsub.f32 %v2537, %v2541
      %v2546 = vsub.f32 %v2538, %v2544
      %v2547 = vmul.f32 %v2545, 1.442695
      %v2548 = vpow.pop %v2547
      %v2549 = vmul.f32 %v2546, 1.442695
      %v2550 = vpow.pop %v2549
      %v2551 = vsel %vm695, %v2548, 0.0
      %2552 = vadd.xlane.f32.xlu0 %v2551
      %v2553 = vpop.xlane.xlu0 %2552
      %v2554 = vsel %vm695, %v2550, 0.0
      %2555 = vadd.xlane.f32.xlu0 %v2554
      %v2556 = vpop.xlane.xlu0 %2555
      %v2557 = vrcp.pop %v2553
      %v2558 = vmul.f32 %v2548, %v2557
      %v2559 = vrcp.pop %v2556
      %v2560 = vmul.f32 %v2550, %v2559
      %v2562 = vsel %vm695, %v2558, 0
      %v2565 = vsel %vm695, %v2560, 0
      %2567 = vmatprep.subr.mxu0 0.0
      %2568 = vmatpush1.msra.mxu0 0.0
      %2569 = vmatprep.subr.mxu0 0.0
      %2570 = vmatpush1.msra.mxu0 0.0
      %2571 = vmatprep.subr.mxu0 0.0
      %2572 = vmatpush1.msra.mxu0 0.0
      %2573 = vmatprep.subr.mxu0 0.0
      %2574 = vmatpush1.msra.mxu0 0.0
      %2575 = vmatprep.subr.mxu0 0.0
      %2576 = vmatpush1.msra.mxu0 0.0
      %2577 = vmatprep.subr.mxu0 0.0
      %2578 = vmatpush1.msra.mxu0 0.0
      %2579 = vmatprep.subr.mxu0 0.0
      %2580 = vmatpush1.msra.mxu0 0.0
      %2581 = vmatprep.subr.mxu0 0.0
      %2582 = vmatpush1.msra.mxu0 0.0
      %2583 = vmatprep.subr.mxu0 0.0
      %2584 = vmatpush1.msra.mxu0 0.0
      %2585 = vmatprep.subr.mxu0 0.0
      %2586 = vmatpush1.msra.mxu0 0.0
      %2587 = vmatprep.subr.mxu0 0.0
      %2588 = vmatpush1.msra.mxu0 0.0
      %2589 = vmatprep.subr.mxu0 0.0
      %2590 = vmatpush1.msra.mxu0 %v725
      %2591 = vmatprep.subr.mxu0 0.0
      %2592 = vmatpush1.msra.mxu0 %v2202
      %2593 = vmatprep.subr.mxu0 0.0
      %2594 = vmatpush1.msra.mxu0 %v2195
      %2595 = vmatprep.subr.mxu0 0.0
      %2596 = vmatpush1.msra.mxu0 %v2201
      %2597 = vmatprep.subr.mxu0 0.0
      %2598 = vmatpush1.msra.mxu0 0.0
      %2599 = vmatprep.subr.mxu0 0.0
      %2600 = vmatpush2.msra.mxu0 0.0
      %2601 = vmatprep.subr.mxu0 0.0
      %2602 = vmatpush2.msra.mxu0 0.0
      %2603 = vmatprep.subr.mxu0 0.0
      %2604 = vmatpush2.msra.mxu0 0.0
      %2605 = vmatprep.subr.mxu0 0.0
      %2606 = vmatpush2.msra.mxu0 0.0
      %2607 = vmatprep.subr.mxu0 0.0
      %2608 = vmatpush2.msra.mxu0 0.0
      %2609 = vmatprep.subr.mxu0 0.0
      %2610 = vmatpush2.msra.mxu0 0.0
      %2611 = vmatprep.subr.mxu0 0.0
      %2612 = vmatpush2.msra.mxu0 0.0
      %2613 = vmatprep.subr.mxu0 0.0
      %2614 = vmatpush2.msra.mxu0 0.0
      %2615 = vmatprep.subr.mxu0 0.0
      %2616 = vmatpush2.msra.mxu0 0.0
      %2617 = vmatprep.subr.mxu0 0.0
      %2618 = vmatpush2.msra.mxu0 0.0
      %2619 = vmatprep.subr.mxu0 0.0
      %2620 = vmatpush2.msra.mxu0 0.0
      %2621 = vmatprep.subr.mxu0 0.0
      %2622 = vmatpush2.msra.mxu0 0.0
      %2623 = vmatprep.subr.mxu0 0.0
      %2624 = vmatpush2.msra.mxu0 0.0
      %2625 = vmatprep.subr.mxu0 0.0
      %2626 = vmatpush2.msra.mxu0 0.0
      %2627 = vmatprep.subr.mxu0 0.0
      %2628 = vmatpush2.msra.mxu0 0.0
      %2629 = vmatprep.subr.mxu0 0.0
      %2630 = vmatpush2.msra.mxu0 0.0
      %2631 = vmatprep.mubr.f32.mxu0 0.0
      %2632 = vmatmul.mubr.f32.gmra.mxu0 %v2562
      %v2633 = vpop.f32.mrf.mxu0
      %v2634 = vadd.f32 0.0, %v2633
      %v2635 = vpop.f32.mrf.mxu0
      %2636 = vmatprep.mubr.f32.mxu0 0.0
      %2637 = vmatmul.mubr.f32.gmra.mxu0 %v2565
      %v2638 = vpop.f32.mrf.mxu0
      %v2639 = vadd.f32 0.0, %v2638
      %v2640 = vpop.f32.mrf.mxu0
      %2641 = vdwg.mxu0
      %2642 = vrot.lane.b32.xlu0 %v280, 76
      %v2643 = vpop.permute.xlu0 %2642
      %2644 = vrot.lane.b32.xlu0 %v282, 76
      %v2645 = vpop.permute.xlu0 %2644
      %2646 = vrot.lane.b32.xlu0 %v281, 76
      %v2647 = vpop.permute.xlu0 %2646
      %v2650 = vsel %vm279, 0.0, %v2643
      %v2651 = vsel %vm279, %v2647, 0.0
      %2652 = vrot.lane.b32.xlu0 %v280, 44
      %v2653 = vpop.permute.xlu0 %2652
      %2654 = vrot.lane.b32.xlu0 %v282, 44
      %v2655 = vpop.permute.xlu0 %2654
      %2656 = vrot.lane.b32.xlu0 %v281, 44
      %v2657 = vpop.permute.xlu0 %2656
      %v2661 = vsel %vm279, 0.0, %v2653
      %v2662 = vsel %vm279, %v2657, 0.0
      %s2664 = sor.u32 256, 20
      %2665 = vbcast.lane.b32.xlu0 %v307, %s2664
      %v2666 = vpop.permute.xlu0 %2665
      %s2668 = sor.u32 256, 20
      %2669 = vbcast.lane.b32.xlu0 %v314, %s2668
      %v2670 = vpop.permute.xlu0 %2669
      %s2672 = sor.u32 256, 20
      %2673 = vbcast.lane.b32.xlu0 %v321, %s2672
      %v2674 = vpop.permute.xlu0 %2673
      %s2676 = sor.u32 256, 20
      %2677 = vbcast.lane.b32.xlu0 %v328, %s2676
      %v2678 = vpop.permute.xlu0 %2677
      %s2680 = sor.u32 256, 20
      %2681 = vbcast.lane.b32.xlu0 %v335, %s2680
      %v2682 = vpop.permute.xlu0 %2681
      %s2684 = sor.u32 256, 20
      %2685 = vbcast.lane.b32.xlu0 %v342, %s2684
      %v2686 = vpop.permute.xlu0 %2685
      %s2688 = sor.u32 256, 20
      %2689 = vbcast.lane.b32.xlu0 %v349, %s2688
      %v2690 = vpop.permute.xlu0 %2689
      %s2692 = sor.u32 256, 20
      %2693 = vbcast.lane.b32.xlu0 %v356, %s2692
      %v2694 = vpop.permute.xlu0 %2693
      %s2696 = sor.u32 256, 20
      %2697 = vbcast.lane.b32.xlu0 %v363, %s2696
      %v2698 = vpop.permute.xlu0 %2697
      %s2700 = sor.u32 256, 20
      %2701 = vbcast.lane.b32.xlu0 %v370, %s2700
      %v2702 = vpop.permute.xlu0 %2701
      %s2704 = sor.u32 256, 20
      %2705 = vbcast.lane.b32.xlu0 %v377, %s2704
      %v2706 = vpop.permute.xlu0 %2705
      %s2708 = sor.u32 256, 20
      %2709 = vbcast.lane.b32.xlu0 %v384, %s2708
      %v2710 = vpop.permute.xlu0 %2709
      %s2712 = sor.u32 256, 20
      %2713 = vbcast.lane.b32.xlu0 %v391, %s2712
      %v2714 = vpop.permute.xlu0 %2713
      %s2716 = sor.u32 256, 20
      %2717 = vbcast.lane.b32.xlu0 %v398, %s2716
      %v2718 = vpop.permute.xlu0 %2717
      %s2720 = sor.u32 256, 20
      %2721 = vbcast.lane.b32.xlu0 %v405, %s2720
      %v2722 = vpop.permute.xlu0 %2721
      %s2724 = sor.u32 256, 20
      %2725 = vbcast.lane.b32.xlu0 %v412, %s2724
      %v2726 = vpop.permute.xlu0 %2725
      %s2727 = scalar_lea.vmem %s2, 320
      %v2728 = vld [vmem:[%s2727] sm:$0xf]
      %v2729 = vld [vmem:[%s2727 + $0x4] sm:$0xf]
      %v2730 = vld [vmem:[%s2727 + $0x8] sm:$0xf]
      %v2731 = vld [vmem:[%s2727 + $0xc] sm:$0xf]
      %v2732 = vld [vmem:[%s2727 + $0x10] sm:$0xf]
      %v2733 = vld [vmem:[%s2727 + $0x14] sm:$0xf]
      %v2734 = vld [vmem:[%s2727 + $0x18] sm:$0xf]
      %v2735 = vld [vmem:[%s2727 + $0x1c] sm:$0xf]
      %v2736 = vld [vmem:[%s2727 + $0x20] sm:$0xf]
      %v2737 = vld [vmem:[%s2727 + $0x24] sm:$0xf]
      %v2738 = vld [vmem:[%s2727 + $0x28] sm:$0xf]
      %v2739 = vld [vmem:[%s2727 + $0x2c] sm:$0xf]
      %v2740 = vld [vmem:[%s2727 + $0x30] sm:$0xf]
      %v2741 = vld [vmem:[%s2727 + $0x34] sm:$0xf]
      %v2742 = vld [vmem:[%s2727 + $0x38] sm:$0xf]
      %v2743 = vld [vmem:[%s2727 + $0x3c] sm:$0xf]
      %v2744 = vmul.f32 %v2666, %v2728
      %v2745 = vmul.f32 %v2670, %v2729
      %v2746 = vmul.f32 %v2674, %v2730
      %v2747 = vmul.f32 %v2678, %v2731
      %v2748 = vmul.f32 %v2682, %v2732
      %v2749 = vmul.f32 %v2686, %v2733
      %v2750 = vmul.f32 %v2690, %v2734
      %v2751 = vmul.f32 %v2694, %v2735
      %v2752 = vmul.f32 %v2698, %v2736
      %v2753 = vmul.f32 %v2702, %v2737
      %v2754 = vmul.f32 %v2706, %v2738
      %v2755 = vmul.f32 %v2710, %v2739
      %v2756 = vmul.f32 %v2714, %v2740
      %v2757 = vmul.f32 %v2718, %v2741
      %v2758 = vmul.f32 %v2722, %v2742
      %v2759 = vmul.f32 %v2726, %v2743
      %v2760 = vsel %vm448, %v2744, 0.0
      %v2761 = vrot.slane %v2760, 4
      %v2762 = vadd.f32 %v2760, %v2761
      %v2763 = vrot.slane %v2762, 2
      %v2764 = vadd.f32 %v2762, %v2763
      %v2765 = vrot.slane %v2764, 1
      %v2766 = vadd.f32 %v2764, %v2765
      %v2767 = vsel %vm448, %v2745, 0.0
      %v2768 = vrot.slane %v2767, 4
      %v2769 = vadd.f32 %v2767, %v2768
      %v2770 = vrot.slane %v2769, 2
      %v2771 = vadd.f32 %v2769, %v2770
      %v2772 = vrot.slane %v2771, 1
      %v2773 = vadd.f32 %v2771, %v2772
      %v2774 = vsel %vm448, %v2746, 0.0
      %v2775 = vrot.slane %v2774, 4
      %v2776 = vadd.f32 %v2774, %v2775
      %v2777 = vrot.slane %v2776, 2
      %v2778 = vadd.f32 %v2776, %v2777
      %v2779 = vrot.slane %v2778, 1
      %v2780 = vadd.f32 %v2778, %v2779
      %v2781 = vsel %vm448, %v2747, 0.0
      %v2782 = vrot.slane %v2781, 4
      %v2783 = vadd.f32 %v2781, %v2782
      %v2784 = vrot.slane %v2783, 2
      %v2785 = vadd.f32 %v2783, %v2784
      %v2786 = vrot.slane %v2785, 1
      %v2787 = vadd.f32 %v2785, %v2786
      %v2788 = vsel %vm448, %v2748, 0.0
      %v2789 = vrot.slane %v2788, 4
      %v2790 = vadd.f32 %v2788, %v2789
      %v2791 = vrot.slane %v2790, 2
      %v2792 = vadd.f32 %v2790, %v2791
      %v2793 = vrot.slane %v2792, 1
      %v2794 = vadd.f32 %v2792, %v2793
      %v2795 = vsel %vm448, %v2749, 0.0
      %v2796 = vrot.slane %v2795, 4
      %v2797 = vadd.f32 %v2795, %v2796
      %v2798 = vrot.slane %v2797, 2
      %v2799 = vadd.f32 %v2797, %v2798
      %v2800 = vrot.slane %v2799, 1
      %v2801 = vadd.f32 %v2799, %v2800
      %v2802 = vsel %vm448, %v2750, 0.0
      %v2803 = vrot.slane %v2802, 4
      %v2804 = vadd.f32 %v2802, %v2803
      %v2805 = vrot.slane %v2804, 2
      %v2806 = vadd.f32 %v2804, %v2805
      %v2807 = vrot.slane %v2806, 1
      %v2808 = vadd.f32 %v2806, %v2807
      %v2809 = vsel %vm448, %v2751, 0.0
      %v2810 = vrot.slane %v2809, 4
      %v2811 = vadd.f32 %v2809, %v2810
      %v2812 = vrot.slane %v2811, 2
      %v2813 = vadd.f32 %v2811, %v2812
      %v2814 = vrot.slane %v2813, 1
      %v2815 = vadd.f32 %v2813, %v2814
      %v2816 = vsel %vm448, %v2752, 0.0
      %v2817 = vrot.slane %v2816, 4
      %v2818 = vadd.f32 %v2816, %v2817
      %v2819 = vrot.slane %v2818, 2
      %v2820 = vadd.f32 %v2818, %v2819
      %v2821 = vrot.slane %v2820, 1
      %v2822 = vadd.f32 %v2820, %v2821
      %v2823 = vsel %vm448, %v2753, 0.0
      %v2824 = vrot.slane %v2823, 4
      %v2825 = vadd.f32 %v2823, %v2824
      %v2826 = vrot.slane %v2825, 2
      %v2827 = vadd.f32 %v2825, %v2826
      %v2828 = vrot.slane %v2827, 1
      %v2829 = vadd.f32 %v2827, %v2828
      %v2830 = vsel %vm448, %v2754, 0.0
      %v2831 = vrot.slane %v2830, 4
      %v2832 = vadd.f32 %v2830, %v2831
      %v2833 = vrot.slane %v2832, 2
      %v2834 = vadd.f32 %v2832, %v2833
      %v2835 = vrot.slane %v2834, 1
      %v2836 = vadd.f32 %v2834, %v2835
      %v2837 = vsel %vm448, %v2755, 0.0
      %v2838 = vrot.slane %v2837, 4
      %v2839 = vadd.f32 %v2837, %v2838
      %v2840 = vrot.slane %v2839, 2
      %v2841 = vadd.f32 %v2839, %v2840
      %v2842 = vrot.slane %v2841, 1
      %v2843 = vadd.f32 %v2841, %v2842
      %v2844 = vsel %vm448, %v2756, 0.0
      %v2845 = vrot.slane %v2844, 4
      %v2846 = vadd.f32 %v2844, %v2845
      %v2847 = vrot.slane %v2846, 2
      %v2848 = vadd.f32 %v2846, %v2847
      %v2849 = vrot.slane %v2848, 1
      %v2850 = vadd.f32 %v2848, %v2849
      %v2851 = vsel %vm448, %v2757, 0.0
      %v2852 = vrot.slane %v2851, 4
      %v2853 = vadd.f32 %v2851, %v2852
      %v2854 = vrot.slane %v2853, 2
      %v2855 = vadd.f32 %v2853, %v2854
      %v2856 = vrot.slane %v2855, 1
      %v2857 = vadd.f32 %v2855, %v2856
      %v2858 = vsel %vm448, %v2758, 0.0
      %v2859 = vrot.slane %v2858, 4
      %v2860 = vadd.f32 %v2858, %v2859
      %v2861 = vrot.slane %v2860, 2
      %v2862 = vadd.f32 %v2860, %v2861
      %v2863 = vrot.slane %v2862, 1
      %v2864 = vadd.f32 %v2862, %v2863
      %v2865 = vsel %vm448, %v2759, 0.0
      %v2866 = vrot.slane %v2865, 4
      %v2867 = vadd.f32 %v2865, %v2866
      %v2868 = vrot.slane %v2867, 2
      %v2869 = vadd.f32 %v2867, %v2868
      %v2870 = vrot.slane %v2869, 1
      %v2871 = vadd.f32 %v2869, %v2870
      %2872 = vrot.lane.b32.xlu0 %v275, 108
      %v2873 = vpop.permute.xlu0 %2872
      %2874 = vrot.lane.b32.xlu0 %v276, 108
      %v2875 = vpop.permute.xlu0 %2874
      %v2892 = vsel %vm577, %v2773, %v2766
      %v2893 = vsel %vm579, %v2780, %v2892
      %v2894 = vsel %vm581, %v2787, %v2893
      %v2895 = vsel %vm583, %v2794, %v2894
      %v2896 = vsel %vm585, %v2801, %v2895
      %v2897 = vsel %vm587, %v2808, %v2896
      %v2898 = vsel %vm589, %v2815, %v2897
      %v2899 = vsel %vm577, %v2829, %v2822
      %v2900 = vsel %vm579, %v2836, %v2899
      %v2901 = vsel %vm581, %v2843, %v2900
      %v2902 = vsel %vm583, %v2850, %v2901
      %v2903 = vsel %vm585, %v2857, %v2902
      %v2904 = vsel %vm587, %v2864, %v2903
      %v2905 = vsel %vm589, %v2871, %v2904
      %v2908 = vsel %vm600, %v2873, 0
      %v2910 = vsel %vm600, %v2875, 0
      %v2913 = vsel %vm600, %v2650, 0
      %v2915 = vsel %vm600, %v2645, 0
      %v2918 = vsel %vm600, %v2651, 0
      %2920 = vmatprep.subr.mxu0 0.0
      %2921 = vmatpush1.xpose.msra.mxu0 0.0
      %2922 = vmatprep.subr.mxu0 0.0
      %2923 = vmatpush1.xpose.msra.mxu0 0.0
      %2924 = vmatprep.subr.mxu0 0.0
      %2925 = vmatpush1.xpose.msra.mxu0 0.0
      %2926 = vmatprep.subr.mxu0 0.0
      %2927 = vmatpush1.xpose.msra.mxu0 0.0
      %2928 = vmatprep.subr.mxu0 0.0
      %2929 = vmatpush1.xpose.msra.mxu0 0.0
      %2930 = vmatprep.subr.mxu0 0.0
      %2931 = vmatpush1.xpose.msra.mxu0 0.0
      %2932 = vmatprep.subr.mxu0 0.0
      %2933 = vmatpush1.xpose.msra.mxu0 0.0
      %2934 = vmatprep.subr.mxu0 0.0
      %2935 = vmatpush1.xpose.msra.mxu0 0.0
      %2936 = vmatprep.subr.mxu0 0.0
      %2937 = vmatpush1.xpose.msra.mxu0 0.0
      %2938 = vmatprep.subr.mxu0 0.0
      %2939 = vmatpush1.xpose.msra.mxu0 0.0
      %2940 = vmatprep.subr.mxu0 0.0
      %2941 = vmatpush1.xpose.msra.mxu0 0.0
      %2942 = vmatprep.subr.mxu0 0.0
      %2943 = vmatpush1.xpose.msra.mxu0 %v606
      %2944 = vmatprep.subr.mxu0 0.0
      %2945 = vmatpush1.xpose.msra.mxu0 %v2918
      %2946 = vmatprep.subr.mxu0 0.0
      %2947 = vmatpush1.xpose.msra.mxu0 %v2915
      %2948 = vmatprep.subr.mxu0 0.0
      %2949 = vmatpush1.xpose.msra.mxu0 %v2913
      %2950 = vmatprep.subr.mxu0 0.0
      %2951 = vmatpush1.xpose.msra.mxu0 %v606
      %2952 = vmatprep.subr.mxu0 0.0
      %2953 = vmatpush2.xpose.msra.mxu0 0.0
      %2954 = vmatprep.subr.mxu0 0.0
      %2955 = vmatpush2.xpose.msra.mxu0 0.0
      %2956 = vmatprep.subr.mxu0 0.0
      %2957 = vmatpush2.xpose.msra.mxu0 0.0
      %2958 = vmatprep.subr.mxu0 0.0
      %2959 = vmatpush2.xpose.msra.mxu0 0.0
      %2960 = vmatprep.subr.mxu0 0.0
      %2961 = vmatpush2.xpose.msra.mxu0 0.0
      %2962 = vmatprep.subr.mxu0 0.0
      %2963 = vmatpush2.xpose.msra.mxu0 0.0
      %2964 = vmatprep.subr.mxu0 0.0
      %2965 = vmatpush2.xpose.msra.mxu0 0.0
      %2966 = vmatprep.subr.mxu0 0.0
      %2967 = vmatpush2.xpose.msra.mxu0 0.0
      %2968 = vmatprep.subr.mxu0 0.0
      %2969 = vmatpush2.xpose.msra.mxu0 0.0
      %2970 = vmatprep.subr.mxu0 0.0
      %2971 = vmatpush2.xpose.msra.mxu0 0.0
      %2972 = vmatprep.subr.mxu0 0.0
      %2973 = vmatpush2.xpose.msra.mxu0 0.0
      %2974 = vmatprep.subr.mxu0 0.0
      %2975 = vmatpush2.xpose.msra.mxu0 0.0
      %2976 = vmatprep.subr.mxu0 0.0
      %2977 = vmatpush2.xpose.msra.mxu0 0.0
      %2978 = vmatprep.subr.mxu0 0.0
      %2979 = vmatpush2.xpose.msra.mxu0 0.0
      %2980 = vmatprep.subr.mxu0 0.0
      %2981 = vmatpush2.xpose.msra.mxu0 0.0
      %2982 = vmatprep.subr.mxu0 0.0
      %2983 = vmatpush2.xpose.msra.mxu0 0.0
      %2984 = vmatprep.mubr.f32.mxu0 0.0
      %2985 = vmatmul.mubr.f32.gmra.mxu0 %v2908
      %v2986 = vpop.f32.mrf.mxu0
      %v2987 = vadd.f32 %v2898, %v2986
      %v2988 = vpop.f32.mrf.mxu0
      %2989 = vmatprep.mubr.f32.mxu0 0.0
      %2990 = vmatmul.mubr.f32.gmra.mxu0 %v2910
      %v2991 = vpop.f32.mrf.mxu0
      %v2992 = vadd.f32 %v2905, %v2991
      %v2993 = vpop.f32.mrf.mxu0
      %2994 = vdwg.mxu0
      %v2995 = vmul.f32 %v2987, 0.17677669
      %v2996 = vmul.f32 %v2992, 0.17677669
      %v2997 = vsel %vm273, %v2995, -1e+30
      %v2998 = vsel %vm274, %v2996, -1e+30
      %v2999 = vsel %vm695, %v2997, -inf
      %3000 = vmax.xlane.f32.xlu0 %v2999
      %v3001 = vpop.xlane.xlu0 %3000
      %v3002 = vsel %vm695, %v2998, -inf
      %3003 = vmax.xlane.f32.xlu0 %v3002
      %v3004 = vpop.xlane.xlu0 %3003
      %v3005 = vsub.f32 %v2997, %v3001
      %v3006 = vsub.f32 %v2998, %v3004
      %v3007 = vmul.f32 %v3005, 1.442695
      %v3008 = vpow.pop %v3007
      %v3009 = vmul.f32 %v3006, 1.442695
      %v3010 = vpow.pop %v3009
      %v3011 = vsel %vm695, %v3008, 0.0
      %3012 = vadd.xlane.f32.xlu0 %v3011
      %v3013 = vpop.xlane.xlu0 %3012
      %v3014 = vsel %vm695, %v3010, 0.0
      %3015 = vadd.xlane.f32.xlu0 %v3014
      %v3016 = vpop.xlane.xlu0 %3015
      %v3017 = vrcp.pop %v3013
      %v3018 = vmul.f32 %v3008, %v3017
      %v3019 = vrcp.pop %v3016
      %v3020 = vmul.f32 %v3010, %v3019
      %v3022 = vsel %vm695, %v3018, 0
      %v3025 = vsel %vm695, %v3020, 0
      %3027 = vmatprep.subr.mxu0 0.0
      %3028 = vmatpush1.msra.mxu0 0.0
      %3029 = vmatprep.subr.mxu0 0.0
      %3030 = vmatpush1.msra.mxu0 0.0
      %3031 = vmatprep.subr.mxu0 0.0
      %3032 = vmatpush1.msra.mxu0 0.0
      %3033 = vmatprep.subr.mxu0 0.0
      %3034 = vmatpush1.msra.mxu0 0.0
      %3035 = vmatprep.subr.mxu0 0.0
      %3036 = vmatpush1.msra.mxu0 0.0
      %3037 = vmatprep.subr.mxu0 0.0
      %3038 = vmatpush1.msra.mxu0 0.0
      %3039 = vmatprep.subr.mxu0 0.0
      %3040 = vmatpush1.msra.mxu0 0.0
      %3041 = vmatprep.subr.mxu0 0.0
      %3042 = vmatpush1.msra.mxu0 0.0
      %3043 = vmatprep.subr.mxu0 0.0
      %3044 = vmatpush1.msra.mxu0 0.0
      %3045 = vmatprep.subr.mxu0 0.0
      %3046 = vmatpush1.msra.mxu0 0.0
      %3047 = vmatprep.subr.mxu0 0.0
      %3048 = vmatpush1.msra.mxu0 0.0
      %3049 = vmatprep.subr.mxu0 0.0
      %3050 = vmatpush1.msra.mxu0 %v725
      %3051 = vmatprep.subr.mxu0 0.0
      %3052 = vmatpush1.msra.mxu0 %v2662
      %3053 = vmatprep.subr.mxu0 0.0
      %3054 = vmatpush1.msra.mxu0 %v2655
      %3055 = vmatprep.subr.mxu0 0.0
      %3056 = vmatpush1.msra.mxu0 %v2661
      %3057 = vmatprep.subr.mxu0 0.0
      %3058 = vmatpush1.msra.mxu0 0.0
      %3059 = vmatprep.subr.mxu0 0.0
      %3060 = vmatpush2.msra.mxu0 0.0
      %3061 = vmatprep.subr.mxu0 0.0
      %3062 = vmatpush2.msra.mxu0 0.0
      %3063 = vmatprep.subr.mxu0 0.0
      %3064 = vmatpush2.msra.mxu0 0.0
      %3065 = vmatprep.subr.mxu0 0.0
      %3066 = vmatpush2.msra.mxu0 0.0
      %3067 = vmatprep.subr.mxu0 0.0
      %3068 = vmatpush2.msra.mxu0 0.0
      %3069 = vmatprep.subr.mxu0 0.0
      %3070 = vmatpush2.msra.mxu0 0.0
      %3071 = vmatprep.subr.mxu0 0.0
      %3072 = vmatpush2.msra.mxu0 0.0
      %3073 = vmatprep.subr.mxu0 0.0
      %3074 = vmatpush2.msra.mxu0 0.0
      %3075 = vmatprep.subr.mxu0 0.0
      %3076 = vmatpush2.msra.mxu0 0.0
      %3077 = vmatprep.subr.mxu0 0.0
      %3078 = vmatpush2.msra.mxu0 0.0
      %3079 = vmatprep.subr.mxu0 0.0
      %3080 = vmatpush2.msra.mxu0 0.0
      %3081 = vmatprep.subr.mxu0 0.0
      %3082 = vmatpush2.msra.mxu0 0.0
      %3083 = vmatprep.subr.mxu0 0.0
      %3084 = vmatpush2.msra.mxu0 0.0
      %3085 = vmatprep.subr.mxu0 0.0
      %3086 = vmatpush2.msra.mxu0 0.0
      %3087 = vmatprep.subr.mxu0 0.0
      %3088 = vmatpush2.msra.mxu0 0.0
      %3089 = vmatprep.subr.mxu0 0.0
      %3090 = vmatpush2.msra.mxu0 0.0
      %3091 = vmatprep.mubr.f32.mxu0 0.0
      %3092 = vmatmul.mubr.f32.gmra.mxu0 %v3022
      %v3093 = vpop.f32.mrf.mxu0
      %v3094 = vadd.f32 0.0, %v3093
      %v3095 = vpop.f32.mrf.mxu0
      %3096 = vmatprep.mubr.f32.mxu0 0.0
      %3097 = vmatmul.mubr.f32.gmra.mxu0 %v3025
      %v3098 = vpop.f32.mrf.mxu0
      %v3099 = vadd.f32 0.0, %v3098
      %v3100 = vpop.f32.mrf.mxu0
      %3101 = vdwg.mxu0
      %3102 = vrot.lane.b32.xlu0 %v280, 72
      %v3103 = vpop.permute.xlu0 %3102
      %3104 = vrot.lane.b32.xlu0 %v282, 72
      %v3105 = vpop.permute.xlu0 %3104
      %3106 = vrot.lane.b32.xlu0 %v281, 72
      %v3107 = vpop.permute.xlu0 %3106
      %v3110 = vsel %vm279, 0.0, %v3103
      %v3111 = vsel %vm279, %v3107, 0.0
      %3112 = vrot.lane.b32.xlu0 %v280, 40
      %v3113 = vpop.permute.xlu0 %3112
      %3114 = vrot.lane.b32.xlu0 %v282, 40
      %v3115 = vpop.permute.xlu0 %3114
      %3116 = vrot.lane.b32.xlu0 %v281, 40
      %v3117 = vpop.permute.xlu0 %3116
      %v3121 = vsel %vm279, 0.0, %v3113
      %v3122 = vsel %vm279, %v3117, 0.0
      %s3124 = sor.u32 256, 24
      %3125 = vbcast.lane.b32.xlu0 %v307, %s3124
      %v3126 = vpop.permute.xlu0 %3125
      %s3128 = sor.u32 256, 24
      %3129 = vbcast.lane.b32.xlu0 %v314, %s3128
      %v3130 = vpop.permute.xlu0 %3129
      %s3132 = sor.u32 256, 24
      %3133 = vbcast.lane.b32.xlu0 %v321, %s3132
      %v3134 = vpop.permute.xlu0 %3133
      %s3136 = sor.u32 256, 24
      %3137 = vbcast.lane.b32.xlu0 %v328, %s3136
      %v3138 = vpop.permute.xlu0 %3137
      %s3140 = sor.u32 256, 24
      %3141 = vbcast.lane.b32.xlu0 %v335, %s3140
      %v3142 = vpop.permute.xlu0 %3141
      %s3144 = sor.u32 256, 24
      %3145 = vbcast.lane.b32.xlu0 %v342, %s3144
      %v3146 = vpop.permute.xlu0 %3145
      %s3148 = sor.u32 256, 24
      %3149 = vbcast.lane.b32.xlu0 %v349, %s3148
      %v3150 = vpop.permute.xlu0 %3149
      %s3152 = sor.u32 256, 24
      %3153 = vbcast.lane.b32.xlu0 %v356, %s3152
      %v3154 = vpop.permute.xlu0 %3153
      %s3156 = sor.u32 256, 24
      %3157 = vbcast.lane.b32.xlu0 %v363, %s3156
      %v3158 = vpop.permute.xlu0 %3157
      %s3160 = sor.u32 256, 24
      %3161 = vbcast.lane.b32.xlu0 %v370, %s3160
      %v3162 = vpop.permute.xlu0 %3161
      %s3164 = sor.u32 256, 24
      %3165 = vbcast.lane.b32.xlu0 %v377, %s3164
      %v3166 = vpop.permute.xlu0 %3165
      %s3168 = sor.u32 256, 24
      %3169 = vbcast.lane.b32.xlu0 %v384, %s3168
      %v3170 = vpop.permute.xlu0 %3169
      %s3172 = sor.u32 256, 24
      %3173 = vbcast.lane.b32.xlu0 %v391, %s3172
      %v3174 = vpop.permute.xlu0 %3173
      %s3176 = sor.u32 256, 24
      %3177 = vbcast.lane.b32.xlu0 %v398, %s3176
      %v3178 = vpop.permute.xlu0 %3177
      %s3180 = sor.u32 256, 24
      %3181 = vbcast.lane.b32.xlu0 %v405, %s3180
      %v3182 = vpop.permute.xlu0 %3181
      %s3184 = sor.u32 256, 24
      %3185 = vbcast.lane.b32.xlu0 %v412, %s3184
      %v3186 = vpop.permute.xlu0 %3185
      %s3187 = scalar_lea.vmem %s2, 384
      %v3188 = vld [vmem:[%s3187] sm:$0xf]
      %v3189 = vld [vmem:[%s3187 + $0x4] sm:$0xf]
      %v3190 = vld [vmem:[%s3187 + $0x8] sm:$0xf]
      %v3191 = vld [vmem:[%s3187 + $0xc] sm:$0xf]
      %v3192 = vld [vmem:[%s3187 + $0x10] sm:$0xf]
      %v3193 = vld [vmem:[%s3187 + $0x14] sm:$0xf]
      %v3194 = vld [vmem:[%s3187 + $0x18] sm:$0xf]
      %v3195 = vld [vmem:[%s3187 + $0x1c] sm:$0xf]
      %v3196 = vld [vmem:[%s3187 + $0x20] sm:$0xf]
      %v3197 = vld [vmem:[%s3187 + $0x24] sm:$0xf]
      %v3198 = vld [vmem:[%s3187 + $0x28] sm:$0xf]
      %v3199 = vld [vmem:[%s3187 + $0x2c] sm:$0xf]
      %v3200 = vld [vmem:[%s3187 + $0x30] sm:$0xf]
      %v3201 = vld [vmem:[%s3187 + $0x34] sm:$0xf]
      %v3202 = vld [vmem:[%s3187 + $0x38] sm:$0xf]
      %v3203 = vld [vmem:[%s3187 + $0x3c] sm:$0xf]
      %v3204 = vmul.f32 %v3126, %v3188
      %v3205 = vmul.f32 %v3130, %v3189
      %v3206 = vmul.f32 %v3134, %v3190
      %v3207 = vmul.f32 %v3138, %v3191
      %v3208 = vmul.f32 %v3142, %v3192
      %v3209 = vmul.f32 %v3146, %v3193
      %v3210 = vmul.f32 %v3150, %v3194
      %v3211 = vmul.f32 %v3154, %v3195
      %v3212 = vmul.f32 %v3158, %v3196
      %v3213 = vmul.f32 %v3162, %v3197
      %v3214 = vmul.f32 %v3166, %v3198
      %v3215 = vmul.f32 %v3170, %v3199
      %v3216 = vmul.f32 %v3174, %v3200
      %v3217 = vmul.f32 %v3178, %v3201
      %v3218 = vmul.f32 %v3182, %v3202
      %v3219 = vmul.f32 %v3186, %v3203
      %v3220 = vsel %vm448, %v3204, 0.0
      %v3221 = vrot.slane %v3220, 4
      %v3222 = vadd.f32 %v3220, %v3221
      %v3223 = vrot.slane %v3222, 2
      %v3224 = vadd.f32 %v3222, %v3223
      %v3225 = vrot.slane %v3224, 1
      %v3226 = vadd.f32 %v3224, %v3225
      %v3227 = vsel %vm448, %v3205, 0.0
      %v3228 = vrot.slane %v3227, 4
      %v3229 = vadd.f32 %v3227, %v3228
      %v3230 = vrot.slane %v3229, 2
      %v3231 = vadd.f32 %v3229, %v3230
      %v3232 = vrot.slane %v3231, 1
      %v3233 = vadd.f32 %v3231, %v3232
      %v3234 = vsel %vm448, %v3206, 0.0
      %v3235 = vrot.slane %v3234, 4
      %v3236 = vadd.f32 %v3234, %v3235
      %v3237 = vrot.slane %v3236, 2
      %v3238 = vadd.f32 %v3236, %v3237
      %v3239 = vrot.slane %v3238, 1
      %v3240 = vadd.f32 %v3238, %v3239
      %v3241 = vsel %vm448, %v3207, 0.0
      %v3242 = vrot.slane %v3241, 4
      %v3243 = vadd.f32 %v3241, %v3242
      %v3244 = vrot.slane %v3243, 2
      %v3245 = vadd.f32 %v3243, %v3244
      %v3246 = vrot.slane %v3245, 1
      %v3247 = vadd.f32 %v3245, %v3246
      %v3248 = vsel %vm448, %v3208, 0.0
      %v3249 = vrot.slane %v3248, 4
      %v3250 = vadd.f32 %v3248, %v3249
      %v3251 = vrot.slane %v3250, 2
      %v3252 = vadd.f32 %v3250, %v3251
      %v3253 = vrot.slane %v3252, 1
      %v3254 = vadd.f32 %v3252, %v3253
      %v3255 = vsel %vm448, %v3209, 0.0
      %v3256 = vrot.slane %v3255, 4
      %v3257 = vadd.f32 %v3255, %v3256
      %v3258 = vrot.slane %v3257, 2
      %v3259 = vadd.f32 %v3257, %v3258
      %v3260 = vrot.slane %v3259, 1
      %v3261 = vadd.f32 %v3259, %v3260
      %v3262 = vsel %vm448, %v3210, 0.0
      %v3263 = vrot.slane %v3262, 4
      %v3264 = vadd.f32 %v3262, %v3263
      %v3265 = vrot.slane %v3264, 2
      %v3266 = vadd.f32 %v3264, %v3265
      %v3267 = vrot.slane %v3266, 1
      %v3268 = vadd.f32 %v3266, %v3267
      %v3269 = vsel %vm448, %v3211, 0.0
      %v3270 = vrot.slane %v3269, 4
      %v3271 = vadd.f32 %v3269, %v3270
      %v3272 = vrot.slane %v3271, 2
      %v3273 = vadd.f32 %v3271, %v3272
      %v3274 = vrot.slane %v3273, 1
      %v3275 = vadd.f32 %v3273, %v3274
      %v3276 = vsel %vm448, %v3212, 0.0
      %v3277 = vrot.slane %v3276, 4
      %v3278 = vadd.f32 %v3276, %v3277
      %v3279 = vrot.slane %v3278, 2
      %v3280 = vadd.f32 %v3278, %v3279
      %v3281 = vrot.slane %v3280, 1
      %v3282 = vadd.f32 %v3280, %v3281
      %v3283 = vsel %vm448, %v3213, 0.0
      %v3284 = vrot.slane %v3283, 4
      %v3285 = vadd.f32 %v3283, %v3284
      %v3286 = vrot.slane %v3285, 2
      %v3287 = vadd.f32 %v3285, %v3286
      %v3288 = vrot.slane %v3287, 1
      %v3289 = vadd.f32 %v3287, %v3288
      %v3290 = vsel %vm448, %v3214, 0.0
      %v3291 = vrot.slane %v3290, 4
      %v3292 = vadd.f32 %v3290, %v3291
      %v3293 = vrot.slane %v3292, 2
      %v3294 = vadd.f32 %v3292, %v3293
      %v3295 = vrot.slane %v3294, 1
      %v3296 = vadd.f32 %v3294, %v3295
      %v3297 = vsel %vm448, %v3215, 0.0
      %v3298 = vrot.slane %v3297, 4
      %v3299 = vadd.f32 %v3297, %v3298
      %v3300 = vrot.slane %v3299, 2
      %v3301 = vadd.f32 %v3299, %v3300
      %v3302 = vrot.slane %v3301, 1
      %v3303 = vadd.f32 %v3301, %v3302
      %v3304 = vsel %vm448, %v3216, 0.0
      %v3305 = vrot.slane %v3304, 4
      %v3306 = vadd.f32 %v3304, %v3305
      %v3307 = vrot.slane %v3306, 2
      %v3308 = vadd.f32 %v3306, %v3307
      %v3309 = vrot.slane %v3308, 1
      %v3310 = vadd.f32 %v3308, %v3309
      %v3311 = vsel %vm448, %v3217, 0.0
      %v3312 = vrot.slane %v3311, 4
      %v3313 = vadd.f32 %v3311, %v3312
      %v3314 = vrot.slane %v3313, 2
      %v3315 = vadd.f32 %v3313, %v3314
      %v3316 = vrot.slane %v3315, 1
      %v3317 = vadd.f32 %v3315, %v3316
      %v3318 = vsel %vm448, %v3218, 0.0
      %v3319 = vrot.slane %v3318, 4
      %v3320 = vadd.f32 %v3318, %v3319
      %v3321 = vrot.slane %v3320, 2
      %v3322 = vadd.f32 %v3320, %v3321
      %v3323 = vrot.slane %v3322, 1
      %v3324 = vadd.f32 %v3322, %v3323
      %v3325 = vsel %vm448, %v3219, 0.0
      %v3326 = vrot.slane %v3325, 4
      %v3327 = vadd.f32 %v3325, %v3326
      %v3328 = vrot.slane %v3327, 2
      %v3329 = vadd.f32 %v3327, %v3328
      %v3330 = vrot.slane %v3329, 1
      %v3331 = vadd.f32 %v3329, %v3330
      %3332 = vrot.lane.b32.xlu0 %v275, 104
      %v3333 = vpop.permute.xlu0 %3332
      %3334 = vrot.lane.b32.xlu0 %v276, 104
      %v3335 = vpop.permute.xlu0 %3334
      %v3352 = vsel %vm577, %v3233, %v3226
      %v3353 = vsel %vm579, %v3240, %v3352
      %v3354 = vsel %vm581, %v3247, %v3353
      %v3355 = vsel %vm583, %v3254, %v3354
      %v3356 = vsel %vm585, %v3261, %v3355
      %v3357 = vsel %vm587, %v3268, %v3356
      %v3358 = vsel %vm589, %v3275, %v3357
      %v3359 = vsel %vm577, %v3289, %v3282
      %v3360 = vsel %vm579, %v3296, %v3359
      %v3361 = vsel %vm581, %v3303, %v3360
      %v3362 = vsel %vm583, %v3310, %v3361
      %v3363 = vsel %vm585, %v3317, %v3362
      %v3364 = vsel %vm587, %v3324, %v3363
      %v3365 = vsel %vm589, %v3331, %v3364
      %v3368 = vsel %vm600, %v3333, 0
      %v3370 = vsel %vm600, %v3335, 0
      %v3373 = vsel %vm600, %v3110, 0
      %v3375 = vsel %vm600, %v3105, 0
      %v3378 = vsel %vm600, %v3111, 0
      %3380 = vmatprep.subr.mxu0 0.0
      %3381 = vmatpush1.xpose.msra.mxu0 0.0
      %3382 = vmatprep.subr.mxu0 0.0
      %3383 = vmatpush1.xpose.msra.mxu0 0.0
      %3384 = vmatprep.subr.mxu0 0.0
      %3385 = vmatpush1.xpose.msra.mxu0 0.0
      %3386 = vmatprep.subr.mxu0 0.0
      %3387 = vmatpush1.xpose.msra.mxu0 0.0
      %3388 = vmatprep.subr.mxu0 0.0
      %3389 = vmatpush1.xpose.msra.mxu0 0.0
      %3390 = vmatprep.subr.mxu0 0.0
      %3391 = vmatpush1.xpose.msra.mxu0 0.0
      %3392 = vmatprep.subr.mxu0 0.0
      %3393 = vmatpush1.xpose.msra.mxu0 0.0
      %3394 = vmatprep.subr.mxu0 0.0
      %3395 = vmatpush1.xpose.msra.mxu0 0.0
      %3396 = vmatprep.subr.mxu0 0.0
      %3397 = vmatpush1.xpose.msra.mxu0 0.0
      %3398 = vmatprep.subr.mxu0 0.0
      %3399 = vmatpush1.xpose.msra.mxu0 0.0
      %3400 = vmatprep.subr.mxu0 0.0
      %3401 = vmatpush1.xpose.msra.mxu0 0.0
      %3402 = vmatprep.subr.mxu0 0.0
      %3403 = vmatpush1.xpose.msra.mxu0 %v606
      %3404 = vmatprep.subr.mxu0 0.0
      %3405 = vmatpush1.xpose.msra.mxu0 %v3378
      %3406 = vmatprep.subr.mxu0 0.0
      %3407 = vmatpush1.xpose.msra.mxu0 %v3375
      %3408 = vmatprep.subr.mxu0 0.0
      %3409 = vmatpush1.xpose.msra.mxu0 %v3373
      %3410 = vmatprep.subr.mxu0 0.0
      %3411 = vmatpush1.xpose.msra.mxu0 %v606
      %3412 = vmatprep.subr.mxu0 0.0
      %3413 = vmatpush2.xpose.msra.mxu0 0.0
      %3414 = vmatprep.subr.mxu0 0.0
      %3415 = vmatpush2.xpose.msra.mxu0 0.0
      %3416 = vmatprep.subr.mxu0 0.0
      %3417 = vmatpush2.xpose.msra.mxu0 0.0
      %3418 = vmatprep.subr.mxu0 0.0
      %3419 = vmatpush2.xpose.msra.mxu0 0.0
      %3420 = vmatprep.subr.mxu0 0.0
      %3421 = vmatpush2.xpose.msra.mxu0 0.0
      %3422 = vmatprep.subr.mxu0 0.0
      %3423 = vmatpush2.xpose.msra.mxu0 0.0
      %3424 = vmatprep.subr.mxu0 0.0
      %3425 = vmatpush2.xpose.msra.mxu0 0.0
      %3426 = vmatprep.subr.mxu0 0.0
      %3427 = vmatpush2.xpose.msra.mxu0 0.0
      %3428 = vmatprep.subr.mxu0 0.0
      %3429 = vmatpush2.xpose.msra.mxu0 0.0
      %3430 = vmatprep.subr.mxu0 0.0
      %3431 = vmatpush2.xpose.msra.mxu0 0.0
      %3432 = vmatprep.subr.mxu0 0.0
      %3433 = vmatpush2.xpose.msra.mxu0 0.0
      %3434 = vmatprep.subr.mxu0 0.0
      %3435 = vmatpush2.xpose.msra.mxu0 0.0
      %3436 = vmatprep.subr.mxu0 0.0
      %3437 = vmatpush2.xpose.msra.mxu0 0.0
      %3438 = vmatprep.subr.mxu0 0.0
      %3439 = vmatpush2.xpose.msra.mxu0 0.0
      %3440 = vmatprep.subr.mxu0 0.0
      %3441 = vmatpush2.xpose.msra.mxu0 0.0
      %3442 = vmatprep.subr.mxu0 0.0
      %3443 = vmatpush2.xpose.msra.mxu0 0.0
      %3444 = vmatprep.mubr.f32.mxu0 0.0
      %3445 = vmatmul.mubr.f32.gmra.mxu0 %v3368
      %v3446 = vpop.f32.mrf.mxu0
      %v3447 = vadd.f32 %v3358, %v3446
      %v3448 = vpop.f32.mrf.mxu0
      %3449 = vmatprep.mubr.f32.mxu0 0.0
      %3450 = vmatmul.mubr.f32.gmra.mxu0 %v3370
      %v3451 = vpop.f32.mrf.mxu0
      %v3452 = vadd.f32 %v3365, %v3451
      %v3453 = vpop.f32.mrf.mxu0
      %3454 = vdwg.mxu0
      %v3455 = vmul.f32 %v3447, 0.17677669
      %v3456 = vmul.f32 %v3452, 0.17677669
      %v3457 = vsel %vm273, %v3455, -1e+30
      %v3458 = vsel %vm274, %v3456, -1e+30
      %v3459 = vsel %vm695, %v3457, -inf
      %3460 = vmax.xlane.f32.xlu0 %v3459
      %v3461 = vpop.xlane.xlu0 %3460
      %v3462 = vsel %vm695, %v3458, -inf
      %3463 = vmax.xlane.f32.xlu0 %v3462
      %v3464 = vpop.xlane.xlu0 %3463
      %v3465 = vsub.f32 %v3457, %v3461
      %v3466 = vsub.f32 %v3458, %v3464
      %v3467 = vmul.f32 %v3465, 1.442695
      %v3468 = vpow.pop %v3467
      %v3469 = vmul.f32 %v3466, 1.442695
      %v3470 = vpow.pop %v3469
      %v3471 = vsel %vm695, %v3468, 0.0
      %3472 = vadd.xlane.f32.xlu0 %v3471
      %v3473 = vpop.xlane.xlu0 %3472
      %v3474 = vsel %vm695, %v3470, 0.0
      %3475 = vadd.xlane.f32.xlu0 %v3474
      %v3476 = vpop.xlane.xlu0 %3475
      %v3477 = vrcp.pop %v3473
      %v3478 = vmul.f32 %v3468, %v3477
      %v3479 = vrcp.pop %v3476
      %v3480 = vmul.f32 %v3470, %v3479
      %v3482 = vsel %vm695, %v3478, 0
      %v3485 = vsel %vm695, %v3480, 0
      %3487 = vmatprep.subr.mxu0 0.0
      %3488 = vmatpush1.msra.mxu0 0.0
      %3489 = vmatprep.subr.mxu0 0.0
      %3490 = vmatpush1.msra.mxu0 0.0
      %3491 = vmatprep.subr.mxu0 0.0
      %3492 = vmatpush1.msra.mxu0 0.0
      %3493 = vmatprep.subr.mxu0 0.0
      %3494 = vmatpush1.msra.mxu0 0.0
      %3495 = vmatprep.subr.mxu0 0.0
      %3496 = vmatpush1.msra.mxu0 0.0
      %3497 = vmatprep.subr.mxu0 0.0
      %3498 = vmatpush1.msra.mxu0 0.0
      %3499 = vmatprep.subr.mxu0 0.0
      %3500 = vmatpush1.msra.mxu0 0.0
      %3501 = vmatprep.subr.mxu0 0.0
      %3502 = vmatpush1.msra.mxu0 0.0
      %3503 = vmatprep.subr.mxu0 0.0
      %3504 = vmatpush1.msra.mxu0 0.0
      %3505 = vmatprep.subr.mxu0 0.0
      %3506 = vmatpush1.msra.mxu0 0.0
      %3507 = vmatprep.subr.mxu0 0.0
      %3508 = vmatpush1.msra.mxu0 0.0
      %3509 = vmatprep.subr.mxu0 0.0
      %3510 = vmatpush1.msra.mxu0 %v725
      %3511 = vmatprep.subr.mxu0 0.0
      %3512 = vmatpush1.msra.mxu0 %v3122
      %3513 = vmatprep.subr.mxu0 0.0
      %3514 = vmatpush1.msra.mxu0 %v3115
      %3515 = vmatprep.subr.mxu0 0.0
      %3516 = vmatpush1.msra.mxu0 %v3121
      %3517 = vmatprep.subr.mxu0 0.0
      %3518 = vmatpush1.msra.mxu0 0.0
      %3519 = vmatprep.subr.mxu0 0.0
      %3520 = vmatpush2.msra.mxu0 0.0
      %3521 = vmatprep.subr.mxu0 0.0
      %3522 = vmatpush2.msra.mxu0 0.0
      %3523 = vmatprep.subr.mxu0 0.0
      %3524 = vmatpush2.msra.mxu0 0.0
      %3525 = vmatprep.subr.mxu0 0.0
      %3526 = vmatpush2.msra.mxu0 0.0
      %3527 = vmatprep.subr.mxu0 0.0
      %3528 = vmatpush2.msra.mxu0 0.0
      %3529 = vmatprep.subr.mxu0 0.0
      %3530 = vmatpush2.msra.mxu0 0.0
      %3531 = vmatprep.subr.mxu0 0.0
      %3532 = vmatpush2.msra.mxu0 0.0
      %3533 = vmatprep.subr.mxu0 0.0
      %3534 = vmatpush2.msra.mxu0 0.0
      %3535 = vmatprep.subr.mxu0 0.0
      %3536 = vmatpush2.msra.mxu0 0.0
      %3537 = vmatprep.subr.mxu0 0.0
      %3538 = vmatpush2.msra.mxu0 0.0
      %3539 = vmatprep.subr.mxu0 0.0
      %3540 = vmatpush2.msra.mxu0 0.0
      %3541 = vmatprep.subr.mxu0 0.0
      %3542 = vmatpush2.msra.mxu0 0.0
      %3543 = vmatprep.subr.mxu0 0.0
      %3544 = vmatpush2.msra.mxu0 0.0
      %3545 = vmatprep.subr.mxu0 0.0
      %3546 = vmatpush2.msra.mxu0 0.0
      %3547 = vmatprep.subr.mxu0 0.0
      %3548 = vmatpush2.msra.mxu0 0.0
      %3549 = vmatprep.subr.mxu0 0.0
      %3550 = vmatpush2.msra.mxu0 0.0
      %3551 = vmatprep.mubr.f32.mxu0 0.0
      %3552 = vmatmul.mubr.f32.gmra.mxu0 %v3482
      %v3553 = vpop.f32.mrf.mxu0
      %v3554 = vadd.f32 0.0, %v3553
      %v3555 = vpop.f32.mrf.mxu0
      %3556 = vmatprep.mubr.f32.mxu0 0.0
      %3557 = vmatmul.mubr.f32.gmra.mxu0 %v3485
      %v3558 = vpop.f32.mrf.mxu0
      %v3559 = vadd.f32 0.0, %v3558
      %v3560 = vpop.f32.mrf.mxu0
      %3561 = vdwg.mxu0
      %3562 = vrot.lane.b32.xlu0 %v280, 68
      %v3563 = vpop.permute.xlu0 %3562
      %3564 = vrot.lane.b32.xlu0 %v282, 68
      %v3565 = vpop.permute.xlu0 %3564
      %3566 = vrot.lane.b32.xlu0 %v281, 68
      %v3567 = vpop.permute.xlu0 %3566
      %v3570 = vsel %vm279, 0.0, %v3563
      %v3571 = vsel %vm279, %v3567, 0.0
      %3572 = vrot.lane.b32.xlu0 %v280, 36
      %v3573 = vpop.permute.xlu0 %3572
      %3574 = vrot.lane.b32.xlu0 %v282, 36
      %v3575 = vpop.permute.xlu0 %3574
      %3576 = vrot.lane.b32.xlu0 %v281, 36
      %v3577 = vpop.permute.xlu0 %3576
      %v3581 = vsel %vm279, 0.0, %v3573
      %v3582 = vsel %vm279, %v3577, 0.0
      %s3584 = sor.u32 256, 28
      %3585 = vbcast.lane.b32.xlu0 %v307, %s3584
      %v3586 = vpop.permute.xlu0 %3585
      %s3588 = sor.u32 256, 28
      %3589 = vbcast.lane.b32.xlu0 %v314, %s3588
      %v3590 = vpop.permute.xlu0 %3589
      %s3592 = sor.u32 256, 28
      %3593 = vbcast.lane.b32.xlu0 %v321, %s3592
      %v3594 = vpop.permute.xlu0 %3593
      %s3596 = sor.u32 256, 28
      %3597 = vbcast.lane.b32.xlu0 %v328, %s3596
      %v3598 = vpop.permute.xlu0 %3597
      %s3600 = sor.u32 256, 28
      %3601 = vbcast.lane.b32.xlu0 %v335, %s3600
      %v3602 = vpop.permute.xlu0 %3601
      %s3604 = sor.u32 256, 28
      %3605 = vbcast.lane.b32.xlu0 %v342, %s3604
      %v3606 = vpop.permute.xlu0 %3605
      %s3608 = sor.u32 256, 28
      %3609 = vbcast.lane.b32.xlu0 %v349, %s3608
      %v3610 = vpop.permute.xlu0 %3609
      %s3612 = sor.u32 256, 28
      %3613 = vbcast.lane.b32.xlu0 %v356, %s3612
      %v3614 = vpop.permute.xlu0 %3613
      %s3616 = sor.u32 256, 28
      %3617 = vbcast.lane.b32.xlu0 %v363, %s3616
      %v3618 = vpop.permute.xlu0 %3617
      %s3620 = sor.u32 256, 28
      %3621 = vbcast.lane.b32.xlu0 %v370, %s3620
      %v3622 = vpop.permute.xlu0 %3621
      %s3624 = sor.u32 256, 28
      %3625 = vbcast.lane.b32.xlu0 %v377, %s3624
      %v3626 = vpop.permute.xlu0 %3625
      %s3628 = sor.u32 256, 28
      %3629 = vbcast.lane.b32.xlu0 %v384, %s3628
      %v3630 = vpop.permute.xlu0 %3629
      %s3632 = sor.u32 256, 28
      %3633 = vbcast.lane.b32.xlu0 %v391, %s3632
      %v3634 = vpop.permute.xlu0 %3633
      %s3636 = sor.u32 256, 28
      %3637 = vbcast.lane.b32.xlu0 %v398, %s3636
      %v3638 = vpop.permute.xlu0 %3637
      %s3640 = sor.u32 256, 28
      %3641 = vbcast.lane.b32.xlu0 %v405, %s3640
      %v3642 = vpop.permute.xlu0 %3641
      %s3644 = sor.u32 256, 28
      %3645 = vbcast.lane.b32.xlu0 %v412, %s3644
      %v3646 = vpop.permute.xlu0 %3645
      %s3647 = scalar_lea.vmem %s2, 448
      %v3648 = vld [vmem:[%s3647] sm:$0xf]
      %v3649 = vld [vmem:[%s3647 + $0x4] sm:$0xf]
      %v3650 = vld [vmem:[%s3647 + $0x8] sm:$0xf]
      %v3651 = vld [vmem:[%s3647 + $0xc] sm:$0xf]
      %v3652 = vld [vmem:[%s3647 + $0x10] sm:$0xf]
      %v3653 = vld [vmem:[%s3647 + $0x14] sm:$0xf]
      %v3654 = vld [vmem:[%s3647 + $0x18] sm:$0xf]
      %v3655 = vld [vmem:[%s3647 + $0x1c] sm:$0xf]
      %v3656 = vld [vmem:[%s3647 + $0x20] sm:$0xf]
      %v3657 = vld [vmem:[%s3647 + $0x24] sm:$0xf]
      %v3658 = vld [vmem:[%s3647 + $0x28] sm:$0xf]
      %v3659 = vld [vmem:[%s3647 + $0x2c] sm:$0xf]
      %v3660 = vld [vmem:[%s3647 + $0x30] sm:$0xf]
      %v3661 = vld [vmem:[%s3647 + $0x34] sm:$0xf]
      %v3662 = vld [vmem:[%s3647 + $0x38] sm:$0xf]
      %v3663 = vld [vmem:[%s3647 + $0x3c] sm:$0xf]
      %v3664 = vmul.f32 %v3586, %v3648
      %v3665 = vmul.f32 %v3590, %v3649
      %v3666 = vmul.f32 %v3594, %v3650
      %v3667 = vmul.f32 %v3598, %v3651
      %v3668 = vmul.f32 %v3602, %v3652
      %v3669 = vmul.f32 %v3606, %v3653
      %v3670 = vmul.f32 %v3610, %v3654
      %v3671 = vmul.f32 %v3614, %v3655
      %v3672 = vmul.f32 %v3618, %v3656
      %v3673 = vmul.f32 %v3622, %v3657
      %v3674 = vmul.f32 %v3626, %v3658
      %v3675 = vmul.f32 %v3630, %v3659
      %v3676 = vmul.f32 %v3634, %v3660
      %v3677 = vmul.f32 %v3638, %v3661
      %v3678 = vmul.f32 %v3642, %v3662
      %v3679 = vmul.f32 %v3646, %v3663
      %v3680 = vsel %vm448, %v3664, 0.0
      %v3681 = vrot.slane %v3680, 4
      %v3682 = vadd.f32 %v3680, %v3681
      %v3683 = vrot.slane %v3682, 2
      %v3684 = vadd.f32 %v3682, %v3683
      %v3685 = vrot.slane %v3684, 1
      %v3686 = vadd.f32 %v3684, %v3685
      %v3687 = vsel %vm448, %v3665, 0.0
      %v3688 = vrot.slane %v3687, 4
      %v3689 = vadd.f32 %v3687, %v3688
      %v3690 = vrot.slane %v3689, 2
      %v3691 = vadd.f32 %v3689, %v3690
      %v3692 = vrot.slane %v3691, 1
      %v3693 = vadd.f32 %v3691, %v3692
      %v3694 = vsel %vm448, %v3666, 0.0
      %v3695 = vrot.slane %v3694, 4
      %v3696 = vadd.f32 %v3694, %v3695
      %v3697 = vrot.slane %v3696, 2
      %v3698 = vadd.f32 %v3696, %v3697
      %v3699 = vrot.slane %v3698, 1
      %v3700 = vadd.f32 %v3698, %v3699
      %v3701 = vsel %vm448, %v3667, 0.0
      %v3702 = vrot.slane %v3701, 4
      %v3703 = vadd.f32 %v3701, %v3702
      %v3704 = vrot.slane %v3703, 2
      %v3705 = vadd.f32 %v3703, %v3704
      %v3706 = vrot.slane %v3705, 1
      %v3707 = vadd.f32 %v3705, %v3706
      %v3708 = vsel %vm448, %v3668, 0.0
      %v3709 = vrot.slane %v3708, 4
      %v3710 = vadd.f32 %v3708, %v3709
      %v3711 = vrot.slane %v3710, 2
      %v3712 = vadd.f32 %v3710, %v3711
      %v3713 = vrot.slane %v3712, 1
      %v3714 = vadd.f32 %v3712, %v3713
      %v3715 = vsel %vm448, %v3669, 0.0
      %v3716 = vrot.slane %v3715, 4
      %v3717 = vadd.f32 %v3715, %v3716
      %v3718 = vrot.slane %v3717, 2
      %v3719 = vadd.f32 %v3717, %v3718
      %v3720 = vrot.slane %v3719, 1
      %v3721 = vadd.f32 %v3719, %v3720
      %v3722 = vsel %vm448, %v3670, 0.0
      %v3723 = vrot.slane %v3722, 4
      %v3724 = vadd.f32 %v3722, %v3723
      %v3725 = vrot.slane %v3724, 2
      %v3726 = vadd.f32 %v3724, %v3725
      %v3727 = vrot.slane %v3726, 1
      %v3728 = vadd.f32 %v3726, %v3727
      %v3729 = vsel %vm448, %v3671, 0.0
      %v3730 = vrot.slane %v3729, 4
      %v3731 = vadd.f32 %v3729, %v3730
      %v3732 = vrot.slane %v3731, 2
      %v3733 = vadd.f32 %v3731, %v3732
      %v3734 = vrot.slane %v3733, 1
      %v3735 = vadd.f32 %v3733, %v3734
      %v3736 = vsel %vm448, %v3672, 0.0
      %v3737 = vrot.slane %v3736, 4
      %v3738 = vadd.f32 %v3736, %v3737
      %v3739 = vrot.slane %v3738, 2
      %v3740 = vadd.f32 %v3738, %v3739
      %v3741 = vrot.slane %v3740, 1
      %v3742 = vadd.f32 %v3740, %v3741
      %v3743 = vsel %vm448, %v3673, 0.0
      %v3744 = vrot.slane %v3743, 4
      %v3745 = vadd.f32 %v3743, %v3744
      %v3746 = vrot.slane %v3745, 2
      %v3747 = vadd.f32 %v3745, %v3746
      %v3748 = vrot.slane %v3747, 1
      %v3749 = vadd.f32 %v3747, %v3748
      %v3750 = vsel %vm448, %v3674, 0.0
      %v3751 = vrot.slane %v3750, 4
      %v3752 = vadd.f32 %v3750, %v3751
      %v3753 = vrot.slane %v3752, 2
      %v3754 = vadd.f32 %v3752, %v3753
      %v3755 = vrot.slane %v3754, 1
      %v3756 = vadd.f32 %v3754, %v3755
      %v3757 = vsel %vm448, %v3675, 0.0
      %v3758 = vrot.slane %v3757, 4
      %v3759 = vadd.f32 %v3757, %v3758
      %v3760 = vrot.slane %v3759, 2
      %v3761 = vadd.f32 %v3759, %v3760
      %v3762 = vrot.slane %v3761, 1
      %v3763 = vadd.f32 %v3761, %v3762
      %v3764 = vsel %vm448, %v3676, 0.0
      %v3765 = vrot.slane %v3764, 4
      %v3766 = vadd.f32 %v3764, %v3765
      %v3767 = vrot.slane %v3766, 2
      %v3768 = vadd.f32 %v3766, %v3767
      %v3769 = vrot.slane %v3768, 1
      %v3770 = vadd.f32 %v3768, %v3769
      %v3771 = vsel %vm448, %v3677, 0.0
      %v3772 = vrot.slane %v3771, 4
      %v3773 = vadd.f32 %v3771, %v3772
      %v3774 = vrot.slane %v3773, 2
      %v3775 = vadd.f32 %v3773, %v3774
      %v3776 = vrot.slane %v3775, 1
      %v3777 = vadd.f32 %v3775, %v3776
      %v3778 = vsel %vm448, %v3678, 0.0
      %v3779 = vrot.slane %v3778, 4
      %v3780 = vadd.f32 %v3778, %v3779
      %v3781 = vrot.slane %v3780, 2
      %v3782 = vadd.f32 %v3780, %v3781
      %v3783 = vrot.slane %v3782, 1
      %v3784 = vadd.f32 %v3782, %v3783
      %v3785 = vsel %vm448, %v3679, 0.0
      %v3786 = vrot.slane %v3785, 4
      %v3787 = vadd.f32 %v3785, %v3786
      %v3788 = vrot.slane %v3787, 2
      %v3789 = vadd.f32 %v3787, %v3788
      %v3790 = vrot.slane %v3789, 1
      %v3791 = vadd.f32 %v3789, %v3790
      %3792 = vrot.lane.b32.xlu0 %v275, 100
      %v3793 = vpop.permute.xlu0 %3792
      %3794 = vrot.lane.b32.xlu0 %v276, 100
      %v3795 = vpop.permute.xlu0 %3794
      %v3812 = vsel %vm577, %v3693, %v3686
      %v3813 = vsel %vm579, %v3700, %v3812
      %v3814 = vsel %vm581, %v3707, %v3813
      %v3815 = vsel %vm583, %v3714, %v3814
      %v3816 = vsel %vm585, %v3721, %v3815
      %v3817 = vsel %vm587, %v3728, %v3816
      %v3818 = vsel %vm589, %v3735, %v3817
      %v3819 = vsel %vm577, %v3749, %v3742
      %v3820 = vsel %vm579, %v3756, %v3819
      %v3821 = vsel %vm581, %v3763, %v3820
      %v3822 = vsel %vm583, %v3770, %v3821
      %v3823 = vsel %vm585, %v3777, %v3822
      %v3824 = vsel %vm587, %v3784, %v3823
      %v3825 = vsel %vm589, %v3791, %v3824
      %v3828 = vsel %vm600, %v3793, 0
      %v3830 = vsel %vm600, %v3795, 0
      %v3833 = vsel %vm600, %v3570, 0
      %v3835 = vsel %vm600, %v3565, 0
      %v3838 = vsel %vm600, %v3571, 0
      %3840 = vmatprep.subr.mxu0 0.0
      %3841 = vmatpush1.xpose.msra.mxu0 0.0
      %3842 = vmatprep.subr.mxu0 0.0
      %3843 = vmatpush1.xpose.msra.mxu0 0.0
      %3844 = vmatprep.subr.mxu0 0.0
      %3845 = vmatpush1.xpose.msra.mxu0 0.0
      %3846 = vmatprep.subr.mxu0 0.0
      %3847 = vmatpush1.xpose.msra.mxu0 0.0
      %3848 = vmatprep.subr.mxu0 0.0
      %3849 = vmatpush1.xpose.msra.mxu0 0.0
      %3850 = vmatprep.subr.mxu0 0.0
      %3851 = vmatpush1.xpose.msra.mxu0 0.0
      %3852 = vmatprep.subr.mxu0 0.0
      %3853 = vmatpush1.xpose.msra.mxu0 0.0
      %3854 = vmatprep.subr.mxu0 0.0
      %3855 = vmatpush1.xpose.msra.mxu0 0.0
      %3856 = vmatprep.subr.mxu0 0.0
      %3857 = vmatpush1.xpose.msra.mxu0 0.0
      %3858 = vmatprep.subr.mxu0 0.0
      %3859 = vmatpush1.xpose.msra.mxu0 0.0
      %3860 = vmatprep.subr.mxu0 0.0
      %3861 = vmatpush1.xpose.msra.mxu0 0.0
      %3862 = vmatprep.subr.mxu0 0.0
      %3863 = vmatpush1.xpose.msra.mxu0 %v606
      %3864 = vmatprep.subr.mxu0 0.0
      %3865 = vmatpush1.xpose.msra.mxu0 %v3838
      %3866 = vmatprep.subr.mxu0 0.0
      %3867 = vmatpush1.xpose.msra.mxu0 %v3835
      %3868 = vmatprep.subr.mxu0 0.0
      %3869 = vmatpush1.xpose.msra.mxu0 %v3833
      %3870 = vmatprep.subr.mxu0 0.0
      %3871 = vmatpush1.xpose.msra.mxu0 %v606
      %3872 = vmatprep.subr.mxu0 0.0
      %3873 = vmatpush2.xpose.msra.mxu0 0.0
      %3874 = vmatprep.subr.mxu0 0.0
      %3875 = vmatpush2.xpose.msra.mxu0 0.0
      %3876 = vmatprep.subr.mxu0 0.0
      %3877 = vmatpush2.xpose.msra.mxu0 0.0
      %3878 = vmatprep.subr.mxu0 0.0
      %3879 = vmatpush2.xpose.msra.mxu0 0.0
      %3880 = vmatprep.subr.mxu0 0.0
      %3881 = vmatpush2.xpose.msra.mxu0 0.0
      %3882 = vmatprep.subr.mxu0 0.0
      %3883 = vmatpush2.xpose.msra.mxu0 0.0
      %3884 = vmatprep.subr.mxu0 0.0
      %3885 = vmatpush2.xpose.msra.mxu0 0.0
      %3886 = vmatprep.subr.mxu0 0.0
      %3887 = vmatpush2.xpose.msra.mxu0 0.0
      %3888 = vmatprep.subr.mxu0 0.0
      %3889 = vmatpush2.xpose.msra.mxu0 0.0
      %3890 = vmatprep.subr.mxu0 0.0
      %3891 = vmatpush2.xpose.msra.mxu0 0.0
      %3892 = vmatprep.subr.mxu0 0.0
      %3893 = vmatpush2.xpose.msra.mxu0 0.0
      %3894 = vmatprep.subr.mxu0 0.0
      %3895 = vmatpush2.xpose.msra.mxu0 0.0
      %3896 = vmatprep.subr.mxu0 0.0
      %3897 = vmatpush2.xpose.msra.mxu0 0.0
      %3898 = vmatprep.subr.mxu0 0.0
      %3899 = vmatpush2.xpose.msra.mxu0 0.0
      %3900 = vmatprep.subr.mxu0 0.0
      %3901 = vmatpush2.xpose.msra.mxu0 0.0
      %3902 = vmatprep.subr.mxu0 0.0
      %3903 = vmatpush2.xpose.msra.mxu0 0.0
      %3904 = vmatprep.mubr.f32.mxu0 0.0
      %3905 = vmatmul.mubr.f32.gmra.mxu0 %v3828
      %v3906 = vpop.f32.mrf.mxu0
      %v3907 = vadd.f32 %v3818, %v3906
      %v3908 = vpop.f32.mrf.mxu0
      %3909 = vmatprep.mubr.f32.mxu0 0.0
      %3910 = vmatmul.mubr.f32.gmra.mxu0 %v3830
      %v3911 = vpop.f32.mrf.mxu0
      %v3912 = vadd.f32 %v3825, %v3911
      %v3913 = vpop.f32.mrf.mxu0
      %3914 = vdwg.mxu0
      %v3915 = vmul.f32 %v3907, 0.17677669
      %v3916 = vmul.f32 %v3912, 0.17677669
      %v3917 = vsel %vm273, %v3915, -1e+30
      %v3918 = vsel %vm274, %v3916, -1e+30
      %v3919 = vsel %vm695, %v3917, -inf
      %3920 = vmax.xlane.f32.xlu0 %v3919
      %v3921 = vpop.xlane.xlu0 %3920
      %v3922 = vsel %vm695, %v3918, -inf
      %3923 = vmax.xlane.f32.xlu0 %v3922
      %v3924 = vpop.xlane.xlu0 %3923
      %v3925 = vsub.f32 %v3917, %v3921
      %v3926 = vsub.f32 %v3918, %v3924
      %v3927 = vmul.f32 %v3925, 1.442695
      %v3928 = vpow.pop %v3927
      %v3929 = vmul.f32 %v3926, 1.442695
      %v3930 = vpow.pop %v3929
      %v3931 = vsel %vm695, %v3928, 0.0
      %3932 = vadd.xlane.f32.xlu0 %v3931
      %v3933 = vpop.xlane.xlu0 %3932
      %v3934 = vsel %vm695, %v3930, 0.0
      %3935 = vadd.xlane.f32.xlu0 %v3934
      %v3936 = vpop.xlane.xlu0 %3935
      %v3937 = vrcp.pop %v3933
      %v3938 = vmul.f32 %v3928, %v3937
      %v3939 = vrcp.pop %v3936
      %v3940 = vmul.f32 %v3930, %v3939
      %v3942 = vsel %vm695, %v3938, 0
      %v3945 = vsel %vm695, %v3940, 0
      %3947 = vmatprep.subr.mxu0 0.0
      %3948 = vmatpush1.msra.mxu0 0.0
      %3949 = vmatprep.subr.mxu0 0.0
      %3950 = vmatpush1.msra.mxu0 0.0
      %3951 = vmatprep.subr.mxu0 0.0
      %3952 = vmatpush1.msra.mxu0 0.0
      %3953 = vmatprep.subr.mxu0 0.0
      %3954 = vmatpush1.msra.mxu0 0.0
      %3955 = vmatprep.subr.mxu0 0.0
      %3956 = vmatpush1.msra.mxu0 0.0
      %3957 = vmatprep.subr.mxu0 0.0
      %3958 = vmatpush1.msra.mxu0 0.0
      %3959 = vmatprep.subr.mxu0 0.0
      %3960 = vmatpush1.msra.mxu0 0.0
      %3961 = vmatprep.subr.mxu0 0.0
      %3962 = vmatpush1.msra.mxu0 0.0
      %3963 = vmatprep.subr.mxu0 0.0
      %3964 = vmatpush1.msra.mxu0 0.0
      %3965 = vmatprep.subr.mxu0 0.0
      %3966 = vmatpush1.msra.mxu0 0.0
      %3967 = vmatprep.subr.mxu0 0.0
      %3968 = vmatpush1.msra.mxu0 0.0
      %3969 = vmatprep.subr.mxu0 0.0
      %3970 = vmatpush1.msra.mxu0 %v725
      %3971 = vmatprep.subr.mxu0 0.0
      %3972 = vmatpush1.msra.mxu0 %v3582
      %3973 = vmatprep.subr.mxu0 0.0
      %3974 = vmatpush1.msra.mxu0 %v3575
      %3975 = vmatprep.subr.mxu0 0.0
      %3976 = vmatpush1.msra.mxu0 %v3581
      %3977 = vmatprep.subr.mxu0 0.0
      %3978 = vmatpush1.msra.mxu0 0.0
      %3979 = vmatprep.subr.mxu0 0.0
      %3980 = vmatpush2.msra.mxu0 0.0
      %3981 = vmatprep.subr.mxu0 0.0
      %3982 = vmatpush2.msra.mxu0 0.0
      %3983 = vmatprep.subr.mxu0 0.0
      %3984 = vmatpush2.msra.mxu0 0.0
      %3985 = vmatprep.subr.mxu0 0.0
      %3986 = vmatpush2.msra.mxu0 0.0
      %3987 = vmatprep.subr.mxu0 0.0
      %3988 = vmatpush2.msra.mxu0 0.0
      %3989 = vmatprep.subr.mxu0 0.0
      %3990 = vmatpush2.msra.mxu0 0.0
      %3991 = vmatprep.subr.mxu0 0.0
      %3992 = vmatpush2.msra.mxu0 0.0
      %3993 = vmatprep.subr.mxu0 0.0
      %3994 = vmatpush2.msra.mxu0 0.0
      %3995 = vmatprep.subr.mxu0 0.0
      %3996 = vmatpush2.msra.mxu0 0.0
      %3997 = vmatprep.subr.mxu0 0.0
      %3998 = vmatpush2.msra.mxu0 0.0
      %3999 = vmatprep.subr.mxu0 0.0
      %4000 = vmatpush2.msra.mxu0 0.0
      %4001 = vmatprep.subr.mxu0 0.0
      %4002 = vmatpush2.msra.mxu0 0.0
      %4003 = vmatprep.subr.mxu0 0.0
      %4004 = vmatpush2.msra.mxu0 0.0
      %4005 = vmatprep.subr.mxu0 0.0
      %4006 = vmatpush2.msra.mxu0 0.0
      %4007 = vmatprep.subr.mxu0 0.0
      %4008 = vmatpush2.msra.mxu0 0.0
      %4009 = vmatprep.subr.mxu0 0.0
      %4010 = vmatpush2.msra.mxu0 0.0
      %4011 = vmatprep.mubr.f32.mxu0 0.0
      %4012 = vmatmul.mubr.f32.gmra.mxu0 %v3942
      %v4013 = vpop.f32.mrf.mxu0
      %v4014 = vadd.f32 0.0, %v4013
      %v4015 = vpop.f32.mrf.mxu0
      %4016 = vmatprep.mubr.f32.mxu0 0.0
      %4017 = vmatmul.mubr.f32.gmra.mxu0 %v3945
      %v4018 = vpop.f32.mrf.mxu0
      %v4019 = vadd.f32 0.0, %v4018
      %v4020 = vpop.f32.mrf.mxu0
      %4021 = vdwg.mxu0
      %4024 = vrot.lane.b32.xlu0 %v1254, 4
      %v4025 = vpop.permute.xlu0 %4024
      %4026 = vrot.lane.b32.xlu0 %v1259, 4
      %v4027 = vpop.permute.xlu0 %4026
      %4032 = vrot.lane.b32.xlu0 %v1714, 8
      %v4033 = vpop.permute.xlu0 %4032
      %4034 = vrot.lane.b32.xlu0 %v1719, 8
      %v4035 = vpop.permute.xlu0 %4034
      %4040 = vrot.lane.b32.xlu0 %v2174, 12
      %v4041 = vpop.permute.xlu0 %4040
      %4042 = vrot.lane.b32.xlu0 %v2179, 12
      %v4043 = vpop.permute.xlu0 %4042
      %4048 = vrot.lane.b32.xlu0 %v2634, 16
      %v4049 = vpop.permute.xlu0 %4048
      %4050 = vrot.lane.b32.xlu0 %v2639, 16
      %v4051 = vpop.permute.xlu0 %4050
      %4056 = vrot.lane.b32.xlu0 %v3094, 20
      %v4057 = vpop.permute.xlu0 %4056
      %4058 = vrot.lane.b32.xlu0 %v3099, 20
      %v4059 = vpop.permute.xlu0 %4058
      %4064 = vrot.lane.b32.xlu0 %v3554, 24
      %v4065 = vpop.permute.xlu0 %4064
      %4066 = vrot.lane.b32.xlu0 %v3559, 24
      %v4067 = vpop.permute.xlu0 %4066
      %4072 = vrot.lane.b32.xlu0 %v4014, 28
      %v4073 = vpop.permute.xlu0 %4072
      %4074 = vrot.lane.b32.xlu0 %v4019, 28
      %v4075 = vpop.permute.xlu0 %4074
      %v4078 = vsel %vm600, %v794, %v4025
      %v4079 = vsel %vm600, %v799, %v4027
      %vm4080 = vcmask 64512
      %v4081 = vsel %vm4080, %v4078, %v4033
      %v4082 = vsel %vm4080, %v4079, %v4035
      %vm4083 = vcmask 97280
      %v4084 = vsel %vm4083, %v4081, %v4041
      %v4085 = vsel %vm4083, %v4082, %v4043
      %vm4086 = vcmask 130048
      %v4087 = vsel %vm4086, %v4084, %v4049
      %v4088 = vsel %vm4086, %v4085, %v4051
      %vm4089 = vcmask 162816
      %v4090 = vsel %vm4089, %v4087, %v4057
      %v4091 = vsel %vm4089, %v4088, %v4059
      %vm4092 = vcmask 195584
      %v4093 = vsel %vm4092, %v4090, %v4065
      %v4094 = vsel %vm4092, %v4091, %v4067
      %vm4095 = vcmask 228352
      %v4096 = vsel %vm4095, %v4093, %v4073
      %v4097 = vsel %vm4095, %v4094, %v4075
      %4098 = vst.msk [vmem:[%s170] sm:$0xff] %vm177, %v4096
      %4099 = vst.msk [vmem:[%s170 + $0x8] sm:$0xff] %vm177, %v4097
      %p4100 = scmp.lt.s32.totalorder %s14, 1
      %s4101 = scalar_select %p4100, %s14, 1
      %s4102 = smul.addr %s4101, 2
      %s4103 = smul.addr %s4102, 8
      %s4104 = scalar_lea.vmem %s3, %s4103
      // Predicated region
      $region33: #{net_forward.19} parent=31 // pred_check
        %p4105 = pneg %p100
      $region34: #{net_forward.19} parent=31 // pred_check_branch
        %4107 = sbr.rel (%p4105) target = $region36
      $region35: #{net_forward.19} parent=31 // pred_region
        _
      $region36: #{net_forward.19} parent=31 // pred_fallthru
        _
    $region32: #{net_forward.19} parent=5 // pred_fallthru
      _
    %p4108 = scmp.le.s32.totalorder 2, %s9
    // Predicated region
    $region37: #{net_forward.19} parent=5 // pred_check
      %p4109 = pneg %p4108
    $region38: #{net_forward.19} parent=5 // pred_check_branch
      %4111 = sbr.rel (%p4109) target = $region40
    $region39: #{net_forward.19} parent=5 // pred_region
      %s4112 = ssub.s32 %s9, 2
      // Predicated region
      $region41: #{net_forward.19} parent=39 // pred_check
        %p4113 = pneg %p106
      $region42: #{net_forward.19} parent=39 // pred_check_branch
        %4115 = sbr.rel (%p4113) target = $region44
      $region43: #{net_forward.19} parent=39 // pred_region
        %p4116 = scmp.lt.s32.totalorder %s15, 1
        %s4117 = scalar_select %p4116, %s15, 1
        %s4118 = smul.addr %s4117, 2
        %s4119 = smul.addr %s4118, 8
        %s4120 = scalar_lea.vmem %s3, %s4119
      $region44: #{net_forward.19} parent=39 // pred_fallthru
        _
    $region40: #{net_forward.19} parent=5 // pred_fallthru
      _
  $region6: #{net_forward.19} parent=0 // loop_footer
    %s13 = sadd.s32 1, %s9
  $region7: #{net_forward.19} parent=0 // loop_footer_branch
    %8 = sbr.rel target = $region3
  $region8: #{net_forward.19} parent=0 // loop_exit
    _

// kernel: net_forward.31
$region0: #{net_forward.31}
  #allocation0 [shape = 'u32[]', space=smem, size = 0x4, offset = 0x4, fixed_abs, tag = 'smem constant byte address 0x4 - core index']
  #allocation1 [shape = 'u32[144,128]{1,0:T(1,128)}', space=vmem, size = 0x12000, scoped, tag = 'internal scratch']
  %s0 = inlined_call_operand.vmem [shape: f32[32,32], index: 0, kind: input, shape index: {}]
  %s1 = inlined_call_operand.vmem [shape: f32[32,3], index: 1, kind: input, shape index: {}]
  %s2 = inlined_call_operand.vmem [shape: f32[1,3], index: 2, kind: input, shape index: {}]
  %s3 = inlined_call_operand.vmem [shape: f32[32,3], index: 3, kind: output, shape index: {}]
  %s4 = sld [smem:[#allocation0]]
  $region22: #{net_forward.31} parent=0
    _
  %s6 = ssub.s32 1, %s4
  %s7 = scalar_select 0, %s6, %s4
  // Predicated region
  $region2: #{net_forward.31} parent=0 // pred_check
    _
  $region3: #{net_forward.31} parent=0 // pred_check_branch
    %9 = sbr.rel (0) target = $region5
  $region4: #{net_forward.31} parent=0 // pred_region
    _
  $region5: #{net_forward.31} parent=0 // pred_fallthru
    _
  // Predicated region
  $region6: #{net_forward.31} parent=0 // pred_check
    _
  $region7: #{net_forward.31} parent=0 // pred_check_branch
    %11 = sbr.rel (0) target = $region9
  $region8: #{net_forward.31} parent=0 // pred_region
    _
  $region9: #{net_forward.31} parent=0 // pred_fallthru
    _
  // Predicated region
  $region10: #{net_forward.31} parent=0 // pred_check
    _
  $region11: #{net_forward.31} parent=0 // pred_check_branch
    %13 = sbr.rel (0) target = $region13
  $region12: #{net_forward.31} parent=0 // pred_region
    _
  $region13: #{net_forward.31} parent=0 // pred_fallthru
    _
  %v14 = vld [vmem:[%s0] sm:$0xff]
  %v15 = vld [vmem:[%s0 + $0x8] sm:$0xff]
  %v16 = vld [vmem:[%s0 + $0x10] sm:$0xff]
  %v17 = vld [vmem:[%s0 + $0x18] sm:$0xff]
  %v18 = vld [vmem:[%s1] sm:$0xff]
  %v19 = vld [vmem:[%s1 + $0x8] sm:$0xff]
  %v20 = vld [vmem:[%s1 + $0x10] sm:$0xff]
  %v21 = vld [vmem:[%s1 + $0x18] sm:$0xff]
  %v22 = vld [vmem:[%s2] sm:$0x1]
  %v24 = vlaneseq
  %v25 = vshrl.u32 %v24, 7
  %v26 = vsub.s32 0, %v25
  %v27 = vrot.slane %v22, %v26
  %vm29 = vcmask 261120
  %v31 = vsel %vm29, %v14, 0
  %v34 = vsel %vm29, %v15, 0
  %v37 = vsel %vm29, %v16, 0
  %v40 = vsel %vm29, %v17, 0
  %42 = vmatprep.subr.mxu0 0.0
  %43 = vmatpush1.msra.mxu0 0.0
  %44 = vmatprep.subr.mxu0 0.0
  %45 = vmatpush1.msra.mxu0 0.0
  %46 = vmatprep.subr.mxu0 0.0
  %47 = vmatpush1.msra.mxu0 0.0
  %48 = vmatprep.subr.mxu0 0.0
  %49 = vmatpush1.msra.mxu0 0.0
  %50 = vmatprep.subr.mxu0 0.0
  %51 = vmatpush1.msra.mxu0 0.0
  %52 = vmatprep.subr.mxu0 0.0
  %53 = vmatpush1.msra.mxu0 0.0
  %54 = vmatprep.subr.mxu0 0.0
  %55 = vmatpush1.msra.mxu0 0.0
  %56 = vmatprep.subr.mxu0 0.0
  %57 = vmatpush1.msra.mxu0 0.0
  %58 = vmatprep.subr.mxu0 0.0
  %59 = vmatpush1.msra.mxu0 0.0
  %60 = vmatprep.subr.mxu0 0.0
  %61 = vmatpush1.msra.mxu0 0.0
  %62 = vmatprep.subr.mxu0 0.0
  %63 = vmatpush1.msra.mxu0 0.0
  %64 = vmatprep.subr.mxu0 0.0
  %65 = vmatpush1.msra.mxu0 0.0
  %66 = vmatprep.subr.mxu0 0.0
  %67 = vmatpush1.msra.mxu0 %v21
  %68 = vmatprep.subr.mxu0 0.0
  %69 = vmatpush1.msra.mxu0 %v20
  %70 = vmatprep.subr.mxu0 0.0
  %71 = vmatpush1.msra.mxu0 %v19
  %72 = vmatprep.subr.mxu0 0.0
  %73 = vmatpush1.msra.mxu0 %v18
  %74 = vmatprep.subr.mxu0 0.0
  %75 = vmatpush2.msra.mxu0 0.0
  %76 = vmatprep.subr.mxu0 0.0
  %77 = vmatpush2.msra.mxu0 0.0
  %78 = vmatprep.subr.mxu0 0.0
  %79 = vmatpush2.msra.mxu0 0.0
  %80 = vmatprep.subr.mxu0 0.0
  %81 = vmatpush2.msra.mxu0 0.0
  %82 = vmatprep.subr.mxu0 0.0
  %83 = vmatpush2.msra.mxu0 0.0
  %84 = vmatprep.subr.mxu0 0.0
  %85 = vmatpush2.msra.mxu0 0.0
  %86 = vmatprep.subr.mxu0 0.0
  %87 = vmatpush2.msra.mxu0 0.0
  %88 = vmatprep.subr.mxu0 0.0
  %89 = vmatpush2.msra.mxu0 0.0
  %90 = vmatprep.subr.mxu0 0.0
  %91 = vmatpush2.msra.mxu0 0.0
  %92 = vmatprep.subr.mxu0 0.0
  %93 = vmatpush2.msra.mxu0 0.0
  %94 = vmatprep.subr.mxu0 0.0
  %95 = vmatpush2.msra.mxu0 0.0
  %96 = vmatprep.subr.mxu0 0.0
  %97 = vmatpush2.msra.mxu0 0.0
  %98 = vmatprep.subr.mxu0 0.0
  %99 = vmatpush2.msra.mxu0 0.0
  %100 = vmatprep.subr.mxu0 0.0
  %101 = vmatpush2.msra.mxu0 0.0
  %102 = vmatprep.subr.mxu0 0.0
  %103 = vmatpush2.msra.mxu0 0.0
  %104 = vmatprep.subr.mxu0 0.0
  %105 = vmatpush2.msra.mxu0 0.0
  %106 = vmatprep.mubr.f32.mxu0 0.0
  %107 = vmatmul.mubr.f32.gmra.mxu0 %v31
  %v108 = vpop.f32.mrf.mxu0
  %v109 = vadd.f32 %v27, %v108
  %v110 = vpop.f32.mrf.mxu0
  %111 = vmatprep.mubr.f32.mxu0 0.0
  %112 = vmatmul.mubr.f32.gmra.mxu0 %v34
  %v113 = vpop.f32.mrf.mxu0
  %v114 = vadd.f32 %v27, %v113
  %v115 = vpop.f32.mrf.mxu0
  %116 = vmatprep.mubr.f32.mxu0 0.0
  %117 = vmatmul.mubr.f32.gmra.mxu0 %v37
  %v118 = vpop.f32.mrf.mxu0
  %v119 = vadd.f32 %v27, %v118
  %v120 = vpop.f32.mrf.mxu0
  %121 = vmatprep.mubr.f32.mxu0 0.0
  %122 = vmatmul.mubr.f32.gmra.mxu0 %v40
  %v123 = vpop.f32.mrf.mxu0
  %v124 = vadd.f32 %v27, %v123
  %v125 = vpop.f32.mrf.mxu0
  %126 = vdwg.mxu0
  %v127 = vsub.f32 0.0, %v109
  %v128 = vsub.f32 0.0, %v114
  %v129 = vsub.f32 0.0, %v119
  %v130 = vsub.f32 0.0, %v124
  %v131 = vmul.f32 %v127, 1.442695
  %v132 = vpow.pop %v131
  %v133 = vmul.f32 %v128, 1.442695
  %v134 = vpow.pop %v133
  %v135 = vmul.f32 %v129, 1.442695
  %v136 = vpow.pop %v135
  %v137 = vmul.f32 %v130, 1.442695
  %v138 = vpow.pop %v137
  %v139 = vadd.f32 %v132, 1.0
  %v140 = vadd.f32 %v134, 1.0
  %v141 = vadd.f32 %v136, 1.0
  %v142 = vadd.f32 %v138, 1.0
  %v143 = vrcp.pop %v139
  %v144 = vmul.f32 1.0, %v143
  %v145 = vrcp.pop %v140
  %v146 = vmul.f32 1.0, %v145
  %v147 = vrcp.pop %v141
  %v148 = vmul.f32 1.0, %v147
  %v149 = vrcp.pop %v142
  %v150 = vmul.f32 1.0, %v149
  %vm151 = vcmask 23552
  %152 = vst.msk [vmem:[%s3] sm:$0xff] %vm151, %v144
  %153 = vst.msk [vmem:[%s3 + $0x8] sm:$0xff] %vm151, %v146
  %154 = vst.msk [vmem:[%s3 + $0x10] sm:$0xff] %vm151, %v148
  %155 = vst.msk [vmem:[%s3 + $0x18] sm:$0xff] %vm151, %v150
  // Predicated region
  $region14: #{net_forward.31} parent=0 // pred_check
    _
  $region15: #{net_forward.31} parent=0 // pred_check_branch
    %157 = sbr.rel (0) target = $region17
  $region16: #{net_forward.31} parent=0 // pred_region
    _
  $region17: #{net_forward.31} parent=0 // pred_fallthru
    _
  // Predicated region
  $region18: #{net_forward.31} parent=0 // pred_check
    _
  $region19: #{net_forward.31} parent=0 // pred_check_branch
    %159 = sbr.rel (0) target = $region21
  $region20: #{net_forward.31} parent=0 // pred_region
    _
  $region21: #{net_forward.31} parent=0 // pred_fallthru
    _

</llo_original>
